<compile_context>
chip_gen: v7x
topology: tpu7x:2x2x1
jax: 0.10.0
libtpu: 0.0.40
codegen_flags: <defaults>
</compile_context>

<pallas_src>
import jax
import jax.numpy as jnp
from jax import lax
from jax.experimental import pallas as pl
from jax.experimental.pallas import tpu as pltpu

EPS = 1e-5


# ----------------------------- Pallas kernel ------------------------------- #

def _bottleneck_kernel(x_ref, w1_ref, s1_ref, b1_ref,
                       w2_ref, s2_ref, b2_ref,
                       w3_ref, s3_ref, b3_ref,
                       o_ref, pad_ref):
    """Fused bottleneck for one image (one grid step).

    x_ref   : (1, H*W, Cin)   bf16  NHWC image, spatially flattened (true Cin)
    w1_ref  : (Cin, Wd)       bf16
    w2_ref  : (9, Wd, Wd)     bf16  indexed by dy*3+dx, layout (cin, cout)
    w3_ref  : (Wd, Cout)      bf16
    s1/b1   : (1, Wd)         f32   folded BN scale / bias (conv1)
    s2/b2   : (1, Wd)         f32   folded BN scale / bias (conv2)
    s3/b3   : (1, Cout)       f32   folded BN scale / bias (conv3)
    o_ref   : (1, H*W, Cout)  f32
    pad_ref : (H+2, W+2, Wd)  f32   VMEM scratch (zero border = conv padding)
    """
    Hp2, Wp2, Wd = pad_ref.shape
    H, W = Hp2 - 2, Wp2 - 2
    HW = x_ref.shape[1]

    x = x_ref[0]                                                   # (HW, Cin) bf16

    # ---- conv1 (1x1) + bn1 + relu ---------------------------------------- #
    t1 = jnp.dot(x, w1_ref[...], preferred_element_type=jnp.float32)
    t1 = jnp.maximum(t1 * s1_ref[...] + b1_ref[...], 0.0)          # (HW, Wd) f32

    # ---- stage conv1 output into the halo scratch ------------------------ #
    pad_ref[...] = jnp.zeros_like(pad_ref)
    pad_ref[1:H + 1, 1:W + 1, :] = t1.reshape(H, W, Wd)

    # ---- conv2 (3x3, pad=1, stride=1): nine shifted matmuls -------------- #
    acc = None
    for dy in range(3):
        for dx in range(3):
            patch = pad_ref[dy:dy + H, dx:dx + W, :].reshape(HW, Wd)
            d = jnp.dot(patch.astype(jnp.bfloat16), w2_ref[dy * 3 + dx],
                        preferred_element_type=jnp.float32)
            acc = d if acc is None else acc + d
    t2 = jnp.maximum(acc * s2_ref[...] + b2_ref[...], 0.0)         # (HW, Wd) f32

    # ---- conv3 (1x1) + bn3 + residual add + relu ------------------------- #
    t3 = jnp.dot(t2.astype(jnp.bfloat16), w3_ref[...],
                 preferred_element_type=jnp.float32)               # (HW, Cout) f32
    y = t3 * s3_ref[...] + b3_ref[...] + x.astype(jnp.float32)
    o_ref[0] = jnp.maximum(y, 0.0).astype(o_ref.dtype)


# ------------------------------ glue (JAX) --------------------------------- #

def _round_up(v, m):
    return (v + m - 1) // m * m


def fold_bn(gamma, beta, mean, var, eps=EPS):
    scale = gamma / jnp.sqrt(var + eps)
    bias = beta - mean * scale
    return scale, bias


def _pad_cols(v, n, fill=0.0):
    """Pad a 1-D per-channel vector to length n and shape it (1, n)."""
    return jnp.pad(v, (0, n - v.shape[0]), constant_values=fill).reshape(1, n)


def _pad_mat(m, rows, cols):
    return jnp.pad(m, ((0, rows - m.shape[0]), (0, cols - m.shape[1])))


def bottleneck_forward(x_nchw, params, stride=1):
    """Fused Bottleneck forward (inference-mode BN).  stride must be 1."""
    assert stride == 1, "stride != 1 needs the downsample branch (not implemented)"
    N, Cin, H, W = x_nchw.shape
    w1, w2, w3 = params["w1"], params["w2"], params["w3"]
    width, Cout = w1.shape[0], w3.shape[0]
    assert Cout == Cin, "identity residual requires Cout == Cin (downsample=None)"
    assert H % 8 == 0 and W % 8 == 0, "TODO(synk): ragged spatial tiles not handled"

    Wd = _round_up(width, 128)    # lane-dense padding for the on-chip width dim only
    HW = H * W

    # NCHW -> (N, H*W, Cin) bf16 (true channel count; one fused XLA copy).
    # TODO(synk): keep activations NHWC/bf16 when chaining several bottlenecks.
    x = jnp.transpose(x_nchw, (0, 2, 3, 1)).reshape(N, HW, Cin).astype(jnp.bfloat16)

    # Weights as matmul operands; only the internal width dim is lane-padded.
    w1_mat = _pad_mat(w1.reshape(width, Cin).T, Cin, Wd).astype(jnp.bfloat16)       # (Cin, Wd)
    w2_mat = jnp.transpose(w2, (2, 3, 1, 0)).reshape(9, width, width)
    w2_mat = jnp.pad(w2_mat, ((0, 0), (0, Wd - width),
                              (0, Wd - width))).astype(jnp.bfloat16)                # (9, Wd, Wd)
    w3_mat = _pad_mat(w3.reshape(Cout, width).T, Wd, Cout).astype(jnp.bfloat16)     # (Wd, Cout)

    s1, b1 = fold_bn(*params["bn1"])
    s2, b2 = fold_bn(*params["bn2"])
    s3, b3 = fold_bn(*params["bn3"])
    s1, b1 = _pad_cols(s1, Wd, 1.0), _pad_cols(b1, Wd)
    s2, b2 = _pad_cols(s2, Wd, 1.0), _pad_cols(b2, Wd)
    s3, b3 = s3.reshape(1, Cout), b3.reshape(1, Cout)

    const2 = lambda n: (0, 0)
    out = pl.pallas_call(
        _bottleneck_kernel,
        out_shape=jax.ShapeDtypeStruct((N, HW, Cout), jnp.float32),
        grid_spec=pltpu.PrefetchScalarGridSpec(
            num_scalar_prefetch=0,
            grid=(N,),
            in_specs=[
                pl.BlockSpec((1, HW, Cin), lambda n: (n, 0, 0)),   # x (also residual)
                pl.BlockSpec((Cin, Wd), const2),                   # w1
                pl.BlockSpec((1, Wd), const2),                     # s1
                pl.BlockSpec((1, Wd), const2),                     # b1
                pl.BlockSpec((9, Wd, Wd), lambda n: (0, 0, 0)),    # w2
                pl.BlockSpec((1, Wd), const2),                     # s2
                pl.BlockSpec((1, Wd), const2),                     # b2
                pl.BlockSpec((Wd, Cout), const2),                  # w3
                pl.BlockSpec((1, Cout), const2),                   # s3
                pl.BlockSpec((1, Cout), const2),                   # b3
            ],
            out_specs=pl.BlockSpec((1, HW, Cout), lambda n: (n, 0, 0)),
            scratch_shapes=[pltpu.VMEM((H + 2, W + 2, Wd), jnp.float32)],
        ),
        compiler_params=pltpu.CompilerParams(
            dimension_semantics=("parallel",),   # batch steps can feed both cores
        ),
    )(x, w1_mat, s1, b1, w2_mat, s2, b2, w3_mat, s3, b3)

    out = out.reshape(N, H, W, Cout)
    return jnp.transpose(out, (0, 3, 1, 2))       # back to NCHW


# ------------------------- pure-JAX references ------------------------------ #

def ref_bottleneck(x_nchw, params, cast_bf16=False):
    """Reference forward.  cast_bf16=True matches the kernel's bf16 MXU inputs."""
    x = jnp.transpose(x_nchw, (0, 2, 3, 1)).astype(jnp.float32)

    def conv(h, w, stride, pad):
        lhs, rhs = h, jnp.transpose(w, (2, 3, 1, 0))
        if cast_bf16:
            lhs, rhs = lhs.astype(jnp.bfloat16), rhs.astype(jnp.bfloat16)
        return lax.conv_general_dilated(
            lhs, rhs, window_strides=(stride, stride),
            padding=[(pad, pad), (pad, pad)],
            dimension_numbers=("NHWC", "HWIO", "NHWC"),
            preferred_element_type=jnp.float32)

    def bn(h, p):
        g, b, m, v = p
        return (h - m) / jnp.sqrt(v + EPS) * g + b

    identity = x.astype(jnp.bfloat16).astype(jnp.float32) if cast_bf16 else x
    out = jax.nn.relu(bn(conv(x, params["w1"], 1, 0), params["bn1"]))
    out = jax.nn.relu(bn(conv(out, params["w2"], 1, 1), params["bn2"]))
    out = bn(conv(out, params["w3"], 1, 0), params["bn3"])
    out = jax.nn.relu(out + identity)
    return jnp.transpose(out, (0, 3, 1, 2))


# --------------------------------- main ------------------------------------ #

if __name__ == "__main__":
    # Bottleneck(in_channel=16, out_channel=4, stride=1, downsample=None)
    # -> width = 4, conv3 output channels = 4 * expansion = 16 == in_channel.
    in_channel, out_channel, expansion = 16, 4, 4
    width = out_channel
    N, H, W = 2, 16, 16

    key = jax.random.PRNGKey(0)
    ks = jax.random.split(key, 8)

    def bn_params(k, c):
        k1, k2, k3, k4 = jax.random.split(k, 4)
        gamma = 1.0 + 0.1 * jax.random.normal(k1, (c,), jnp.float32)
        beta = 0.1 * jax.random.normal(k2, (c,), jnp.float32)
        mean = 0.1 * jax.random.normal(k3, (c,), jnp.float32)
        var = jax.random.uniform(k4, (c,), jnp.float32, 0.5, 1.5)
        return (gamma, beta, mean, var)

    params = {
        "w1": 0.2 * jax.random.normal(ks[0], (width, in_channel, 1, 1), jnp.float32),
        "bn1": bn_params(ks[1], width),
        "w2": 0.2 * jax.random.normal(ks[2], (width, width, 3, 3), jnp.float32),
        "bn2": bn_params(ks[3], width),
        "w3": 0.2 * jax.random.normal(ks[4], (out_channel * expansion, width, 1, 1),
                                      jnp.float32),
        "bn3": bn_params(ks[5], out_channel * expansion),
    }

    x = jax.random.normal(ks[6], (N, in_channel, H, W), jnp.float32)

    out = jax.block_until_ready(bottleneck_forward(x, params, stride=1))
    assert out.shape == (N, in_channel, H, W)

    # bf16-matched reference (same MXU input precision as the kernel) - tight check.
    ref_bf16 = jax.block_until_ready(ref_bottleneck(x, params, cast_bf16=True))
    # full-f32 reference (module semantics) - looser tolerance for bf16 rounding.
    ref_f32 = jax.block_until_ready(ref_bottleneck(x, params, cast_bf16=False))

    assert jnp.allclose(out, ref_bf16, rtol=1e-2, atol=1e-2), "mismatch vs bf16 reference"
    assert jnp.allclose(out, ref_f32, rtol=1e-1, atol=1e-1), "mismatch vs f32 reference"

    print("KERNEL_OK")
</pallas_src>

<mosaic_0001>
module attributes {stable_mosaic.version = 11 : i64} {
  func.func @_bottleneck_kernel(%arg0: i32, %arg1: memref<1x256x16xbf16, #tpu.memory_space<vmem>>, %arg2: memref<16x128xbf16, #tpu.memory_space<vmem>>, %arg3: memref<1x128xf32, #tpu.memory_space<vmem>>, %arg4: memref<1x128xf32, #tpu.memory_space<vmem>>, %arg5: memref<9x128x128xbf16, #tpu.memory_space<vmem>>, %arg6: memref<1x128xf32, #tpu.memory_space<vmem>>, %arg7: memref<1x128xf32, #tpu.memory_space<vmem>>, %arg8: memref<128x16xbf16, #tpu.memory_space<vmem>>, %arg9: memref<1x16xf32, #tpu.memory_space<vmem>>, %arg10: memref<1x16xf32, #tpu.memory_space<vmem>>, %arg11: memref<1x256x16xf32, #tpu.memory_space<vmem>>, %arg12: memref<18x18x128xf32, #tpu.memory_space<vmem>>) attributes {dimension_semantics = [#tpu.dimension_semantics<parallel>], iteration_bounds = array<i64: 2>, scalar_prefetch = 0 : i64, scratch_operands = 1 : i64, tpu.core_type = #tpu.core_type<tc>, window_params = [{transform_indices = @transform_0, window_bounds = array<i64: 1, 256, 16>}, {pipeline_mode = #tpu.pipeline_mode<synchronous>, transform_indices = @transform_1, window_bounds = array<i64: 16, 128>}, {pipeline_mode = #tpu.pipeline_mode<synchronous>, transform_indices = @transform_2, window_bounds = array<i64: 1, 128>}, {pipeline_mode = #tpu.pipeline_mode<synchronous>, transform_indices = @transform_3, window_bounds = array<i64: 1, 128>}, {pipeline_mode = #tpu.pipeline_mode<synchronous>, transform_indices = @transform_4, window_bounds = array<i64: 9, 128, 128>}, {pipeline_mode = #tpu.pipeline_mode<synchronous>, transform_indices = @transform_5, window_bounds = array<i64: 1, 128>}, {pipeline_mode = #tpu.pipeline_mode<synchronous>, transform_indices = @transform_6, window_bounds = array<i64: 1, 128>}, {pipeline_mode = #tpu.pipeline_mode<synchronous>, transform_indices = @transform_7, window_bounds = array<i64: 128, 16>}, {pipeline_mode = #tpu.pipeline_mode<synchronous>, transform_indices = @transform_8, window_bounds = array<i64: 1, 16>}, {pipeline_mode = #tpu.pipeline_mode<synchronous>, transform_indices = @transform_9, window_bounds = array<i64: 1, 16>}, {transform_indices = @transform_10, window_bounds = array<i64: 1, 256, 16>}]} {
    %c0 = arith.constant 0 : index
    %c0_0 = arith.constant 0 : index
    %c0_1 = arith.constant 0 : index
    %0 = vector.load %arg1[%c0, %c0_0, %c0_1] : memref<1x256x16xbf16, #tpu.memory_space<vmem>>, vector<1x256x16xbf16>
    %1 = vector.shape_cast %0 : vector<1x256x16xbf16> to vector<256x16xbf16>
    %c0_2 = arith.constant 0 : index
    %c0_3 = arith.constant 0 : index
    %2 = vector.load %arg2[%c0_2, %c0_3] : memref<16x128xbf16, #tpu.memory_space<vmem>>, vector<16x128xbf16>
    %cst = arith.constant dense<0.000000e+00> : vector<256x128xf32>
    %3 = tpu.matmul %1, %2, %cst {dimension_numbers = #tpu.dot_dimension_numbers<[1], [0], [0], [1], [0, 0, 1, 1], [], []>} : vector<256x16xbf16>, vector<16x128xbf16>, vector<256x128xf32> -> vector<256x128xf32>
    %c0_4 = arith.constant 0 : index
    %c0_5 = arith.constant 0 : index
    %4 = vector.load %arg3[%c0_4, %c0_5] : memref<1x128xf32, #tpu.memory_space<vmem>>, vector<1x128xf32>
    %5 = vector.broadcast %4 : vector<1x128xf32> to vector<256x128xf32>
    %6 = arith.mulf %3, %5 : vector<256x128xf32>
    %c0_6 = arith.constant 0 : index
    %c0_7 = arith.constant 0 : index
    %7 = vector.load %arg4[%c0_6, %c0_7] : memref<1x128xf32, #tpu.memory_space<vmem>>, vector<1x128xf32>
    %8 = vector.broadcast %7 : vector<1x128xf32> to vector<256x128xf32>
    %9 = arith.addf %6, %8 : vector<256x128xf32>
    %cst_8 = arith.constant 0.000000e+00 : f32
    %10 = vector.broadcast %cst_8 : f32 to vector<256x128xf32>
    %11 = arith.maximumf %9, %10 : vector<256x128xf32>
    %cst_9 = arith.constant 0.000000e+00 : f32
    %12 = vector.broadcast %cst_9 : f32 to vector<18x18x128xf32>
    %c0_10 = arith.constant 0 : index
    %c0_11 = arith.constant 0 : index
    %c0_12 = arith.constant 0 : index
    %13 = vector.load %arg12[%c0_10, %c0_11, %c0_12] : memref<18x18x128xf32, #tpu.memory_space<vmem>>, vector<18x18x128xf32>
    tpu.vector_store %arg12[%c0_10, %c0_11, %c0_12], %12 {strides = array<i32>} : memref<18x18x128xf32, #tpu.memory_space<vmem>>, vector<18x18x128xf32>,
    %14 = vector.shape_cast %11 : vector<256x128xf32> to vector<16x16x128xf32>
    %c1 = arith.constant 1 : index
    %c1_13 = arith.constant 1 : index
    %c0_14 = arith.constant 0 : index
    %15 = vector.load %arg12[%c1, %c1_13, %c0_14] : memref<18x18x128xf32, #tpu.memory_space<vmem>>, vector<16x16x128xf32>
    tpu.vector_store %arg12[%c1, %c1_13, %c0_14], %14 {strides = array<i32>} : memref<18x18x128xf32, #tpu.memory_space<vmem>>, vector<16x16x128xf32>,
    %c0_15 = arith.constant 0 : index
    %c0_16 = arith.constant 0 : index
    %c0_17 = arith.constant 0 : index
    %16 = vector.load %arg12[%c0_15, %c0_16, %c0_17] : memref<18x18x128xf32, #tpu.memory_space<vmem>>, vector<16x16x128xf32>
    %17 = vector.shape_cast %16 : vector<16x16x128xf32> to vector<256x128xf32>
    %18 = arith.truncf %17 : vector<256x128xf32> to vector<256x128xbf16>
    %c0_18 = arith.constant 0 : index
    %c0_19 = arith.constant 0 : index
    %c0_20 = arith.constant 0 : index
    %19 = vector.load %arg5[%c0_18, %c0_19, %c0_20] : memref<9x128x128xbf16, #tpu.memory_space<vmem>>, vector<1x128x128xbf16>
    %20 = vector.shape_cast %19 : vector<1x128x128xbf16> to vector<128x128xbf16>
    %cst_21 = arith.constant dense<0.000000e+00> : vector<256x128xf32>
    %21 = tpu.matmul %18, %20, %cst_21 {dimension_numbers = #tpu.dot_dimension_numbers<[1], [0], [0], [1], [0, 0, 1, 1], [], []>} : vector<256x128xbf16>, vector<128x128xbf16>, vector<256x128xf32> -> vector<256x128xf32>
    %c0_22 = arith.constant 0 : index
    %c1_23 = arith.constant 1 : index
    %c0_24 = arith.constant 0 : index
    %22 = vector.load %arg12[%c0_22, %c1_23, %c0_24] : memref<18x18x128xf32, #tpu.memory_space<vmem>>, vector<16x16x128xf32>
    %23 = vector.shape_cast %22 : vector<16x16x128xf32> to vector<256x128xf32>
    %24 = arith.truncf %23 : vector<256x128xf32> to vector<256x128xbf16>
    %c1_25 = arith.constant 1 : index
    %c0_26 = arith.constant 0 : index
    %c0_27 = arith.constant 0 : index
    %25 = vector.load %arg5[%c1_25, %c0_26, %c0_27] : memref<9x128x128xbf16, #tpu.memory_space<vmem>>, vector<1x128x128xbf16>
    %26 = vector.shape_cast %25 : vector<1x128x128xbf16> to vector<128x128xbf16>
    %cst_28 = arith.constant dense<0.000000e+00> : vector<256x128xf32>
    %27 = tpu.matmul %24, %26, %cst_28 {dimension_numbers = #tpu.dot_dimension_numbers<[1], [0], [0], [1], [0, 0, 1, 1], [], []>} : vector<256x128xbf16>, vector<128x128xbf16>, vector<256x128xf32> -> vector<256x128xf32>
    %28 = arith.addf %21, %27 : vector<256x128xf32>
    %c0_29 = arith.constant 0 : index
    %c2 = arith.constant 2 : index
    %c0_30 = arith.constant 0 : index
    %29 = vector.load %arg12[%c0_29, %c2, %c0_30] : memref<18x18x128xf32, #tpu.memory_space<vmem>>, vector<16x16x128xf32>
    %30 = vector.shape_cast %29 : vector<16x16x128xf32> to vector<256x128xf32>
    %31 = arith.truncf %30 : vector<256x128xf32> to vector<256x128xbf16>
    %c2_31 = arith.constant 2 : index
    %c0_32 = arith.constant 0 : index
    %c0_33 = arith.constant 0 : index
    %32 = vector.load %arg5[%c2_31, %c0_32, %c0_33] : memref<9x128x128xbf16, #tpu.memory_space<vmem>>, vector<1x128x128xbf16>
    %33 = vector.shape_cast %32 : vector<1x128x128xbf16> to vector<128x128xbf16>
    %cst_34 = arith.constant dense<0.000000e+00> : vector<256x128xf32>
    %34 = tpu.matmul %31, %33, %cst_34 {dimension_numbers = #tpu.dot_dimension_numbers<[1], [0], [0], [1], [0, 0, 1, 1], [], []>} : vector<256x128xbf16>, vector<128x128xbf16>, vector<256x128xf32> -> vector<256x128xf32>
    %35 = arith.addf %28, %34 : vector<256x128xf32>
    %c1_35 = arith.constant 1 : index
    %c0_36 = arith.constant 0 : index
    %c0_37 = arith.constant 0 : index
    %36 = vector.load %arg12[%c1_35, %c0_36, %c0_37] : memref<18x18x128xf32, #tpu.memory_space<vmem>>, vector<16x16x128xf32>
    %37 = vector.shape_cast %36 : vector<16x16x128xf32> to vector<256x128xf32>
    %38 = arith.truncf %37 : vector<256x128xf32> to vector<256x128xbf16>
    %c3 = arith.constant 3 : index
    %c0_38 = arith.constant 0 : index
    %c0_39 = arith.constant 0 : index
    %39 = vector.load %arg5[%c3, %c0_38, %c0_39] : memref<9x128x128xbf16, #tpu.memory_space<vmem>>, vector<1x128x128xbf16>
    %40 = vector.shape_cast %39 : vector<1x128x128xbf16> to vector<128x128xbf16>
    %cst_40 = arith.constant dense<0.000000e+00> : vector<256x128xf32>
    %41 = tpu.matmul %38, %40, %cst_40 {dimension_numbers = #tpu.dot_dimension_numbers<[1], [0], [0], [1], [0, 0, 1, 1], [], []>} : vector<256x128xbf16>, vector<128x128xbf16>, vector<256x128xf32> -> vector<256x128xf32>
    %42 = arith.addf %35, %41 : vector<256x128xf32>
    %c1_41 = arith.constant 1 : index
    %c1_42 = arith.constant 1 : index
    %c0_43 = arith.constant 0 : index
    %43 = vector.load %arg12[%c1_41, %c1_42, %c0_43] : memref<18x18x128xf32, #tpu.memory_space<vmem>>, vector<16x16x128xf32>
    %44 = vector.shape_cast %43 : vector<16x16x128xf32> to vector<256x128xf32>
    %45 = arith.truncf %44 : vector<256x128xf32> to vector<256x128xbf16>
    %c4 = arith.constant 4 : index
    %c0_44 = arith.constant 0 : index
    %c0_45 = arith.constant 0 : index
    %46 = vector.load %arg5[%c4, %c0_44, %c0_45] : memref<9x128x128xbf16, #tpu.memory_space<vmem>>, vector<1x128x128xbf16>
    %47 = vector.shape_cast %46 : vector<1x128x128xbf16> to vector<128x128xbf16>
    %cst_46 = arith.constant dense<0.000000e+00> : vector<256x128xf32>
    %48 = tpu.matmul %45, %47, %cst_46 {dimension_numbers = #tpu.dot_dimension_numbers<[1], [0], [0], [1], [0, 0, 1, 1], [], []>} : vector<256x128xbf16>, vector<128x128xbf16>, vector<256x128xf32> -> vector<256x128xf32>
    %49 = arith.addf %42, %48 : vector<256x128xf32>
    %c1_47 = arith.constant 1 : index
    %c2_48 = arith.constant 2 : index
    %c0_49 = arith.constant 0 : index
    %50 = vector.load %arg12[%c1_47, %c2_48, %c0_49] : memref<18x18x128xf32, #tpu.memory_space<vmem>>, vector<16x16x128xf32>
    %51 = vector.shape_cast %50 : vector<16x16x128xf32> to vector<256x128xf32>
    %52 = arith.truncf %51 : vector<256x128xf32> to vector<256x128xbf16>
    %c5 = arith.constant 5 : index
    %c0_50 = arith.constant 0 : index
    %c0_51 = arith.constant 0 : index
    %53 = vector.load %arg5[%c5, %c0_50, %c0_51] : memref<9x128x128xbf16, #tpu.memory_space<vmem>>, vector<1x128x128xbf16>
    %54 = vector.shape_cast %53 : vector<1x128x128xbf16> to vector<128x128xbf16>
    %cst_52 = arith.constant dense<0.000000e+00> : vector<256x128xf32>
    %55 = tpu.matmul %52, %54, %cst_52 {dimension_numbers = #tpu.dot_dimension_numbers<[1], [0], [0], [1], [0, 0, 1, 1], [], []>} : vector<256x128xbf16>, vector<128x128xbf16>, vector<256x128xf32> -> vector<256x128xf32>
    %56 = arith.addf %49, %55 : vector<256x128xf32>
    %c2_53 = arith.constant 2 : index
    %c0_54 = arith.constant 0 : index
    %c0_55 = arith.constant 0 : index
    %57 = vector.load %arg12[%c2_53, %c0_54, %c0_55] : memref<18x18x128xf32, #tpu.memory_space<vmem>>, vector<16x16x128xf32>
    %58 = vector.shape_cast %57 : vector<16x16x128xf32> to vector<256x128xf32>
    %59 = arith.truncf %58 : vector<256x128xf32> to vector<256x128xbf16>
    %c6 = arith.constant 6 : index
    %c0_56 = arith.constant 0 : index
    %c0_57 = arith.constant 0 : index
    %60 = vector.load %arg5[%c6, %c0_56, %c0_57] : memref<9x128x128xbf16, #tpu.memory_space<vmem>>, vector<1x128x128xbf16>
    %61 = vector.shape_cast %60 : vector<1x128x128xbf16> to vector<128x128xbf16>
    %cst_58 = arith.constant dense<0.000000e+00> : vector<256x128xf32>
    %62 = tpu.matmul %59, %61, %cst_58 {dimension_numbers = #tpu.dot_dimension_numbers<[1], [0], [0], [1], [0, 0, 1, 1], [], []>} : vector<256x128xbf16>, vector<128x128xbf16>, vector<256x128xf32> -> vector<256x128xf32>
    %63 = arith.addf %56, %62 : vector<256x128xf32>
    %c2_59 = arith.constant 2 : index
    %c1_60 = arith.constant 1 : index
    %c0_61 = arith.constant 0 : index
    %64 = vector.load %arg12[%c2_59, %c1_60, %c0_61] : memref<18x18x128xf32, #tpu.memory_space<vmem>>, vector<16x16x128xf32>
    %65 = vector.shape_cast %64 : vector<16x16x128xf32> to vector<256x128xf32>
    %66 = arith.truncf %65 : vector<256x128xf32> to vector<256x128xbf16>
    %c7 = arith.constant 7 : index
    %c0_62 = arith.constant 0 : index
    %c0_63 = arith.constant 0 : index
    %67 = vector.load %arg5[%c7, %c0_62, %c0_63] : memref<9x128x128xbf16, #tpu.memory_space<vmem>>, vector<1x128x128xbf16>
    %68 = vector.shape_cast %67 : vector<1x128x128xbf16> to vector<128x128xbf16>
    %cst_64 = arith.constant dense<0.000000e+00> : vector<256x128xf32>
    %69 = tpu.matmul %66, %68, %cst_64 {dimension_numbers = #tpu.dot_dimension_numbers<[1], [0], [0], [1], [0, 0, 1, 1], [], []>} : vector<256x128xbf16>, vector<128x128xbf16>, vector<256x128xf32> -> vector<256x128xf32>
    %70 = arith.addf %63, %69 : vector<256x128xf32>
    %c2_65 = arith.constant 2 : index
    %c2_66 = arith.constant 2 : index
    %c0_67 = arith.constant 0 : index
    %71 = vector.load %arg12[%c2_65, %c2_66, %c0_67] : memref<18x18x128xf32, #tpu.memory_space<vmem>>, vector<16x16x128xf32>
    %72 = vector.shape_cast %71 : vector<16x16x128xf32> to vector<256x128xf32>
    %73 = arith.truncf %72 : vector<256x128xf32> to vector<256x128xbf16>
    %c8 = arith.constant 8 : index
    %c0_68 = arith.constant 0 : index
    %c0_69 = arith.constant 0 : index
    %74 = vector.load %arg5[%c8, %c0_68, %c0_69] : memref<9x128x128xbf16, #tpu.memory_space<vmem>>, vector<1x128x128xbf16>
    %75 = vector.shape_cast %74 : vector<1x128x128xbf16> to vector<128x128xbf16>
    %cst_70 = arith.constant dense<0.000000e+00> : vector<256x128xf32>
    %76 = tpu.matmul %73, %75, %cst_70 {dimension_numbers = #tpu.dot_dimension_numbers<[1], [0], [0], [1], [0, 0, 1, 1], [], []>} : vector<256x128xbf16>, vector<128x128xbf16>, vector<256x128xf32> -> vector<256x128xf32>
    %77 = arith.addf %70, %76 : vector<256x128xf32>
    %c0_71 = arith.constant 0 : index
    %c0_72 = arith.constant 0 : index
    %78 = vector.load %arg6[%c0_71, %c0_72] : memref<1x128xf32, #tpu.memory_space<vmem>>, vector<1x128xf32>
    %79 = vector.broadcast %78 : vector<1x128xf32> to vector<256x128xf32>
    %80 = arith.mulf %77, %79 : vector<256x128xf32>
    %c0_73 = arith.constant 0 : index
    %c0_74 = arith.constant 0 : index
    %81 = vector.load %arg7[%c0_73, %c0_74] : memref<1x128xf32, #tpu.memory_space<vmem>>, vector<1x128xf32>
    %82 = vector.broadcast %81 : vector<1x128xf32> to vector<256x128xf32>
    %83 = arith.addf %80, %82 : vector<256x128xf32>
    %cst_75 = arith.constant 0.000000e+00 : f32
    %84 = vector.broadcast %cst_75 : f32 to vector<256x128xf32>
    %85 = arith.maximumf %83, %84 : vector<256x128xf32>
    %86 = arith.truncf %85 : vector<256x128xf32> to vector<256x128xbf16>
    %c0_76 = arith.constant 0 : index
    %c0_77 = arith.constant 0 : index
    %87 = vector.load %arg8[%c0_76, %c0_77] : memref<128x16xbf16, #tpu.memory_space<vmem>>, vector<128x16xbf16>
    %cst_78 = arith.constant dense<0.000000e+00> : vector<256x16xf32>
    %88 = tpu.matmul %86, %87, %cst_78 {dimension_numbers = #tpu.dot_dimension_numbers<[1], [0], [0], [1], [0, 0, 1, 1], [], []>} : vector<256x128xbf16>, vector<128x16xbf16>, vector<256x16xf32> -> vector<256x16xf32>
    %c0_79 = arith.constant 0 : index
    %c0_80 = arith.constant 0 : index
    %89 = vector.load %arg9[%c0_79, %c0_80] : memref<1x16xf32, #tpu.memory_space<vmem>>, vector<1x16xf32>
    %90 = vector.broadcast %89 : vector<1x16xf32> to vector<256x16xf32>
    %91 = arith.mulf %88, %90 : vector<256x16xf32>
    %c0_81 = arith.constant 0 : index
    %c0_82 = arith.constant 0 : index
    %92 = vector.load %arg10[%c0_81, %c0_82] : memref<1x16xf32, #tpu.memory_space<vmem>>, vector<1x16xf32>
    %93 = vector.broadcast %92 : vector<1x16xf32> to vector<256x16xf32>
    %94 = arith.addf %91, %93 : vector<256x16xf32>
    %95 = arith.extf %1 : vector<256x16xbf16> to vector<256x16xf32>
    %96 = arith.addf %94, %95 : vector<256x16xf32>
    %cst_83 = arith.constant 0.000000e+00 : f32
    %97 = vector.broadcast %cst_83 : f32 to vector<256x16xf32>
    %98 = arith.maximumf %96, %97 : vector<256x16xf32>
    %c0_84 = arith.constant 0 : index
    %c0_85 = arith.constant 0 : index
    %c0_86 = arith.constant 0 : index
    %99 = vector.load %arg11[%c0_84, %c0_85, %c0_86] : memref<1x256x16xf32, #tpu.memory_space<vmem>>, vector<1x256x16xf32>
    %100 = vector.shape_cast %99 : vector<1x256x16xf32> to vector<256x16xf32>
    %101 = vector.shape_cast %98 : vector<256x16xf32> to vector<1x256x16xf32>
    tpu.vector_store %arg11[%c0_84, %c0_85, %c0_86], %101 {strides = array<i32>} : memref<1x256x16xf32, #tpu.memory_space<vmem>>, vector<1x256x16xf32>,
    return
  }
  func.func @transform_0(%arg0: i32) -> (i32, i32, i32) {
    %c0_i32 = arith.constant 0 : i32
    %c0_i32_0 = arith.constant 0 : i32
    %c0_i32_1 = arith.constant 0 : i32
    return %arg0, %c0_i32, %c0_i32_0 : i32, i32, i32
  }
  func.func @transform_1(%arg0: i32) -> (i32, i32) {
    %c0_i32 = arith.constant 0 : i32
    %c0_i32_0 = arith.constant 0 : i32
    %c0_i32_1 = arith.constant 0 : i32
    return %c0_i32, %c0_i32_0 : i32, i32
  }
  func.func @transform_2(%arg0: i32) -> (i32, i32) {
    %c0_i32 = arith.constant 0 : i32
    %c0_i32_0 = arith.constant 0 : i32
    %c0_i32_1 = arith.constant 0 : i32
    return %c0_i32, %c0_i32_0 : i32, i32
  }
  func.func @transform_3(%arg0: i32) -> (i32, i32) {
    %c0_i32 = arith.constant 0 : i32
    %c0_i32_0 = arith.constant 0 : i32
    %c0_i32_1 = arith.constant 0 : i32
    return %c0_i32, %c0_i32_0 : i32, i32
  }
  func.func @transform_4(%arg0: i32) -> (i32, i32, i32) {
    %c0_i32 = arith.constant 0 : i32
    %c0_i32_0 = arith.constant 0 : i32
    %c0_i32_1 = arith.constant 0 : i32
    %c0_i32_2 = arith.constant 0 : i32
    return %c0_i32, %c0_i32_0, %c0_i32_1 : i32, i32, i32
  }
  func.func @transform_5(%arg0: i32) -> (i32, i32) {
    %c0_i32 = arith.constant 0 : i32
    %c0_i32_0 = arith.constant 0 : i32
    %c0_i32_1 = arith.constant 0 : i32
    return %c0_i32, %c0_i32_0 : i32, i32
  }
  func.func @transform_6(%arg0: i32) -> (i32, i32) {
    %c0_i32 = arith.constant 0 : i32
    %c0_i32_0 = arith.constant 0 : i32
    %c0_i32_1 = arith.constant 0 : i32
    return %c0_i32, %c0_i32_0 : i32, i32
  }
  func.func @transform_7(%arg0: i32) -> (i32, i32) {
    %c0_i32 = arith.constant 0 : i32
    %c0_i32_0 = arith.constant 0 : i32
    %c0_i32_1 = arith.constant 0 : i32
    return %c0_i32, %c0_i32_0 : i32, i32
  }
  func.func @transform_8(%arg0: i32) -> (i32, i32) {
    %c0_i32 = arith.constant 0 : i32
    %c0_i32_0 = arith.constant 0 : i32
    %c0_i32_1 = arith.constant 0 : i32
    return %c0_i32, %c0_i32_0 : i32, i32
  }
  func.func @transform_9(%arg0: i32) -> (i32, i32) {
    %c0_i32 = arith.constant 0 : i32
    %c0_i32_0 = arith.constant 0 : i32
    %c0_i32_1 = arith.constant 0 : i32
    return %c0_i32, %c0_i32_0 : i32, i32
  }
  func.func @transform_10(%arg0: i32) -> (i32, i32, i32) {
    %c0_i32 = arith.constant 0 : i32
    %c0_i32_0 = arith.constant 0 : i32
    %c0_i32_1 = arith.constant 0 : i32
    return %arg0, %c0_i32, %c0_i32_0 : i32, i32, i32
  }
}

</mosaic_0001>

<llo_original>
// kernel: tpu_custom_call.1
$region0: #{tpu_custom_call.1}
  #allocation0 [shape = 'u32[]', space=smem, size = 0x4, offset = 0x4, fixed_abs, tag = 'smem constant byte address 0x4 - core index']
  #allocation1 [shape = 'u32[144,128]{1,0:T(1,128)}', space=vmem, size = 0x12000, scoped, tag = 'internal scratch']
  #allocation2 [shape = 'f32[18,18,128]{2,1,0:T(8,128)}', space=vmem, size = 0x36000, scoped, tag = 'scratch operand']
  %s0 = inlined_call_operand.vmem [shape: bf16[2,256,16], index: 0, kind: input, shape index: {}]
  %s1 = inlined_call_operand.vmem [shape: bf16[16,128], index: 1, kind: input, shape index: {}]
  %s2 = inlined_call_operand.vmem [shape: f32[1,128], index: 2, kind: input, shape index: {}]
  %s3 = inlined_call_operand.vmem [shape: f32[1,128], index: 3, kind: input, shape index: {}]
  %s4 = inlined_call_operand.hbm [shape: bf16[9,128,128], index: 4, kind: input, shape index: {}]
  %s5 = inlined_call_operand.vmem [shape: f32[1,128], index: 5, kind: input, shape index: {}]
  %s6 = inlined_call_operand.vmem [shape: f32[1,128], index: 6, kind: input, shape index: {}]
  %s7 = inlined_call_operand.vmem [shape: bf16[128,16], index: 7, kind: input, shape index: {}]
  %s8 = inlined_call_operand.vmem [shape: f32[1,16], index: 8, kind: input, shape index: {}]
  %s9 = inlined_call_operand.vmem [shape: f32[1,16], index: 9, kind: input, shape index: {}]
  %s10 = inlined_call_operand.vmem [shape: f32[2,256,16], index: 10, kind: output, shape index: {}]
  %s11 = sld [smem:[#allocation0]]
  $region77: #{tpu_custom_call.1} parent=0
    _
  %s13 = ssub.s32 1, %s11
  %s14 = scalar_select 0, %s13, %s11
  $region1: #{tpu_custom_call.1} parent=0
    #allocation3 [shape = 'u8[294912]{0}', space=vmem, size = 0x48000, scoped, tag = 'input window, operand 4, single buffered']
    #allocation4 [shape = 's32[2]{0}', space=sflag, size = 0x8, scoped, tag = 'scoped memory for tpu_custom_call.1']
    %15 = vsyncpa [#allocation4], 0
    loop: start=0, step=1, limit=4
    $region2: #{tpu_custom_call.1} parent=1 // loop_pre_header
      _
    $region3: #{tpu_custom_call.1} parent=1 // loop_header
      %s17 = sphi 0, %s21
      %p18 = scmp.ge.s32.totalorder %s17, 4
      %s27 = sphi 0, %s29
      %s30 = sphi 0, %s27
      %s31 = sphi 0, %s30
      %s47 = sphi 0, %s31
      %s51 = sphi 0, %s51
      %s53 = sphi 0, %s51
      %s54 = sphi 0, %s53
      %s68 = sphi 0, %s54
      %s72 = sphi 0, %s72
      %s74 = sphi 0, %s72
      %s75 = sphi 0, %s74
      %s89 = sphi 0, %s75
      %s93 = sphi 0, %s93
      %s95 = sphi 0, %s93
      %s96 = sphi 0, %s95
      %s110 = sphi 0, %s96
      %s114 = sphi 0, %s114
      %s116 = sphi 0, %s114
      %s117 = sphi 0, %s116
      %s131 = sphi 0, %s117
      %s135 = sphi 0, %s135
      %s137 = sphi 0, %s135
      %s138 = sphi 0, %s137
      %s152 = sphi 0, %s138
      %s156 = sphi 0, %s156
      %s158 = sphi 0, %s156
      %s159 = sphi 0, %s158
      %s173 = sphi 0, %s159
      %s177 = sphi 0, %s177
      %s179 = sphi 0, %s177
      %s180 = sphi 0, %s179
      %s194 = sphi 0, %s180
      %s198 = sphi 0, %s198
      %s200 = sphi 0, %s198
      %s201 = sphi 0, %s200
      %s215 = sphi 0, %s201
      %s219 = sphi 0, %s219
      %s221 = sphi 0, %s219
      %s222 = sphi 0, %s221
      %s236 = sphi 0, %s222
      %s242 = sphi 0, %s244
      %s245 = sphi 0, %s242
      %s246 = sphi 0, %s245
      %s262 = sphi 0, %s246
    $region4: #{tpu_custom_call.1} parent=1 // loop_header_branch
      %20 = sbr.rel (%p18) target = $region8
    $region5: #{tpu_custom_call.1} parent=1 // loop_body
      %s22 = ssub.s32 %s17, 1
      %s23 = ssub.s32 %s17, 2
      %s24 = sadd.s32 %s17, 1
      %s25 = ssub.s32 %s17, %s24
      %p26 = scmp.eq.s32.totalorder %s25, 0
      %s28 = sadd.s32 %s27, 1
      %s29 = scalar_select %p26, %s27, %s28
      %p32 = pneg %p26
      %p33 = scmp.eq.s32.totalorder %s17, 1
      %p34 = por %p32, %p33
      %p35 = scmp.ne.s32.totalorder %s27, %s30
      %p36 = scmp.eq.s32.totalorder %s17, 0
      %p37 = por %p35, %p36
      %p38 = scmp.ne.s32.totalorder %s27, %s30
      %p39 = scmp.eq.s32.totalorder %s22, 1
      %p40 = por %p38, %p39
      %p41 = scmp.ne.s32.totalorder %s30, %s31
      %p42 = scmp.eq.s32.totalorder %s22, 0
      %p43 = por %p41, %p42
      %p44 = scmp.ne.s32.totalorder %s30, %s31
      %p45 = scmp.eq.s32.totalorder %s23, 1
      %p46 = por %p44, %p45
      %p48 = scmp.ne.s32.totalorder %s31, %s47
      %p49 = scmp.eq.s32.totalorder %s23, 0
      %p50 = por %p48, %p49
      %s52 = sadd.s32 %s51, 1
      %p55 = scmp.eq.s32.totalorder %s17, 1
      %p56 = scmp.ne.s32.totalorder %s51, %s53
      %p57 = scmp.eq.s32.totalorder %s17, 0
      %p58 = por %p56, %p57
      %p59 = scmp.ne.s32.totalorder %s51, %s53
      %p60 = scmp.eq.s32.totalorder %s22, 1
      %p61 = por %p59, %p60
      %p62 = scmp.ne.s32.totalorder %s53, %s54
      %p63 = scmp.eq.s32.totalorder %s22, 0
      %p64 = por %p62, %p63
      %p65 = scmp.ne.s32.totalorder %s53, %s54
      %p66 = scmp.eq.s32.totalorder %s23, 1
      %p67 = por %p65, %p66
      %p69 = scmp.ne.s32.totalorder %s54, %s68
      %p70 = scmp.eq.s32.totalorder %s23, 0
      %p71 = por %p69, %p70
      %s73 = sadd.s32 %s72, 1
      %p76 = scmp.eq.s32.totalorder %s17, 1
      %p77 = scmp.ne.s32.totalorder %s72, %s74
      %p78 = scmp.eq.s32.totalorder %s17, 0
      %p79 = por %p77, %p78
      %p80 = scmp.ne.s32.totalorder %s72, %s74
      %p81 = scmp.eq.s32.totalorder %s22, 1
      %p82 = por %p80, %p81
      %p83 = scmp.ne.s32.totalorder %s74, %s75
      %p84 = scmp.eq.s32.totalorder %s22, 0
      %p85 = por %p83, %p84
      %p86 = scmp.ne.s32.totalorder %s74, %s75
      %p87 = scmp.eq.s32.totalorder %s23, 1
      %p88 = por %p86, %p87
      %p90 = scmp.ne.s32.totalorder %s75, %s89
      %p91 = scmp.eq.s32.totalorder %s23, 0
      %p92 = por %p90, %p91
      %s94 = sadd.s32 %s93, 1
      %p97 = scmp.eq.s32.totalorder %s17, 1
      %p98 = scmp.ne.s32.totalorder %s93, %s95
      %p99 = scmp.eq.s32.totalorder %s17, 0
      %p100 = por %p98, %p99
      %p101 = scmp.ne.s32.totalorder %s93, %s95
      %p102 = scmp.eq.s32.totalorder %s22, 1
      %p103 = por %p101, %p102
      %p104 = scmp.ne.s32.totalorder %s95, %s96
      %p105 = scmp.eq.s32.totalorder %s22, 0
      %p106 = por %p104, %p105
      %p107 = scmp.ne.s32.totalorder %s95, %s96
      %p108 = scmp.eq.s32.totalorder %s23, 1
      %p109 = por %p107, %p108
      %p111 = scmp.ne.s32.totalorder %s96, %s110
      %p112 = scmp.eq.s32.totalorder %s23, 0
      %p113 = por %p111, %p112
      %s115 = sadd.s32 %s114, 1
      %p118 = scmp.eq.s32.totalorder %s17, 1
      %p119 = scmp.ne.s32.totalorder %s114, %s116
      %p120 = scmp.eq.s32.totalorder %s17, 0
      %p121 = por %p119, %p120
      %p122 = scmp.ne.s32.totalorder %s114, %s116
      %p123 = scmp.eq.s32.totalorder %s22, 1
      %p124 = por %p122, %p123
      %p125 = scmp.ne.s32.totalorder %s116, %s117
      %p126 = scmp.eq.s32.totalorder %s22, 0
      %p127 = por %p125, %p126
      %p128 = scmp.ne.s32.totalorder %s116, %s117
      %p129 = scmp.eq.s32.totalorder %s23, 1
      %p130 = por %p128, %p129
      %p132 = scmp.ne.s32.totalorder %s117, %s131
      %p133 = scmp.eq.s32.totalorder %s23, 0
      %p134 = por %p132, %p133
      %s136 = sadd.s32 %s135, 1
      %p139 = scmp.eq.s32.totalorder %s17, 1
      %p140 = scmp.ne.s32.totalorder %s135, %s137
      %p141 = scmp.eq.s32.totalorder %s17, 0
      %p142 = por %p140, %p141
      %p143 = scmp.ne.s32.totalorder %s135, %s137
      %p144 = scmp.eq.s32.totalorder %s22, 1
      %p145 = por %p143, %p144
      %p146 = scmp.ne.s32.totalorder %s137, %s138
      %p147 = scmp.eq.s32.totalorder %s22, 0
      %p148 = por %p146, %p147
      %p149 = scmp.ne.s32.totalorder %s137, %s138
      %p150 = scmp.eq.s32.totalorder %s23, 1
      %p151 = por %p149, %p150
      %p153 = scmp.ne.s32.totalorder %s138, %s152
      %p154 = scmp.eq.s32.totalorder %s23, 0
      %p155 = por %p153, %p154
      %s157 = sadd.s32 %s156, 1
      %p160 = scmp.eq.s32.totalorder %s17, 1
      %p161 = scmp.ne.s32.totalorder %s156, %s158
      %p162 = scmp.eq.s32.totalorder %s17, 0
      %p163 = por %p161, %p162
      %p164 = scmp.ne.s32.totalorder %s156, %s158
      %p165 = scmp.eq.s32.totalorder %s22, 1
      %p166 = por %p164, %p165
      %p167 = scmp.ne.s32.totalorder %s158, %s159
      %p168 = scmp.eq.s32.totalorder %s22, 0
      %p169 = por %p167, %p168
      %p170 = scmp.ne.s32.totalorder %s158, %s159
      %p171 = scmp.eq.s32.totalorder %s23, 1
      %p172 = por %p170, %p171
      %p174 = scmp.ne.s32.totalorder %s159, %s173
      %p175 = scmp.eq.s32.totalorder %s23, 0
      %p176 = por %p174, %p175
      %s178 = sadd.s32 %s177, 1
      %p181 = scmp.eq.s32.totalorder %s17, 1
      %p182 = scmp.ne.s32.totalorder %s177, %s179
      %p183 = scmp.eq.s32.totalorder %s17, 0
      %p184 = por %p182, %p183
      %p185 = scmp.ne.s32.totalorder %s177, %s179
      %p186 = scmp.eq.s32.totalorder %s22, 1
      %p187 = por %p185, %p186
      %p188 = scmp.ne.s32.totalorder %s179, %s180
      %p189 = scmp.eq.s32.totalorder %s22, 0
      %p190 = por %p188, %p189
      %p191 = scmp.ne.s32.totalorder %s179, %s180
      %p192 = scmp.eq.s32.totalorder %s23, 1
      %p193 = por %p191, %p192
      %p195 = scmp.ne.s32.totalorder %s180, %s194
      %p196 = scmp.eq.s32.totalorder %s23, 0
      %p197 = por %p195, %p196
      %s199 = sadd.s32 %s198, 1
      %p202 = scmp.eq.s32.totalorder %s17, 1
      %p203 = scmp.ne.s32.totalorder %s198, %s200
      %p204 = scmp.eq.s32.totalorder %s17, 0
      %p205 = por %p203, %p204
      %p206 = scmp.ne.s32.totalorder %s198, %s200
      %p207 = scmp.eq.s32.totalorder %s22, 1
      %p208 = por %p206, %p207
      %p209 = scmp.ne.s32.totalorder %s200, %s201
      %p210 = scmp.eq.s32.totalorder %s22, 0
      %p211 = por %p209, %p210
      %p212 = scmp.ne.s32.totalorder %s200, %s201
      %p213 = scmp.eq.s32.totalorder %s23, 1
      %p214 = por %p212, %p213
      %p216 = scmp.ne.s32.totalorder %s201, %s215
      %p217 = scmp.eq.s32.totalorder %s23, 0
      %p218 = por %p216, %p217
      %s220 = sadd.s32 %s219, 1
      %p223 = scmp.eq.s32.totalorder %s17, 1
      %p224 = scmp.ne.s32.totalorder %s219, %s221
      %p225 = scmp.eq.s32.totalorder %s17, 0
      %p226 = por %p224, %p225
      %p227 = scmp.ne.s32.totalorder %s219, %s221
      %p228 = scmp.eq.s32.totalorder %s22, 1
      %p229 = por %p227, %p228
      %p230 = scmp.ne.s32.totalorder %s221, %s222
      %p231 = scmp.eq.s32.totalorder %s22, 0
      %p232 = por %p230, %p231
      %p233 = scmp.ne.s32.totalorder %s221, %s222
      %p234 = scmp.eq.s32.totalorder %s23, 1
      %p235 = por %p233, %p234
      %p237 = scmp.ne.s32.totalorder %s222, %s236
      %p238 = scmp.eq.s32.totalorder %s23, 0
      %p239 = por %p237, %p238
      %s240 = ssub.s32 %s17, %s24
      %p241 = scmp.eq.s32.totalorder %s240, 0
      %s243 = sadd.s32 %s242, 1
      %s244 = scalar_select %p241, %s242, %s243
      %p247 = pneg %p241
      %p248 = scmp.eq.s32.totalorder %s17, 1
      %p249 = por %p247, %p248
      %p250 = scmp.ne.s32.totalorder %s242, %s245
      %p251 = scmp.eq.s32.totalorder %s17, 0
      %p252 = por %p250, %p251
      %p253 = scmp.ne.s32.totalorder %s242, %s245
      %p254 = scmp.eq.s32.totalorder %s22, 1
      %p255 = por %p253, %p254
      %p256 = scmp.ne.s32.totalorder %s245, %s246
      %p257 = scmp.eq.s32.totalorder %s22, 0
      %p258 = por %p256, %p257
      %p259 = scmp.ne.s32.totalorder %s245, %s246
      %p260 = scmp.eq.s32.totalorder %s23, 1
      %p261 = por %p259, %p260
      %p263 = scmp.ne.s32.totalorder %s246, %s262
      %p264 = scmp.eq.s32.totalorder %s23, 0
      %p265 = por %p263, %p264
      %p266 = scmp.le.s32.totalorder 1, %s17
      %p267 = scmp.lt.s32.totalorder %s17, 3
      %p268 = pnand %p266, %p267
      %p269 = pneg %p268
      // Predicated region
      $region9: #{tpu_custom_call.1} parent=5 // pred_check
        _
      $region10: #{tpu_custom_call.1} parent=5 // pred_check_branch
        %271 = sbr.rel (%p268) target = $region12
      $region11: #{tpu_custom_call.1} parent=5 // pred_region
        %s272 = ssub.s32 %s17, 1
        // Predicated region
        $region13: #{tpu_custom_call.1} parent=11 // pred_check
          %p273 = pneg %p64
        $region14: #{tpu_custom_call.1} parent=11 // pred_check_branch
          %275 = sbr.rel (%p273) target = $region16
        $region15: #{tpu_custom_call.1} parent=11 // pred_region
          _
        $region16: #{tpu_custom_call.1} parent=11 // pred_fallthru
          _
        // Predicated region
        $region17: #{tpu_custom_call.1} parent=11 // pred_check
          %p276 = pneg %p85
        $region18: #{tpu_custom_call.1} parent=11 // pred_check_branch
          %278 = sbr.rel (%p276) target = $region20
        $region19: #{tpu_custom_call.1} parent=11 // pred_region
          _
        $region20: #{tpu_custom_call.1} parent=11 // pred_fallthru
          _
        // Predicated region
        $region21: #{tpu_custom_call.1} parent=11 // pred_check
          %p279 = pneg %p106
        $region22: #{tpu_custom_call.1} parent=11 // pred_check_branch
          %281 = sbr.rel (%p279) target = $region24
        $region23: #{tpu_custom_call.1} parent=11 // pred_region
          _
        $region24: #{tpu_custom_call.1} parent=11 // pred_fallthru
          _
        // Predicated region
        $region25: #{tpu_custom_call.1} parent=11 // pred_check
          %p282 = pneg %p127
        $region26: #{tpu_custom_call.1} parent=11 // pred_check_branch
          %284 = sbr.rel (%p282) target = $region28
        $region27: #{tpu_custom_call.1} parent=11 // pred_region
          %s286 = ssub.s32 9216, 9216
          %287 = vsyncadd [#allocation4], %s286
          %s288 = sshll.u32 [#allocation3], 4
          %s289 = int_to_ptr.vmem [resolvable:$true] %s288
          %294 = dma.hbm_to_vmem [thread:$0]  %s4, 9216, %s289, [#allocation4], 64, 64, 4
        $region28: #{tpu_custom_call.1} parent=11 // pred_fallthru
          _
        // Predicated region
        $region29: #{tpu_custom_call.1} parent=11 // pred_check
          %p295 = pneg %p148
        $region30: #{tpu_custom_call.1} parent=11 // pred_check_branch
          %297 = sbr.rel (%p295) target = $region32
        $region31: #{tpu_custom_call.1} parent=11 // pred_region
          _
        $region32: #{tpu_custom_call.1} parent=11 // pred_fallthru
          _
        // Predicated region
        $region33: #{tpu_custom_call.1} parent=11 // pred_check
          %p298 = pneg %p169
        $region34: #{tpu_custom_call.1} parent=11 // pred_check_branch
          %300 = sbr.rel (%p298) target = $region36
        $region35: #{tpu_custom_call.1} parent=11 // pred_region
          _
        $region36: #{tpu_custom_call.1} parent=11 // pred_fallthru
          _
        // Predicated region
        $region37: #{tpu_custom_call.1} parent=11 // pred_check
          %p301 = pneg %p190
        $region38: #{tpu_custom_call.1} parent=11 // pred_check_branch
          %303 = sbr.rel (%p301) target = $region40
        $region39: #{tpu_custom_call.1} parent=11 // pred_region
          _
        $region40: #{tpu_custom_call.1} parent=11 // pred_fallthru
          _
        // Predicated region
        $region41: #{tpu_custom_call.1} parent=11 // pred_check
          %p304 = pneg %p211
        $region42: #{tpu_custom_call.1} parent=11 // pred_check_branch
          %306 = sbr.rel (%p304) target = $region44
        $region43: #{tpu_custom_call.1} parent=11 // pred_region
          _
        $region44: #{tpu_custom_call.1} parent=11 // pred_fallthru
          _
        // Predicated region
        $region45: #{tpu_custom_call.1} parent=11 // pred_check
          %p307 = pneg %p232
        $region46: #{tpu_custom_call.1} parent=11 // pred_check_branch
          %309 = sbr.rel (%p307) target = $region48
        $region47: #{tpu_custom_call.1} parent=11 // pred_region
          _
        $region48: #{tpu_custom_call.1} parent=11 // pred_fallthru
          _
      $region12: #{tpu_custom_call.1} parent=5 // pred_fallthru
        _
      %p310 = scmp.lt.s32.totalorder %s17, 2
      // Predicated region
      $region49: #{tpu_custom_call.1} parent=5 // pred_check
        %p311 = pneg %p310
      $region50: #{tpu_custom_call.1} parent=5 // pred_check_branch
        %313 = sbr.rel (%p311) target = $region52
      $region51: #{tpu_custom_call.1} parent=5 // pred_region
        // Predicated region
        $region53: #{tpu_custom_call.1} parent=51 // pred_check
          %p314 = pneg %p37
        $region54: #{tpu_custom_call.1} parent=51 // pred_check_branch
          %316 = sbr.rel (%p314) target = $region56
        $region55: #{tpu_custom_call.1} parent=51 // pred_region
          %p317 = scmp.lt.s32.totalorder %s17, 1
          %s318 = scalar_select %p317, %s17, 1
          %s319 = smul.addr %s318, 32
          %s320 = smul.addr %s319, 4
          %s321 = scalar_lea.vmem %s0, %s320
        $region56: #{tpu_custom_call.1} parent=51 // pred_fallthru
          _
      $region52: #{tpu_custom_call.1} parent=5 // pred_fallthru
        _
      %p322 = scmp.le.s32.totalorder 1, %s17
      %p323 = scmp.lt.s32.totalorder %s17, 3
      %p324 = pnand %p322, %p323
      %p325 = pneg %p324
      // Predicated region
      $region57: #{tpu_custom_call.1} parent=5 // pred_check
        _
      $region58: #{tpu_custom_call.1} parent=5 // pred_check_branch
        %327 = sbr.rel (%p324) target = $region60
      $region59: #{tpu_custom_call.1} parent=5 // pred_region
        %s328 = ssub.s32 %s17, 1
        // Predicated region
        $region61: #{tpu_custom_call.1} parent=59 // pred_check
          %p329 = pneg %p127
        $region62: #{tpu_custom_call.1} parent=59 // pred_check_branch
          %331 = sbr.rel (%p329) target = $region64
        $region63: #{tpu_custom_call.1} parent=59 // pred_region
          %332 = dma.done [#allocation4], 9216
        $region64: #{tpu_custom_call.1} parent=59 // pred_fallthru
          _
        %p333 = scmp.lt.s32.totalorder %s22, 1
        %s334 = scalar_select %p333, %s22, 1
        %s335 = smul.addr %s334, 32
        %s336 = smul.addr %s335, 4
        %s337 = scalar_lea.vmem %s0, %s336
        %p338 = pneg %p43
        %p339 = pneg %p40
        %p340 = pneg %p64
        %p341 = pneg %p61
        %p342 = pneg %p85
        %p343 = pneg %p82
        %p344 = pneg %p106
        %p345 = pneg %p103
        %p346 = pneg %p127
        %p347 = pneg %p124
        %p348 = pneg %p148
        %p349 = pneg %p145
        %p350 = pneg %p169
        %p351 = pneg %p166
        %p352 = pneg %p190
        %p353 = pneg %p187
        %p354 = pneg %p211
        %p355 = pneg %p208
        %p356 = pneg %p232
        %p357 = pneg %p229
        %p358 = pneg %p258
        %p359 = pneg %p255
        %p360 = scmp.lt.s32.totalorder %s22, 1
        %s361 = scalar_select %p360, %s22, 1
        %s362 = smul.addr %s361, 32
        %s363 = smul.addr %s362, 8
        %s364 = scalar_lea.vmem %s10, %s363
        %p365 = scmp.lt.s32.totalorder %s22, 1
        %s366 = scalar_select %p365, %s22, 1
        %s367 = smul.addr %s366, 32
        %s368 = smul.addr %s367, 4
        %s369 = scalar_lea.vmem %s0, %s368
        %p370 = scmp.lt.s32.totalorder %s22, 1
        %s371 = scalar_select %p370, %s22, 1
        %s372 = smul.addr %s371, 32
        %s373 = smul.addr %s372, 8
        %s374 = scalar_lea.vmem %s10, %s373
        %v376 = vld [vmem:[%s369] sm:$0xf]
        %v377 = vld [vmem:[%s369 + $0x4] sm:$0xf]
        %v378 = vld [vmem:[%s369 + $0x8] sm:$0xf]
        %v379 = vld [vmem:[%s369 + $0xc] sm:$0xf]
        %v380 = vld [vmem:[%s369 + $0x10] sm:$0xf]
        %v381 = vld [vmem:[%s369 + $0x14] sm:$0xf]
        %v382 = vld [vmem:[%s369 + $0x18] sm:$0xf]
        %v383 = vld [vmem:[%s369 + $0x1c] sm:$0xf]
        %v384 = vld [vmem:[%s369 + $0x20] sm:$0xf]
        %v385 = vld [vmem:[%s369 + $0x24] sm:$0xf]
        %v386 = vld [vmem:[%s369 + $0x28] sm:$0xf]
        %v387 = vld [vmem:[%s369 + $0x2c] sm:$0xf]
        %v388 = vld [vmem:[%s369 + $0x30] sm:$0xf]
        %v389 = vld [vmem:[%s369 + $0x34] sm:$0xf]
        %v390 = vld [vmem:[%s369 + $0x38] sm:$0xf]
        %v391 = vld [vmem:[%s369 + $0x3c] sm:$0xf]
        %v392 = vld [vmem:[%s369 + $0x40] sm:$0xf]
        %v393 = vld [vmem:[%s369 + $0x44] sm:$0xf]
        %v394 = vld [vmem:[%s369 + $0x48] sm:$0xf]
        %v395 = vld [vmem:[%s369 + $0x4c] sm:$0xf]
        %v396 = vld [vmem:[%s369 + $0x50] sm:$0xf]
        %v397 = vld [vmem:[%s369 + $0x54] sm:$0xf]
        %v398 = vld [vmem:[%s369 + $0x58] sm:$0xf]
        %v399 = vld [vmem:[%s369 + $0x5c] sm:$0xf]
        %v400 = vld [vmem:[%s369 + $0x60] sm:$0xf]
        %v401 = vld [vmem:[%s369 + $0x64] sm:$0xf]
        %v402 = vld [vmem:[%s369 + $0x68] sm:$0xf]
        %v403 = vld [vmem:[%s369 + $0x6c] sm:$0xf]
        %v404 = vld [vmem:[%s369 + $0x70] sm:$0xf]
        %v405 = vld [vmem:[%s369 + $0x74] sm:$0xf]
        %v406 = vld [vmem:[%s369 + $0x78] sm:$0xf]
        %v407 = vld [vmem:[%s369 + $0x7c] sm:$0xf]
        %v408 = vld [vmem:[%s1] sm:$0xf]
        %v409 = vld [vmem:[%s1 + $0x4] sm:$0xf]
        %v442 = vunpack.c.l.b16 %v376
        %v443 = vunpack.c.l.b16 %v377
        %v444 = vunpack.c.l.b16 %v378
        %v445 = vunpack.c.l.b16 %v379
        %v446 = vunpack.c.l.b16 %v380
        %v447 = vunpack.c.l.b16 %v381
        %v448 = vunpack.c.l.b16 %v382
        %v449 = vunpack.c.l.b16 %v383
        %v450 = vunpack.c.l.b16 %v384
        %v451 = vunpack.c.l.b16 %v385
        %v452 = vunpack.c.l.b16 %v386
        %v453 = vunpack.c.l.b16 %v387
        %v454 = vunpack.c.l.b16 %v388
        %v455 = vunpack.c.l.b16 %v389
        %v456 = vunpack.c.l.b16 %v390
        %v457 = vunpack.c.l.b16 %v391
        %v458 = vunpack.c.l.b16 %v392
        %v459 = vunpack.c.l.b16 %v393
        %v460 = vunpack.c.l.b16 %v394
        %v461 = vunpack.c.l.b16 %v395
        %v462 = vunpack.c.l.b16 %v396
        %v463 = vunpack.c.l.b16 %v397
        %v464 = vunpack.c.l.b16 %v398
        %v465 = vunpack.c.l.b16 %v399
        %v466 = vunpack.c.l.b16 %v400
        %v467 = vunpack.c.l.b16 %v401
        %v468 = vunpack.c.l.b16 %v402
        %v469 = vunpack.c.l.b16 %v403
        %v470 = vunpack.c.l.b16 %v404
        %v471 = vunpack.c.l.b16 %v405
        %v472 = vunpack.c.l.b16 %v406
        %v473 = vunpack.c.l.b16 %v407
        %v474 = vpack.c.b16 %v443, %v442
        %v475 = vpack.c.b16 %v445, %v444
        %v476 = vpack.c.b16 %v447, %v446
        %v477 = vpack.c.b16 %v449, %v448
        %v478 = vpack.c.b16 %v451, %v450
        %v479 = vpack.c.b16 %v453, %v452
        %v480 = vpack.c.b16 %v455, %v454
        %v481 = vpack.c.b16 %v457, %v456
        %v482 = vpack.c.b16 %v459, %v458
        %v483 = vpack.c.b16 %v461, %v460
        %v484 = vpack.c.b16 %v463, %v462
        %v485 = vpack.c.b16 %v465, %v464
        %v486 = vpack.c.b16 %v467, %v466
        %v487 = vpack.c.b16 %v469, %v468
        %v488 = vpack.c.b16 %v471, %v470
        %v489 = vpack.c.b16 %v473, %v472
        %v492 = vunpack.c.l.b16 %v408
        %v493 = vunpack.c.l.b16 %v409
        %v494 = vpack.c.b16 %v493, %v492
        %vm496 = vcmask 130048
        %v498 = vsel %vm496, %v474, 0
        %v501 = vsel %vm496, %v475, 0
        %v504 = vsel %vm496, %v476, 0
        %v507 = vsel %vm496, %v477, 0
        %v510 = vsel %vm496, %v478, 0
        %v513 = vsel %vm496, %v479, 0
        %v516 = vsel %vm496, %v480, 0
        %v519 = vsel %vm496, %v481, 0
        %v522 = vsel %vm496, %v482, 0
        %v525 = vsel %vm496, %v483, 0
        %v528 = vsel %vm496, %v484, 0
        %v531 = vsel %vm496, %v485, 0
        %v534 = vsel %vm496, %v486, 0
        %v537 = vsel %vm496, %v487, 0
        %v540 = vsel %vm496, %v488, 0
        %v543 = vsel %vm496, %v489, 0
        %545 = vmatprep.subr.bf16.mxu0 0
        %546 = vmatpush1.bf16.msra.mxu0 %v494
        %547 = vmatprep.subr.bf16.mxu0 0
        %548 = vmatpush1.bf16.msra.mxu0 0
        %549 = vmatprep.subr.bf16.mxu0 0
        %550 = vmatpush1.bf16.msra.mxu0 0
        %551 = vmatprep.subr.bf16.mxu0 0
        %552 = vmatpush1.bf16.msra.mxu0 0
        %553 = vmatprep.subr.bf16.mxu0 0
        %554 = vmatpush1.bf16.msra.mxu0 0
        %555 = vmatprep.subr.bf16.mxu0 0
        %556 = vmatpush1.bf16.msra.mxu0 0
        %557 = vmatprep.subr.bf16.mxu0 0
        %558 = vmatpush1.bf16.msra.mxu0 0
        %559 = vmatprep.subr.bf16.mxu0 0
        %560 = vmatpush1.bf16.msra.mxu0 0
        %561 = vmatprep.subr.bf16.mxu0 0
        %562 = vmatpush1.bf16.msra.mxu0 0
        %563 = vmatprep.subr.bf16.mxu0 0
        %564 = vmatpush1.bf16.msra.mxu0 0
        %565 = vmatprep.subr.bf16.mxu0 0
        %566 = vmatpush1.bf16.msra.mxu0 0
        %567 = vmatprep.subr.bf16.mxu0 0
        %568 = vmatpush1.bf16.msra.mxu0 0
        %569 = vmatprep.subr.bf16.mxu0 0
        %570 = vmatpush1.bf16.msra.mxu0 0
        %571 = vmatprep.subr.bf16.mxu0 0
        %572 = vmatpush1.bf16.msra.mxu0 0
        %573 = vmatprep.subr.bf16.mxu0 0
        %574 = vmatpush1.bf16.msra.mxu0 0
        %575 = vmatprep.subr.bf16.mxu0 0
        %576 = vmatpush1.bf16.msra.mxu0 0
        %577 = vmatprep.mubr.bf16.mxu0 0
        %578 = vmatmul.mubr.bf16.gmra.mrb[0].mxu0 %v498
        %v579 = vpop.f32.mrb[0].mxu0
        %v580 = vadd.f32 0.0, %v579
        %v581 = vpop.f32.mrb[0].mxu0
        %v582 = vpop.f32.mrb[0].mxu0
        %v583 = vadd.f32 0.0, %v582
        %v584 = vpop.f32.mrb[0].mxu0
        %585 = vmatprep.mubr.bf16.mxu0 0
        %586 = vmatmul.mubr.bf16.gmra.mrb[0].mxu0 %v501
        %v587 = vpop.f32.mrb[0].mxu0
        %v588 = vadd.f32 0.0, %v587
        %v589 = vpop.f32.mrb[0].mxu0
        %v590 = vpop.f32.mrb[0].mxu0
        %v591 = vadd.f32 0.0, %v590
        %v592 = vpop.f32.mrb[0].mxu0
        %593 = vmatprep.mubr.bf16.mxu0 0
        %594 = vmatmul.mubr.bf16.gmra.mrb[0].mxu0 %v504
        %v595 = vpop.f32.mrb[0].mxu0
        %v596 = vadd.f32 0.0, %v595
        %v597 = vpop.f32.mrb[0].mxu0
        %v598 = vpop.f32.mrb[0].mxu0
        %v599 = vadd.f32 0.0, %v598
        %v600 = vpop.f32.mrb[0].mxu0
        %601 = vmatprep.mubr.bf16.mxu0 0
        %602 = vmatmul.mubr.bf16.gmra.mrb[0].mxu0 %v507
        %v603 = vpop.f32.mrb[0].mxu0
        %v604 = vadd.f32 0.0, %v603
        %v605 = vpop.f32.mrb[0].mxu0
        %v606 = vpop.f32.mrb[0].mxu0
        %v607 = vadd.f32 0.0, %v606
        %v608 = vpop.f32.mrb[0].mxu0
        %609 = vmatprep.mubr.bf16.mxu0 0
        %610 = vmatmul.mubr.bf16.gmra.mrb[0].mxu0 %v510
        %v611 = vpop.f32.mrb[0].mxu0
        %v612 = vadd.f32 0.0, %v611
        %v613 = vpop.f32.mrb[0].mxu0
        %v614 = vpop.f32.mrb[0].mxu0
        %v615 = vadd.f32 0.0, %v614
        %v616 = vpop.f32.mrb[0].mxu0
        %617 = vmatprep.mubr.bf16.mxu0 0
        %618 = vmatmul.mubr.bf16.gmra.mrb[0].mxu0 %v513
        %v619 = vpop.f32.mrb[0].mxu0
        %v620 = vadd.f32 0.0, %v619
        %v621 = vpop.f32.mrb[0].mxu0
        %v622 = vpop.f32.mrb[0].mxu0
        %v623 = vadd.f32 0.0, %v622
        %v624 = vpop.f32.mrb[0].mxu0
        %625 = vmatprep.mubr.bf16.mxu0 0
        %626 = vmatmul.mubr.bf16.gmra.mrb[0].mxu0 %v516
        %v627 = vpop.f32.mrb[0].mxu0
        %v628 = vadd.f32 0.0, %v627
        %v629 = vpop.f32.mrb[0].mxu0
        %v630 = vpop.f32.mrb[0].mxu0
        %v631 = vadd.f32 0.0, %v630
        %v632 = vpop.f32.mrb[0].mxu0
        %633 = vmatprep.mubr.bf16.mxu0 0
        %634 = vmatmul.mubr.bf16.gmra.mrb[0].mxu0 %v519
        %v635 = vpop.f32.mrb[0].mxu0
        %v636 = vadd.f32 0.0, %v635
        %v637 = vpop.f32.mrb[0].mxu0
        %v638 = vpop.f32.mrb[0].mxu0
        %v639 = vadd.f32 0.0, %v638
        %v640 = vpop.f32.mrb[0].mxu0
        %641 = vmatprep.mubr.bf16.mxu0 0
        %642 = vmatmul.mubr.bf16.gmra.mrb[0].mxu0 %v522
        %v643 = vpop.f32.mrb[0].mxu0
        %v644 = vadd.f32 0.0, %v643
        %v645 = vpop.f32.mrb[0].mxu0
        %v646 = vpop.f32.mrb[0].mxu0
        %v647 = vadd.f32 0.0, %v646
        %v648 = vpop.f32.mrb[0].mxu0
        %649 = vmatprep.mubr.bf16.mxu0 0
        %650 = vmatmul.mubr.bf16.gmra.mrb[0].mxu0 %v525
        %v651 = vpop.f32.mrb[0].mxu0
        %v652 = vadd.f32 0.0, %v651
        %v653 = vpop.f32.mrb[0].mxu0
        %v654 = vpop.f32.mrb[0].mxu0
        %v655 = vadd.f32 0.0, %v654
        %v656 = vpop.f32.mrb[0].mxu0
        %657 = vmatprep.mubr.bf16.mxu0 0
        %658 = vmatmul.mubr.bf16.gmra.mrb[0].mxu0 %v528
        %v659 = vpop.f32.mrb[0].mxu0
        %v660 = vadd.f32 0.0, %v659
        %v661 = vpop.f32.mrb[0].mxu0
        %v662 = vpop.f32.mrb[0].mxu0
        %v663 = vadd.f32 0.0, %v662
        %v664 = vpop.f32.mrb[0].mxu0
        %665 = vmatprep.mubr.bf16.mxu0 0
        %666 = vmatmul.mubr.bf16.gmra.mrb[0].mxu0 %v531
        %v667 = vpop.f32.mrb[0].mxu0
        %v668 = vadd.f32 0.0, %v667
        %v669 = vpop.f32.mrb[0].mxu0
        %v670 = vpop.f32.mrb[0].mxu0
        %v671 = vadd.f32 0.0, %v670
        %v672 = vpop.f32.mrb[0].mxu0
        %673 = vmatprep.mubr.bf16.mxu0 0
        %674 = vmatmul.mubr.bf16.gmra.mrb[0].mxu0 %v534
        %v675 = vpop.f32.mrb[0].mxu0
        %v676 = vadd.f32 0.0, %v675
        %v677 = vpop.f32.mrb[0].mxu0
        %v678 = vpop.f32.mrb[0].mxu0
        %v679 = vadd.f32 0.0, %v678
        %v680 = vpop.f32.mrb[0].mxu0
        %681 = vmatprep.mubr.bf16.mxu0 0
        %682 = vmatmul.mubr.bf16.gmra.mrb[0].mxu0 %v537
        %v683 = vpop.f32.mrb[0].mxu0
        %v684 = vadd.f32 0.0, %v683
        %v685 = vpop.f32.mrb[0].mxu0
        %v686 = vpop.f32.mrb[0].mxu0
        %v687 = vadd.f32 0.0, %v686
        %v688 = vpop.f32.mrb[0].mxu0
        %689 = vmatprep.mubr.bf16.mxu0 0
        %690 = vmatmul.mubr.bf16.gmra.mrb[0].mxu0 %v540
        %v691 = vpop.f32.mrb[0].mxu0
        %v692 = vadd.f32 0.0, %v691
        %v693 = vpop.f32.mrb[0].mxu0
        %v694 = vpop.f32.mrb[0].mxu0
        %v695 = vadd.f32 0.0, %v694
        %v696 = vpop.f32.mrb[0].mxu0
        %697 = vmatprep.mubr.bf16.mxu0 0
        %698 = vmatmul.mubr.bf16.gmra.mrb[0].mxu0 %v543
        %v699 = vpop.f32.mrb[0].mxu0
        %v700 = vadd.f32 0.0, %v699
        %v701 = vpop.f32.mrb[0].mxu0
        %v702 = vpop.f32.mrb[0].mxu0
        %v703 = vadd.f32 0.0, %v702
        %v704 = vpop.f32.mrb[0].mxu0
        %705 = vdwg.mxu0
        %v706 = vld [vmem:[%s2] sm:$0x1]
        %v708 = vlaneseq
        %v709 = vshrl.u32 %v708, 7
        %v710 = vsub.s32 0, %v709
        %v711 = vrot.slane %v706, %v710
        %v713 = vmul.f32 %v580, %v711
        %v714 = vmul.f32 %v583, %v711
        %v715 = vmul.f32 %v588, %v711
        %v716 = vmul.f32 %v591, %v711
        %v717 = vmul.f32 %v596, %v711
        %v718 = vmul.f32 %v599, %v711
        %v719 = vmul.f32 %v604, %v711
        %v720 = vmul.f32 %v607, %v711
        %v721 = vmul.f32 %v612, %v711
        %v722 = vmul.f32 %v615, %v711
        %v723 = vmul.f32 %v620, %v711
        %v724 = vmul.f32 %v623, %v711
        %v725 = vmul.f32 %v628, %v711
        %v726 = vmul.f32 %v631, %v711
        %v727 = vmul.f32 %v636, %v711
        %v728 = vmul.f32 %v639, %v711
        %v729 = vmul.f32 %v644, %v711
        %v730 = vmul.f32 %v647, %v711
        %v731 = vmul.f32 %v652, %v711
        %v732 = vmul.f32 %v655, %v711
        %v733 = vmul.f32 %v660, %v711
        %v734 = vmul.f32 %v663, %v711
        %v735 = vmul.f32 %v668, %v711
        %v736 = vmul.f32 %v671, %v711
        %v737 = vmul.f32 %v676, %v711
        %v738 = vmul.f32 %v679, %v711
        %v739 = vmul.f32 %v684, %v711
        %v740 = vmul.f32 %v687, %v711
        %v741 = vmul.f32 %v692, %v711
        %v742 = vmul.f32 %v695, %v711
        %v743 = vmul.f32 %v700, %v711
        %v744 = vmul.f32 %v703, %v711
        %v745 = vld [vmem:[%s3] sm:$0x1]
        %v747 = vlaneseq
        %v748 = vshrl.u32 %v747, 7
        %v749 = vsub.s32 0, %v748
        %v750 = vrot.slane %v745, %v749
        %v752 = vadd.f32 %v713, %v750
        %v753 = vadd.f32 %v714, %v750
        %v754 = vadd.f32 %v715, %v750
        %v755 = vadd.f32 %v716, %v750
        %v756 = vadd.f32 %v717, %v750
        %v757 = vadd.f32 %v718, %v750
        %v758 = vadd.f32 %v719, %v750
        %v759 = vadd.f32 %v720, %v750
        %v760 = vadd.f32 %v721, %v750
        %v761 = vadd.f32 %v722, %v750
        %v762 = vadd.f32 %v723, %v750
        %v763 = vadd.f32 %v724, %v750
        %v764 = vadd.f32 %v725, %v750
        %v765 = vadd.f32 %v726, %v750
        %v766 = vadd.f32 %v727, %v750
        %v767 = vadd.f32 %v728, %v750
        %v768 = vadd.f32 %v729, %v750
        %v769 = vadd.f32 %v730, %v750
        %v770 = vadd.f32 %v731, %v750
        %v771 = vadd.f32 %v732, %v750
        %v772 = vadd.f32 %v733, %v750
        %v773 = vadd.f32 %v734, %v750
        %v774 = vadd.f32 %v735, %v750
        %v775 = vadd.f32 %v736, %v750
        %v776 = vadd.f32 %v737, %v750
        %v777 = vadd.f32 %v738, %v750
        %v778 = vadd.f32 %v739, %v750
        %v779 = vadd.f32 %v740, %v750
        %v780 = vadd.f32 %v741, %v750
        %v781 = vadd.f32 %v742, %v750
        %v782 = vadd.f32 %v743, %v750
        %v783 = vadd.f32 %v744, %v750
        %v784 = vmax.f32 %v752, 0.0
        %v785 = vmax.f32 %v753, 0.0
        %v786 = vmax.f32 %v754, 0.0
        %v787 = vmax.f32 %v755, 0.0
        %v788 = vmax.f32 %v756, 0.0
        %v789 = vmax.f32 %v757, 0.0
        %v790 = vmax.f32 %v758, 0.0
        %v791 = vmax.f32 %v759, 0.0
        %v792 = vmax.f32 %v760, 0.0
        %v793 = vmax.f32 %v761, 0.0
        %v794 = vmax.f32 %v762, 0.0
        %v795 = vmax.f32 %v763, 0.0
        %v796 = vmax.f32 %v764, 0.0
        %v797 = vmax.f32 %v765, 0.0
        %v798 = vmax.f32 %v766, 0.0
        %v799 = vmax.f32 %v767, 0.0
        %v800 = vmax.f32 %v768, 0.0
        %v801 = vmax.f32 %v769, 0.0
        %v802 = vmax.f32 %v770, 0.0
        %v803 = vmax.f32 %v771, 0.0
        %v804 = vmax.f32 %v772, 0.0
        %v805 = vmax.f32 %v773, 0.0
        %v806 = vmax.f32 %v774, 0.0
        %v807 = vmax.f32 %v775, 0.0
        %v808 = vmax.f32 %v776, 0.0
        %v809 = vmax.f32 %v777, 0.0
        %v810 = vmax.f32 %v778, 0.0
        %v811 = vmax.f32 %v779, 0.0
        %v812 = vmax.f32 %v780, 0.0
        %v813 = vmax.f32 %v781, 0.0
        %v814 = vmax.f32 %v782, 0.0
        %v815 = vmax.f32 %v783, 0.0
        %816 = vst [vmem:[#allocation2] sm:$0xff] 0.0
        %817 = vst [vmem:[#allocation2 + $0x8] sm:$0xff] 0.0
        %818 = vst [vmem:[#allocation2 + $0x10] sm:$0x3] 0.0
        %819 = vst [vmem:[#allocation2 + $0x18] sm:$0xff] 0.0
        %820 = vst [vmem:[#allocation2 + $0x20] sm:$0xff] 0.0
        %821 = vst [vmem:[#allocation2 + $0x28] sm:$0x3] 0.0
        %822 = vst [vmem:[#allocation2 + $0x30] sm:$0xff] 0.0
        %823 = vst [vmem:[#allocation2 + $0x38] sm:$0xff] 0.0
        %824 = vst [vmem:[#allocation2 + $0x40] sm:$0x3] 0.0
        %825 = vst [vmem:[#allocation2 + $0x48] sm:$0xff] 0.0
        %826 = vst [vmem:[#allocation2 + $0x50] sm:$0xff] 0.0
        %827 = vst [vmem:[#allocation2 + $0x58] sm:$0x3] 0.0
        %828 = vst [vmem:[#allocation2 + $0x60] sm:$0xff] 0.0
        %829 = vst [vmem:[#allocation2 + $0x68] sm:$0xff] 0.0
        %830 = vst [vmem:[#allocation2 + $0x70] sm:$0x3] 0.0
        %831 = vst [vmem:[#allocation2 + $0x78] sm:$0xff] 0.0
        %832 = vst [vmem:[#allocation2 + $0x80] sm:$0xff] 0.0
        %833 = vst [vmem:[#allocation2 + $0x88] sm:$0x3] 0.0
        %834 = vst [vmem:[#allocation2 + $0x90] sm:$0xff] 0.0
        %835 = vst [vmem:[#allocation2 + $0x98] sm:$0xff] 0.0
        %836 = vst [vmem:[#allocation2 + $0xa0] sm:$0x3] 0.0
        %837 = vst [vmem:[#allocation2 + $0xa8] sm:$0xff] 0.0
        %838 = vst [vmem:[#allocation2 + $0xb0] sm:$0xff] 0.0
        %839 = vst [vmem:[#allocation2 + $0xb8] sm:$0x3] 0.0
        %840 = vst [vmem:[#allocation2 + $0xc0] sm:$0xff] 0.0
        %841 = vst [vmem:[#allocation2 + $0xc8] sm:$0xff] 0.0
        %842 = vst [vmem:[#allocation2 + $0xd0] sm:$0x3] 0.0
        %843 = vst [vmem:[#allocation2 + $0xd8] sm:$0xff] 0.0
        %844 = vst [vmem:[#allocation2 + $0xe0] sm:$0xff] 0.0
        %845 = vst [vmem:[#allocation2 + $0xe8] sm:$0x3] 0.0
        %846 = vst [vmem:[#allocation2 + $0xf0] sm:$0xff] 0.0
        %847 = vst [vmem:[#allocation2 + $0xf8] sm:$0xff] 0.0
        %848 = vst [vmem:[#allocation2 + $0x100] sm:$0x3] 0.0
        %849 = vst [vmem:[#allocation2 + $0x108] sm:$0xff] 0.0
        %850 = vst [vmem:[#allocation2 + $0x110] sm:$0xff] 0.0
        %851 = vst [vmem:[#allocation2 + $0x118] sm:$0x3] 0.0
        %852 = vst [vmem:[#allocation2 + $0x120] sm:$0xff] 0.0
        %853 = vst [vmem:[#allocation2 + $0x128] sm:$0xff] 0.0
        %854 = vst [vmem:[#allocation2 + $0x130] sm:$0x3] 0.0
        %855 = vst [vmem:[#allocation2 + $0x138] sm:$0xff] 0.0
        %856 = vst [vmem:[#allocation2 + $0x140] sm:$0xff] 0.0
        %857 = vst [vmem:[#allocation2 + $0x148] sm:$0x3] 0.0
        %858 = vst [vmem:[#allocation2 + $0x150] sm:$0xff] 0.0
        %859 = vst [vmem:[#allocation2 + $0x158] sm:$0xff] 0.0
        %860 = vst [vmem:[#allocation2 + $0x160] sm:$0x3] 0.0
        %861 = vst [vmem:[#allocation2 + $0x168] sm:$0xff] 0.0
        %862 = vst [vmem:[#allocation2 + $0x170] sm:$0xff] 0.0
        %863 = vst [vmem:[#allocation2 + $0x178] sm:$0x3] 0.0
        %864 = vst [vmem:[#allocation2 + $0x180] sm:$0xff] 0.0
        %865 = vst [vmem:[#allocation2 + $0x188] sm:$0xff] 0.0
        %866 = vst [vmem:[#allocation2 + $0x190] sm:$0x3] 0.0
        %867 = vst [vmem:[#allocation2 + $0x198] sm:$0xff] 0.0
        %868 = vst [vmem:[#allocation2 + $0x1a0] sm:$0xff] 0.0
        %869 = vst [vmem:[#allocation2 + $0x1a8] sm:$0x3] 0.0
        %s870 = scalar_lea.vmem [#allocation2], 24
        %871 = vst [vmem:[%s870 + $0x1] sm:$0xff] %v784
        %872 = vst [vmem:[%s870 + $0x9] sm:$0xff] %v785
        %873 = vst [vmem:[%s870 + $0x19] sm:$0xff] %v786
        %874 = vst [vmem:[%s870 + $0x21] sm:$0xff] %v787
        %875 = vst [vmem:[%s870 + $0x31] sm:$0xff] %v788
        %876 = vst [vmem:[%s870 + $0x39] sm:$0xff] %v789
        %877 = vst [vmem:[%s870 + $0x49] sm:$0xff] %v790
        %878 = vst [vmem:[%s870 + $0x51] sm:$0xff] %v791
        %879 = vst [vmem:[%s870 + $0x61] sm:$0xff] %v792
        %880 = vst [vmem:[%s870 + $0x69] sm:$0xff] %v793
        %881 = vst [vmem:[%s870 + $0x79] sm:$0xff] %v794
        %882 = vst [vmem:[%s870 + $0x81] sm:$0xff] %v795
        %883 = vst [vmem:[%s870 + $0x91] sm:$0xff] %v796
        %884 = vst [vmem:[%s870 + $0x99] sm:$0xff] %v797
        %885 = vst [vmem:[%s870 + $0xa9] sm:$0xff] %v798
        %886 = vst [vmem:[%s870 + $0xb1] sm:$0xff] %v799
        %887 = vst [vmem:[%s870 + $0xc1] sm:$0xff] %v800
        %888 = vst [vmem:[%s870 + $0xc9] sm:$0xff] %v801
        %889 = vst [vmem:[%s870 + $0xd9] sm:$0xff] %v802
        %890 = vst [vmem:[%s870 + $0xe1] sm:$0xff] %v803
        %891 = vst [vmem:[%s870 + $0xf1] sm:$0xff] %v804
        %892 = vst [vmem:[%s870 + $0xf9] sm:$0xff] %v805
        %893 = vst [vmem:[%s870 + $0x109] sm:$0xff] %v806
        %894 = vst [vmem:[%s870 + $0x111] sm:$0xff] %v807
        %895 = vst [vmem:[%s870 + $0x121] sm:$0xff] %v808
        %896 = vst [vmem:[%s870 + $0x129] sm:$0xff] %v809
        %897 = vst [vmem:[%s870 + $0x139] sm:$0xff] %v810
        %898 = vst [vmem:[%s870 + $0x141] sm:$0xff] %v811
        %899 = vst [vmem:[%s870 + $0x151] sm:$0xff] %v812
        %900 = vst [vmem:[%s870 + $0x159] sm:$0xff] %v813
        %901 = vst [vmem:[%s870 + $0x169] sm:$0xff] %v814
        %902 = vst [vmem:[%s870 + $0x171] sm:$0xff] %v815
        %v903 = vld [vmem:[#allocation2] sm:$0xff]
        %v904 = vld [vmem:[#allocation2 + $0x8] sm:$0xff]
        %v905 = vld [vmem:[#allocation2 + $0x18] sm:$0xff]
        %v906 = vld [vmem:[#allocation2 + $0x20] sm:$0xff]
        %v907 = vld [vmem:[#allocation2 + $0x30] sm:$0xff]
        %v908 = vld [vmem:[#allocation2 + $0x38] sm:$0xff]
        %v909 = vld [vmem:[#allocation2 + $0x48] sm:$0xff]
        %v910 = vld [vmem:[#allocation2 + $0x50] sm:$0xff]
        %v911 = vld [vmem:[#allocation2 + $0x60] sm:$0xff]
        %v912 = vld [vmem:[#allocation2 + $0x68] sm:$0xff]
        %v913 = vld [vmem:[#allocation2 + $0x78] sm:$0xff]
        %v914 = vld [vmem:[#allocation2 + $0x80] sm:$0xff]
        %v915 = vld [vmem:[#allocation2 + $0x90] sm:$0xff]
        %v916 = vld [vmem:[#allocation2 + $0x98] sm:$0xff]
        %v917 = vld [vmem:[#allocation2 + $0xa8] sm:$0xff]
        %v918 = vld [vmem:[#allocation2 + $0xb0] sm:$0xff]
        %v919 = vld [vmem:[#allocation2 + $0xc0] sm:$0xff]
        %v920 = vld [vmem:[#allocation2 + $0xc8] sm:$0xff]
        %v921 = vld [vmem:[#allocation2 + $0xd8] sm:$0xff]
        %v922 = vld [vmem:[#allocation2 + $0xe0] sm:$0xff]
        %v923 = vld [vmem:[#allocation2 + $0xf0] sm:$0xff]
        %v924 = vld [vmem:[#allocation2 + $0xf8] sm:$0xff]
        %v925 = vld [vmem:[#allocation2 + $0x108] sm:$0xff]
        %v926 = vld [vmem:[#allocation2 + $0x110] sm:$0xff]
        %v927 = vld [vmem:[#allocation2 + $0x120] sm:$0xff]
        %v928 = vld [vmem:[#allocation2 + $0x128] sm:$0xff]
        %v929 = vld [vmem:[#allocation2 + $0x138] sm:$0xff]
        %v930 = vld [vmem:[#allocation2 + $0x140] sm:$0xff]
        %v931 = vld [vmem:[#allocation2 + $0x150] sm:$0xff]
        %v932 = vld [vmem:[#allocation2 + $0x158] sm:$0xff]
        %v933 = vld [vmem:[#allocation2 + $0x168] sm:$0xff]
        %v934 = vld [vmem:[#allocation2 + $0x170] sm:$0xff]
        %v935 = vpack.c.bf16 %v904, %v903
        %v936 = vpack.c.bf16 %v906, %v905
        %v937 = vpack.c.bf16 %v908, %v907
        %v938 = vpack.c.bf16 %v910, %v909
        %v939 = vpack.c.bf16 %v912, %v911
        %v940 = vpack.c.bf16 %v914, %v913
        %v941 = vpack.c.bf16 %v916, %v915
        %v942 = vpack.c.bf16 %v918, %v917
        %v943 = vpack.c.bf16 %v920, %v919
        %v944 = vpack.c.bf16 %v922, %v921
        %v945 = vpack.c.bf16 %v924, %v923
        %v946 = vpack.c.bf16 %v926, %v925
        %v947 = vpack.c.bf16 %v928, %v927
        %v948 = vpack.c.bf16 %v930, %v929
        %v949 = vpack.c.bf16 %v932, %v931
        %v950 = vpack.c.bf16 %v934, %v933
        %v951 = vld [vmem:[#allocation3] sm:$0xf]
        %v952 = vld [vmem:[#allocation3 + $0x4] sm:$0xf]
        %v953 = vld [vmem:[#allocation3 + $0x8] sm:$0xf]
        %v954 = vld [vmem:[#allocation3 + $0xc] sm:$0xf]
        %v955 = vld [vmem:[#allocation3 + $0x10] sm:$0xf]
        %v956 = vld [vmem:[#allocation3 + $0x14] sm:$0xf]
        %v957 = vld [vmem:[#allocation3 + $0x18] sm:$0xf]
        %v958 = vld [vmem:[#allocation3 + $0x1c] sm:$0xf]
        %v959 = vld [vmem:[#allocation3 + $0x20] sm:$0xf]
        %v960 = vld [vmem:[#allocation3 + $0x24] sm:$0xf]
        %v961 = vld [vmem:[#allocation3 + $0x28] sm:$0xf]
        %v962 = vld [vmem:[#allocation3 + $0x2c] sm:$0xf]
        %v963 = vld [vmem:[#allocation3 + $0x30] sm:$0xf]
        %v964 = vld [vmem:[#allocation3 + $0x34] sm:$0xf]
        %v965 = vld [vmem:[#allocation3 + $0x38] sm:$0xf]
        %v966 = vld [vmem:[#allocation3 + $0x3c] sm:$0xf]
        %v967 = vld [vmem:[#allocation2 + $0x1] sm:$0xff]
        %v968 = vld [vmem:[#allocation2 + $0x9] sm:$0xff]
        %v969 = vld [vmem:[#allocation2 + $0x19] sm:$0xff]
        %v970 = vld [vmem:[#allocation2 + $0x21] sm:$0xff]
        %v971 = vld [vmem:[#allocation2 + $0x31] sm:$0xff]
        %v972 = vld [vmem:[#allocation2 + $0x39] sm:$0xff]
        %v973 = vld [vmem:[#allocation2 + $0x49] sm:$0xff]
        %v974 = vld [vmem:[#allocation2 + $0x51] sm:$0xff]
        %v975 = vld [vmem:[#allocation2 + $0x61] sm:$0xff]
        %v976 = vld [vmem:[#allocation2 + $0x69] sm:$0xff]
        %v977 = vld [vmem:[#allocation2 + $0x79] sm:$0xff]
        %v978 = vld [vmem:[#allocation2 + $0x81] sm:$0xff]
        %v979 = vld [vmem:[#allocation2 + $0x91] sm:$0xff]
        %v980 = vld [vmem:[#allocation2 + $0x99] sm:$0xff]
        %v981 = vld [vmem:[#allocation2 + $0xa9] sm:$0xff]
        %v982 = vld [vmem:[#allocation2 + $0xb1] sm:$0xff]
        %v983 = vld [vmem:[#allocation2 + $0xc1] sm:$0xff]
        %v984 = vld [vmem:[#allocation2 + $0xc9] sm:$0xff]
        %v985 = vld [vmem:[#allocation2 + $0xd9] sm:$0xff]
        %v986 = vld [vmem:[#allocation2 + $0xe1] sm:$0xff]
        %v987 = vld [vmem:[#allocation2 + $0xf1] sm:$0xff]
        %v988 = vld [vmem:[#allocation2 + $0xf9] sm:$0xff]
        %v989 = vld [vmem:[#allocation2 + $0x109] sm:$0xff]
        %v990 = vld [vmem:[#allocation2 + $0x111] sm:$0xff]
        %v991 = vld [vmem:[#allocation2 + $0x121] sm:$0xff]
        %v992 = vld [vmem:[#allocation2 + $0x129] sm:$0xff]
        %v993 = vld [vmem:[#allocation2 + $0x139] sm:$0xff]
        %v994 = vld [vmem:[#allocation2 + $0x141] sm:$0xff]
        %v995 = vld [vmem:[#allocation2 + $0x151] sm:$0xff]
        %v996 = vld [vmem:[#allocation2 + $0x159] sm:$0xff]
        %v997 = vld [vmem:[#allocation2 + $0x169] sm:$0xff]
        %v998 = vld [vmem:[#allocation2 + $0x171] sm:$0xff]
        %v999 = vpack.c.bf16 %v968, %v967
        %v1000 = vpack.c.bf16 %v970, %v969
        %v1001 = vpack.c.bf16 %v972, %v971
        %v1002 = vpack.c.bf16 %v974, %v973
        %v1003 = vpack.c.bf16 %v976, %v975
        %v1004 = vpack.c.bf16 %v978, %v977
        %v1005 = vpack.c.bf16 %v980, %v979
        %v1006 = vpack.c.bf16 %v982, %v981
        %v1007 = vpack.c.bf16 %v984, %v983
        %v1008 = vpack.c.bf16 %v986, %v985
        %v1009 = vpack.c.bf16 %v988, %v987
        %v1010 = vpack.c.bf16 %v990, %v989
        %v1011 = vpack.c.bf16 %v992, %v991
        %v1012 = vpack.c.bf16 %v994, %v993
        %v1013 = vpack.c.bf16 %v996, %v995
        %v1014 = vpack.c.bf16 %v998, %v997
        %s1015 = scalar_lea.vmem [#allocation3], 64
        %v1016 = vld [vmem:[%s1015] sm:$0xf]
        %v1017 = vld [vmem:[%s1015 + $0x4] sm:$0xf]
        %v1018 = vld [vmem:[%s1015 + $0x8] sm:$0xf]
        %v1019 = vld [vmem:[%s1015 + $0xc] sm:$0xf]
        %v1020 = vld [vmem:[%s1015 + $0x10] sm:$0xf]
        %v1021 = vld [vmem:[%s1015 + $0x14] sm:$0xf]
        %v1022 = vld [vmem:[%s1015 + $0x18] sm:$0xf]
        %v1023 = vld [vmem:[%s1015 + $0x1c] sm:$0xf]
        %v1024 = vld [vmem:[%s1015 + $0x20] sm:$0xf]
        %v1025 = vld [vmem:[%s1015 + $0x24] sm:$0xf]
        %v1026 = vld [vmem:[%s1015 + $0x28] sm:$0xf]
        %v1027 = vld [vmem:[%s1015 + $0x2c] sm:$0xf]
        %v1028 = vld [vmem:[%s1015 + $0x30] sm:$0xf]
        %v1029 = vld [vmem:[%s1015 + $0x34] sm:$0xf]
        %v1030 = vld [vmem:[%s1015 + $0x38] sm:$0xf]
        %v1031 = vld [vmem:[%s1015 + $0x3c] sm:$0xf]
        %v1048 = vunpack.c.l.b16 %v1016
        %v1049 = vunpack.c.l.b16 %v1017
        %v1050 = vunpack.c.l.b16 %v1018
        %v1051 = vunpack.c.l.b16 %v1019
        %v1052 = vunpack.c.l.b16 %v1020
        %v1053 = vunpack.c.l.b16 %v1021
        %v1054 = vunpack.c.l.b16 %v1022
        %v1055 = vunpack.c.l.b16 %v1023
        %v1056 = vunpack.c.l.b16 %v1024
        %v1057 = vunpack.c.l.b16 %v1025
        %v1058 = vunpack.c.l.b16 %v1026
        %v1059 = vunpack.c.l.b16 %v1027
        %v1060 = vunpack.c.l.b16 %v1028
        %v1061 = vunpack.c.l.b16 %v1029
        %v1062 = vunpack.c.l.b16 %v1030
        %v1063 = vunpack.c.l.b16 %v1031
        %v1064 = vpack.c.b16 %v1049, %v1048
        %v1065 = vpack.c.b16 %v1051, %v1050
        %v1066 = vpack.c.b16 %v1053, %v1052
        %v1067 = vpack.c.b16 %v1055, %v1054
        %v1068 = vpack.c.b16 %v1057, %v1056
        %v1069 = vpack.c.b16 %v1059, %v1058
        %v1070 = vpack.c.b16 %v1061, %v1060
        %v1071 = vpack.c.b16 %v1063, %v1062
        %1080 = vmatprep.subr.bf16.mxu0 0
        %1081 = vmatpush1.bf16.msra.mxu0 %v1064
        %1082 = vmatprep.subr.bf16.mxu0 0
        %1083 = vmatpush1.bf16.msra.mxu0 %v1065
        %1084 = vmatprep.subr.bf16.mxu0 0
        %1085 = vmatpush1.bf16.msra.mxu0 %v1066
        %1086 = vmatprep.subr.bf16.mxu0 0
        %1087 = vmatpush1.bf16.msra.mxu0 %v1067
        %1088 = vmatprep.subr.bf16.mxu0 0
        %1089 = vmatpush1.bf16.msra.mxu0 %v1068
        %1090 = vmatprep.subr.bf16.mxu0 0
        %1091 = vmatpush1.bf16.msra.mxu0 %v1069
        %1092 = vmatprep.subr.bf16.mxu0 0
        %1093 = vmatpush1.bf16.msra.mxu0 %v1070
        %1094 = vmatprep.subr.bf16.mxu0 0
        %1095 = vmatpush1.bf16.msra.mxu0 %v1071
        %1096 = vmatprep.subr.bf16.mxu0 0
        %1097 = vmatpush1.bf16.msra.mxu0 0
        %1098 = vmatprep.subr.bf16.mxu0 0
        %1099 = vmatpush1.bf16.msra.mxu0 0
        %1100 = vmatprep.subr.bf16.mxu0 0
        %1101 = vmatpush1.bf16.msra.mxu0 0
        %1102 = vmatprep.subr.bf16.mxu0 0
        %1103 = vmatpush1.bf16.msra.mxu0 0
        %1104 = vmatprep.subr.bf16.mxu0 0
        %1105 = vmatpush1.bf16.msra.mxu0 0
        %1106 = vmatprep.subr.bf16.mxu0 0
        %1107 = vmatpush1.bf16.msra.mxu0 0
        %1108 = vmatprep.subr.bf16.mxu0 0
        %1109 = vmatpush1.bf16.msra.mxu0 0
        %1110 = vmatprep.subr.bf16.mxu0 0
        %1111 = vmatpush1.bf16.msra.mxu0 0
        %1112 = vmatprep.mubr.bf16.mxu0 0
        %1113 = vmatmul.mubr.bf16.gmra.mrb[0].mxu0 %v999
        %v1114 = vpop.f32.mrb[0].mxu0
        %v1115 = vadd.f32 0.0, %v1114
        %v1116 = vpop.f32.mrb[0].mxu0
        %v1117 = vpop.f32.mrb[0].mxu0
        %v1118 = vadd.f32 0.0, %v1117
        %v1119 = vpop.f32.mrb[0].mxu0
        %1120 = vmatprep.mubr.bf16.mxu0 0
        %1121 = vmatmul.mubr.bf16.gmra.mrb[0].mxu0 %v1000
        %v1122 = vpop.f32.mrb[0].mxu0
        %v1123 = vadd.f32 0.0, %v1122
        %v1124 = vpop.f32.mrb[0].mxu0
        %v1125 = vpop.f32.mrb[0].mxu0
        %v1126 = vadd.f32 0.0, %v1125
        %v1127 = vpop.f32.mrb[0].mxu0
        %1128 = vmatprep.mubr.bf16.mxu0 0
        %1129 = vmatmul.mubr.bf16.gmra.mrb[0].mxu0 %v1001
        %v1130 = vpop.f32.mrb[0].mxu0
        %v1131 = vadd.f32 0.0, %v1130
        %v1132 = vpop.f32.mrb[0].mxu0
        %v1133 = vpop.f32.mrb[0].mxu0
        %v1134 = vadd.f32 0.0, %v1133
        %v1135 = vpop.f32.mrb[0].mxu0
        %1136 = vmatprep.mubr.bf16.mxu0 0
        %1137 = vmatmul.mubr.bf16.gmra.mrb[0].mxu0 %v1002
        %v1138 = vpop.f32.mrb[0].mxu0
        %v1139 = vadd.f32 0.0, %v1138
        %v1140 = vpop.f32.mrb[0].mxu0
        %v1141 = vpop.f32.mrb[0].mxu0
        %v1142 = vadd.f32 0.0, %v1141
        %v1143 = vpop.f32.mrb[0].mxu0
        %1144 = vmatprep.mubr.bf16.mxu0 0
        %1145 = vmatmul.mubr.bf16.gmra.mrb[0].mxu0 %v1003
        %v1146 = vpop.f32.mrb[0].mxu0
        %v1147 = vadd.f32 0.0, %v1146
        %v1148 = vpop.f32.mrb[0].mxu0
        %v1149 = vpop.f32.mrb[0].mxu0
        %v1150 = vadd.f32 0.0, %v1149
        %v1151 = vpop.f32.mrb[0].mxu0
        %1152 = vmatprep.mubr.bf16.mxu0 0
        %1153 = vmatmul.mubr.bf16.gmra.mrb[0].mxu0 %v1004
        %v1154 = vpop.f32.mrb[0].mxu0
        %v1155 = vadd.f32 0.0, %v1154
        %v1156 = vpop.f32.mrb[0].mxu0
        %v1157 = vpop.f32.mrb[0].mxu0
        %v1158 = vadd.f32 0.0, %v1157
        %v1159 = vpop.f32.mrb[0].mxu0
        %1160 = vmatprep.mubr.bf16.mxu0 0
        %1161 = vmatmul.mubr.bf16.gmra.mrb[0].mxu0 %v1005
        %v1162 = vpop.f32.mrb[0].mxu0
        %v1163 = vadd.f32 0.0, %v1162
        %v1164 = vpop.f32.mrb[0].mxu0
        %v1165 = vpop.f32.mrb[0].mxu0
        %v1166 = vadd.f32 0.0, %v1165
        %v1167 = vpop.f32.mrb[0].mxu0
        %1168 = vmatprep.mubr.bf16.mxu0 0
        %1169 = vmatmul.mubr.bf16.gmra.mrb[0].mxu0 %v1006
        %v1170 = vpop.f32.mrb[0].mxu0
        %v1171 = vadd.f32 0.0, %v1170
        %v1172 = vpop.f32.mrb[0].mxu0
        %v1173 = vpop.f32.mrb[0].mxu0
        %v1174 = vadd.f32 0.0, %v1173
        %v1175 = vpop.f32.mrb[0].mxu0
        %1176 = vmatprep.mubr.bf16.mxu0 0
        %1177 = vmatmul.mubr.bf16.gmra.mrb[0].mxu0 %v1007
        %v1178 = vpop.f32.mrb[0].mxu0
        %v1179 = vadd.f32 0.0, %v1178
        %v1180 = vpop.f32.mrb[0].mxu0
        %v1181 = vpop.f32.mrb[0].mxu0
        %v1182 = vadd.f32 0.0, %v1181
        %v1183 = vpop.f32.mrb[0].mxu0
        %1184 = vmatprep.mubr.bf16.mxu0 0
        %1185 = vmatmul.mubr.bf16.gmra.mrb[0].mxu0 %v1008
        %v1186 = vpop.f32.mrb[0].mxu0
        %v1187 = vadd.f32 0.0, %v1186
        %v1188 = vpop.f32.mrb[0].mxu0
        %v1189 = vpop.f32.mrb[0].mxu0
        %v1190 = vadd.f32 0.0, %v1189
        %v1191 = vpop.f32.mrb[0].mxu0
        %1192 = vmatprep.mubr.bf16.mxu0 0
        %1193 = vmatmul.mubr.bf16.gmra.mrb[0].mxu0 %v1009
        %v1194 = vpop.f32.mrb[0].mxu0
        %v1195 = vadd.f32 0.0, %v1194
        %v1196 = vpop.f32.mrb[0].mxu0
        %v1197 = vpop.f32.mrb[0].mxu0
        %v1198 = vadd.f32 0.0, %v1197
        %v1199 = vpop.f32.mrb[0].mxu0
        %1200 = vmatprep.mubr.bf16.mxu0 0
        %1201 = vmatmul.mubr.bf16.gmra.mrb[0].mxu0 %v1010
        %v1202 = vpop.f32.mrb[0].mxu0
        %v1203 = vadd.f32 0.0, %v1202
        %v1204 = vpop.f32.mrb[0].mxu0
        %v1205 = vpop.f32.mrb[0].mxu0
        %v1206 = vadd.f32 0.0, %v1205
        %v1207 = vpop.f32.mrb[0].mxu0
        %1208 = vmatprep.mubr.bf16.mxu0 0
        %1209 = vmatmul.mubr.bf16.gmra.mrb[0].mxu0 %v1011
        %v1210 = vpop.f32.mrb[0].mxu0
        %v1211 = vadd.f32 0.0, %v1210
        %v1212 = vpop.f32.mrb[0].mxu0
        %v1213 = vpop.f32.mrb[0].mxu0
        %v1214 = vadd.f32 0.0, %v1213
        %v1215 = vpop.f32.mrb[0].mxu0
        %1216 = vmatprep.mubr.bf16.mxu0 0
        %1217 = vmatmul.mubr.bf16.gmra.mrb[0].mxu0 %v1012
        %v1218 = vpop.f32.mrb[0].mxu0
        %v1219 = vadd.f32 0.0, %v1218
        %v1220 = vpop.f32.mrb[0].mxu0
        %v1221 = vpop.f32.mrb[0].mxu0
        %v1222 = vadd.f32 0.0, %v1221
        %v1223 = vpop.f32.mrb[0].mxu0
        %1224 = vmatprep.mubr.bf16.mxu0 0
        %1225 = vmatmul.mubr.bf16.gmra.mrb[0].mxu0 %v1013
        %v1226 = vpop.f32.mrb[0].mxu0
        %v1227 = vadd.f32 0.0, %v1226
        %v1228 = vpop.f32.mrb[0].mxu0
        %v1229 = vpop.f32.mrb[0].mxu0
        %v1230 = vadd.f32 0.0, %v1229
        %v1231 = vpop.f32.mrb[0].mxu0
        %1232 = vmatprep.mubr.bf16.mxu0 0
        %1233 = vmatmul.mubr.bf16.gmra.mrb[0].mxu0 %v1014
        %v1234 = vpop.f32.mrb[0].mxu0
        %v1235 = vadd.f32 0.0, %v1234
        %v1236 = vpop.f32.mrb[0].mxu0
        %v1237 = vpop.f32.mrb[0].mxu0
        %v1238 = vadd.f32 0.0, %v1237
        %v1239 = vpop.f32.mrb[0].mxu0
        %1240 = vdwg.mxu0
        %v1257 = vunpack.c.l.b16 %v951
        %v1258 = vunpack.c.l.b16 %v952
        %v1259 = vunpack.c.l.b16 %v953
        %v1260 = vunpack.c.l.b16 %v954
        %v1261 = vunpack.c.l.b16 %v955
        %v1262 = vunpack.c.l.b16 %v956
        %v1263 = vunpack.c.l.b16 %v957
        %v1264 = vunpack.c.l.b16 %v958
        %v1265 = vunpack.c.l.b16 %v959
        %v1266 = vunpack.c.l.b16 %v960
        %v1267 = vunpack.c.l.b16 %v961
        %v1268 = vunpack.c.l.b16 %v962
        %v1269 = vunpack.c.l.b16 %v963
        %v1270 = vunpack.c.l.b16 %v964
        %v1271 = vunpack.c.l.b16 %v965
        %v1272 = vunpack.c.l.b16 %v966
        %v1273 = vpack.c.b16 %v1258, %v1257
        %v1274 = vpack.c.b16 %v1260, %v1259
        %v1275 = vpack.c.b16 %v1262, %v1261
        %v1276 = vpack.c.b16 %v1264, %v1263
        %v1277 = vpack.c.b16 %v1266, %v1265
        %v1278 = vpack.c.b16 %v1268, %v1267
        %v1279 = vpack.c.b16 %v1270, %v1269
        %v1280 = vpack.c.b16 %v1272, %v1271
        %1289 = vmatprep.subr.bf16.mxu0 0
        %1290 = vmatpush1.bf16.msra.mxu0 %v1273
        %1291 = vmatprep.subr.bf16.mxu0 0
        %1292 = vmatpush1.bf16.msra.mxu0 %v1274
        %1293 = vmatprep.subr.bf16.mxu0 0
        %1294 = vmatpush1.bf16.msra.mxu0 %v1275
        %1295 = vmatprep.subr.bf16.mxu0 0
        %1296 = vmatpush1.bf16.msra.mxu0 %v1276
        %1297 = vmatprep.subr.bf16.mxu0 0
        %1298 = vmatpush1.bf16.msra.mxu0 %v1277
        %1299 = vmatprep.subr.bf16.mxu0 0
        %1300 = vmatpush1.bf16.msra.mxu0 %v1278
        %1301 = vmatprep.subr.bf16.mxu0 0
        %1302 = vmatpush1.bf16.msra.mxu0 %v1279
        %1303 = vmatprep.subr.bf16.mxu0 0
        %1304 = vmatpush1.bf16.msra.mxu0 %v1280
        %1305 = vmatprep.subr.bf16.mxu0 0
        %1306 = vmatpush1.bf16.msra.mxu0 0
        %1307 = vmatprep.subr.bf16.mxu0 0
        %1308 = vmatpush1.bf16.msra.mxu0 0
        %1309 = vmatprep.subr.bf16.mxu0 0
        %1310 = vmatpush1.bf16.msra.mxu0 0
        %1311 = vmatprep.subr.bf16.mxu0 0
        %1312 = vmatpush1.bf16.msra.mxu0 0
        %1313 = vmatprep.subr.bf16.mxu0 0
        %1314 = vmatpush1.bf16.msra.mxu0 0
        %1315 = vmatprep.subr.bf16.mxu0 0
        %1316 = vmatpush1.bf16.msra.mxu0 0
        %1317 = vmatprep.subr.bf16.mxu0 0
        %1318 = vmatpush1.bf16.msra.mxu0 0
        %1319 = vmatprep.subr.bf16.mxu0 0
        %1320 = vmatpush1.bf16.msra.mxu0 0
        %1321 = vmatprep.mubr.bf16.mxu0 0
        %1322 = vmatmul.mubr.bf16.gmra.mrb[0].mxu0 %v935
        %v1323 = vpop.f32.mrb[0].mxu0
        %v1324 = vadd.f32 %v1115, %v1323
        %v1325 = vpop.f32.mrb[0].mxu0
        %v1326 = vpop.f32.mrb[0].mxu0
        %v1327 = vadd.f32 %v1118, %v1326
        %v1328 = vpop.f32.mrb[0].mxu0
        %1329 = vmatprep.mubr.bf16.mxu0 0
        %1330 = vmatmul.mubr.bf16.gmra.mrb[0].mxu0 %v936
        %v1331 = vpop.f32.mrb[0].mxu0
        %v1332 = vadd.f32 %v1123, %v1331
        %v1333 = vpop.f32.mrb[0].mxu0
        %v1334 = vpop.f32.mrb[0].mxu0
        %v1335 = vadd.f32 %v1126, %v1334
        %v1336 = vpop.f32.mrb[0].mxu0
        %1337 = vmatprep.mubr.bf16.mxu0 0
        %1338 = vmatmul.mubr.bf16.gmra.mrb[0].mxu0 %v937
        %v1339 = vpop.f32.mrb[0].mxu0
        %v1340 = vadd.f32 %v1131, %v1339
        %v1341 = vpop.f32.mrb[0].mxu0
        %v1342 = vpop.f32.mrb[0].mxu0
        %v1343 = vadd.f32 %v1134, %v1342
        %v1344 = vpop.f32.mrb[0].mxu0
        %1345 = vmatprep.mubr.bf16.mxu0 0
        %1346 = vmatmul.mubr.bf16.gmra.mrb[0].mxu0 %v938
        %v1347 = vpop.f32.mrb[0].mxu0
        %v1348 = vadd.f32 %v1139, %v1347
        %v1349 = vpop.f32.mrb[0].mxu0
        %v1350 = vpop.f32.mrb[0].mxu0
        %v1351 = vadd.f32 %v1142, %v1350
        %v1352 = vpop.f32.mrb[0].mxu0
        %1353 = vmatprep.mubr.bf16.mxu0 0
        %1354 = vmatmul.mubr.bf16.gmra.mrb[0].mxu0 %v939
        %v1355 = vpop.f32.mrb[0].mxu0
        %v1356 = vadd.f32 %v1147, %v1355
        %v1357 = vpop.f32.mrb[0].mxu0
        %v1358 = vpop.f32.mrb[0].mxu0
        %v1359 = vadd.f32 %v1150, %v1358
        %v1360 = vpop.f32.mrb[0].mxu0
        %1361 = vmatprep.mubr.bf16.mxu0 0
        %1362 = vmatmul.mubr.bf16.gmra.mrb[0].mxu0 %v940
        %v1363 = vpop.f32.mrb[0].mxu0
        %v1364 = vadd.f32 %v1155, %v1363
        %v1365 = vpop.f32.mrb[0].mxu0
        %v1366 = vpop.f32.mrb[0].mxu0
        %v1367 = vadd.f32 %v1158, %v1366
        %v1368 = vpop.f32.mrb[0].mxu0
        %1369 = vmatprep.mubr.bf16.mxu0 0
        %1370 = vmatmul.mubr.bf16.gmra.mrb[0].mxu0 %v941
        %v1371 = vpop.f32.mrb[0].mxu0
        %v1372 = vadd.f32 %v1163, %v1371
        %v1373 = vpop.f32.mrb[0].mxu0
        %v1374 = vpop.f32.mrb[0].mxu0
        %v1375 = vadd.f32 %v1166, %v1374
        %v1376 = vpop.f32.mrb[0].mxu0
        %1377 = vmatprep.mubr.bf16.mxu0 0
        %1378 = vmatmul.mubr.bf16.gmra.mrb[0].mxu0 %v942
        %v1379 = vpop.f32.mrb[0].mxu0
        %v1380 = vadd.f32 %v1171, %v1379
        %v1381 = vpop.f32.mrb[0].mxu0
        %v1382 = vpop.f32.mrb[0].mxu0
        %v1383 = vadd.f32 %v1174, %v1382
        %v1384 = vpop.f32.mrb[0].mxu0
        %1385 = vmatprep.mubr.bf16.mxu0 0
        %1386 = vmatmul.mubr.bf16.gmra.mrb[0].mxu0 %v943
        %v1387 = vpop.f32.mrb[0].mxu0
        %v1388 = vadd.f32 %v1179, %v1387
        %v1389 = vpop.f32.mrb[0].mxu0
        %v1390 = vpop.f32.mrb[0].mxu0
        %v1391 = vadd.f32 %v1182, %v1390
        %v1392 = vpop.f32.mrb[0].mxu0
        %1393 = vmatprep.mubr.bf16.mxu0 0
        %1394 = vmatmul.mubr.bf16.gmra.mrb[0].mxu0 %v944
        %v1395 = vpop.f32.mrb[0].mxu0
        %v1396 = vadd.f32 %v1187, %v1395
        %v1397 = vpop.f32.mrb[0].mxu0
        %v1398 = vpop.f32.mrb[0].mxu0
        %v1399 = vadd.f32 %v1190, %v1398
        %v1400 = vpop.f32.mrb[0].mxu0
        %1401 = vmatprep.mubr.bf16.mxu0 0
        %1402 = vmatmul.mubr.bf16.gmra.mrb[0].mxu0 %v945
        %v1403 = vpop.f32.mrb[0].mxu0
        %v1404 = vadd.f32 %v1195, %v1403
        %v1405 = vpop.f32.mrb[0].mxu0
        %v1406 = vpop.f32.mrb[0].mxu0
        %v1407 = vadd.f32 %v1198, %v1406
        %v1408 = vpop.f32.mrb[0].mxu0
        %1409 = vmatprep.mubr.bf16.mxu0 0
        %1410 = vmatmul.mubr.bf16.gmra.mrb[0].mxu0 %v946
        %v1411 = vpop.f32.mrb[0].mxu0
        %v1412 = vadd.f32 %v1203, %v1411
        %v1413 = vpop.f32.mrb[0].mxu0
        %v1414 = vpop.f32.mrb[0].mxu0
        %v1415 = vadd.f32 %v1206, %v1414
        %v1416 = vpop.f32.mrb[0].mxu0
        %1417 = vmatprep.mubr.bf16.mxu0 0
        %1418 = vmatmul.mubr.bf16.gmra.mrb[0].mxu0 %v947
        %v1419 = vpop.f32.mrb[0].mxu0
        %v1420 = vadd.f32 %v1211, %v1419
        %v1421 = vpop.f32.mrb[0].mxu0
        %v1422 = vpop.f32.mrb[0].mxu0
        %v1423 = vadd.f32 %v1214, %v1422
        %v1424 = vpop.f32.mrb[0].mxu0
        %1425 = vmatprep.mubr.bf16.mxu0 0
        %1426 = vmatmul.mubr.bf16.gmra.mrb[0].mxu0 %v948
        %v1427 = vpop.f32.mrb[0].mxu0
        %v1428 = vadd.f32 %v1219, %v1427
        %v1429 = vpop.f32.mrb[0].mxu0
        %v1430 = vpop.f32.mrb[0].mxu0
        %v1431 = vadd.f32 %v1222, %v1430
        %v1432 = vpop.f32.mrb[0].mxu0
        %1433 = vmatprep.mubr.bf16.mxu0 0
        %1434 = vmatmul.mubr.bf16.gmra.mrb[0].mxu0 %v949
        %v1435 = vpop.f32.mrb[0].mxu0
        %v1436 = vadd.f32 %v1227, %v1435
        %v1437 = vpop.f32.mrb[0].mxu0
        %v1438 = vpop.f32.mrb[0].mxu0
        %v1439 = vadd.f32 %v1230, %v1438
        %v1440 = vpop.f32.mrb[0].mxu0
        %1441 = vmatprep.mubr.bf16.mxu0 0
        %1442 = vmatmul.mubr.bf16.gmra.mrb[0].mxu0 %v950
        %v1443 = vpop.f32.mrb[0].mxu0
        %v1444 = vadd.f32 %v1235, %v1443
        %v1445 = vpop.f32.mrb[0].mxu0
        %v1446 = vpop.f32.mrb[0].mxu0
        %v1447 = vadd.f32 %v1238, %v1446
        %v1448 = vpop.f32.mrb[0].mxu0
        %1449 = vdwg.mxu0
        %v1450 = vld [vmem:[#allocation2 + $0x2] sm:$0xff]
        %v1451 = vld [vmem:[#allocation2 + $0xa] sm:$0xff]
        %v1452 = vld [vmem:[#allocation2 + $0x1a] sm:$0xff]
        %v1453 = vld [vmem:[#allocation2 + $0x22] sm:$0xff]
        %v1454 = vld [vmem:[#allocation2 + $0x32] sm:$0xff]
        %v1455 = vld [vmem:[#allocation2 + $0x3a] sm:$0xff]
        %v1456 = vld [vmem:[#allocation2 + $0x4a] sm:$0xff]
        %v1457 = vld [vmem:[#allocation2 + $0x52] sm:$0xff]
        %v1458 = vld [vmem:[#allocation2 + $0x62] sm:$0xff]
        %v1459 = vld [vmem:[#allocation2 + $0x6a] sm:$0xff]
        %v1460 = vld [vmem:[#allocation2 + $0x7a] sm:$0xff]
        %v1461 = vld [vmem:[#allocation2 + $0x82] sm:$0xff]
        %v1462 = vld [vmem:[#allocation2 + $0x92] sm:$0xff]
        %v1463 = vld [vmem:[#allocation2 + $0x9a] sm:$0xff]
        %v1464 = vld [vmem:[#allocation2 + $0xaa] sm:$0xff]
        %v1465 = vld [vmem:[#allocation2 + $0xb2] sm:$0xff]
        %v1466 = vld [vmem:[#allocation2 + $0xc2] sm:$0xff]
        %v1467 = vld [vmem:[#allocation2 + $0xca] sm:$0xff]
        %v1468 = vld [vmem:[#allocation2 + $0xda] sm:$0xff]
        %v1469 = vld [vmem:[#allocation2 + $0xe2] sm:$0xff]
        %v1470 = vld [vmem:[#allocation2 + $0xf2] sm:$0xff]
        %v1471 = vld [vmem:[#allocation2 + $0xfa] sm:$0xff]
        %v1472 = vld [vmem:[#allocation2 + $0x10a] sm:$0xff]
        %v1473 = vld [vmem:[#allocation2 + $0x112] sm:$0xff]
        %v1474 = vld [vmem:[#allocation2 + $0x122] sm:$0xff]
        %v1475 = vld [vmem:[#allocation2 + $0x12a] sm:$0xff]
        %v1476 = vld [vmem:[#allocation2 + $0x13a] sm:$0xff]
        %v1477 = vld [vmem:[#allocation2 + $0x142] sm:$0xff]
        %v1478 = vld [vmem:[#allocation2 + $0x152] sm:$0xff]
        %v1479 = vld [vmem:[#allocation2 + $0x15a] sm:$0xff]
        %v1480 = vld [vmem:[#allocation2 + $0x16a] sm:$0xff]
        %v1481 = vld [vmem:[#allocation2 + $0x172] sm:$0xff]
        %v1482 = vpack.c.bf16 %v1451, %v1450
        %v1483 = vpack.c.bf16 %v1453, %v1452
        %v1484 = vpack.c.bf16 %v1455, %v1454
        %v1485 = vpack.c.bf16 %v1457, %v1456
        %v1486 = vpack.c.bf16 %v1459, %v1458
        %v1487 = vpack.c.bf16 %v1461, %v1460
        %v1488 = vpack.c.bf16 %v1463, %v1462
        %v1489 = vpack.c.bf16 %v1465, %v1464
        %v1490 = vpack.c.bf16 %v1467, %v1466
        %v1491 = vpack.c.bf16 %v1469, %v1468
        %v1492 = vpack.c.bf16 %v1471, %v1470
        %v1493 = vpack.c.bf16 %v1473, %v1472
        %v1494 = vpack.c.bf16 %v1475, %v1474
        %v1495 = vpack.c.bf16 %v1477, %v1476
        %v1496 = vpack.c.bf16 %v1479, %v1478
        %v1497 = vpack.c.bf16 %v1481, %v1480
        %s1498 = scalar_lea.vmem [#allocation3], 128
        %v1499 = vld [vmem:[%s1498] sm:$0xf]
        %v1500 = vld [vmem:[%s1498 + $0x4] sm:$0xf]
        %v1501 = vld [vmem:[%s1498 + $0x8] sm:$0xf]
        %v1502 = vld [vmem:[%s1498 + $0xc] sm:$0xf]
        %v1503 = vld [vmem:[%s1498 + $0x10] sm:$0xf]
        %v1504 = vld [vmem:[%s1498 + $0x14] sm:$0xf]
        %v1505 = vld [vmem:[%s1498 + $0x18] sm:$0xf]
        %v1506 = vld [vmem:[%s1498 + $0x1c] sm:$0xf]
        %v1507 = vld [vmem:[%s1498 + $0x20] sm:$0xf]
        %v1508 = vld [vmem:[%s1498 + $0x24] sm:$0xf]
        %v1509 = vld [vmem:[%s1498 + $0x28] sm:$0xf]
        %v1510 = vld [vmem:[%s1498 + $0x2c] sm:$0xf]
        %v1511 = vld [vmem:[%s1498 + $0x30] sm:$0xf]
        %v1512 = vld [vmem:[%s1498 + $0x34] sm:$0xf]
        %v1513 = vld [vmem:[%s1498 + $0x38] sm:$0xf]
        %v1514 = vld [vmem:[%s1498 + $0x3c] sm:$0xf]
        %v1531 = vunpack.c.l.b16 %v1499
        %v1532 = vunpack.c.l.b16 %v1500
        %v1533 = vunpack.c.l.b16 %v1501
        %v1534 = vunpack.c.l.b16 %v1502
        %v1535 = vunpack.c.l.b16 %v1503
        %v1536 = vunpack.c.l.b16 %v1504
        %v1537 = vunpack.c.l.b16 %v1505
        %v1538 = vunpack.c.l.b16 %v1506
        %v1539 = vunpack.c.l.b16 %v1507
        %v1540 = vunpack.c.l.b16 %v1508
        %v1541 = vunpack.c.l.b16 %v1509
        %v1542 = vunpack.c.l.b16 %v1510
        %v1543 = vunpack.c.l.b16 %v1511
        %v1544 = vunpack.c.l.b16 %v1512
        %v1545 = vunpack.c.l.b16 %v1513
        %v1546 = vunpack.c.l.b16 %v1514
        %v1547 = vpack.c.b16 %v1532, %v1531
        %v1548 = vpack.c.b16 %v1534, %v1533
        %v1549 = vpack.c.b16 %v1536, %v1535
        %v1550 = vpack.c.b16 %v1538, %v1537
        %v1551 = vpack.c.b16 %v1540, %v1539
        %v1552 = vpack.c.b16 %v1542, %v1541
        %v1553 = vpack.c.b16 %v1544, %v1543
        %v1554 = vpack.c.b16 %v1546, %v1545
        %1563 = vmatprep.subr.bf16.mxu0 0
        %1564 = vmatpush1.bf16.msra.mxu0 %v1547
        %1565 = vmatprep.subr.bf16.mxu0 0
        %1566 = vmatpush1.bf16.msra.mxu0 %v1548
        %1567 = vmatprep.subr.bf16.mxu0 0
        %1568 = vmatpush1.bf16.msra.mxu0 %v1549
        %1569 = vmatprep.subr.bf16.mxu0 0
        %1570 = vmatpush1.bf16.msra.mxu0 %v1550
        %1571 = vmatprep.subr.bf16.mxu0 0
        %1572 = vmatpush1.bf16.msra.mxu0 %v1551
        %1573 = vmatprep.subr.bf16.mxu0 0
        %1574 = vmatpush1.bf16.msra.mxu0 %v1552
        %1575 = vmatprep.subr.bf16.mxu0 0
        %1576 = vmatpush1.bf16.msra.mxu0 %v1553
        %1577 = vmatprep.subr.bf16.mxu0 0
        %1578 = vmatpush1.bf16.msra.mxu0 %v1554
        %1579 = vmatprep.subr.bf16.mxu0 0
        %1580 = vmatpush1.bf16.msra.mxu0 0
        %1581 = vmatprep.subr.bf16.mxu0 0
        %1582 = vmatpush1.bf16.msra.mxu0 0
        %1583 = vmatprep.subr.bf16.mxu0 0
        %1584 = vmatpush1.bf16.msra.mxu0 0
        %1585 = vmatprep.subr.bf16.mxu0 0
        %1586 = vmatpush1.bf16.msra.mxu0 0
        %1587 = vmatprep.subr.bf16.mxu0 0
        %1588 = vmatpush1.bf16.msra.mxu0 0
        %1589 = vmatprep.subr.bf16.mxu0 0
        %1590 = vmatpush1.bf16.msra.mxu0 0
        %1591 = vmatprep.subr.bf16.mxu0 0
        %1592 = vmatpush1.bf16.msra.mxu0 0
        %1593 = vmatprep.subr.bf16.mxu0 0
        %1594 = vmatpush1.bf16.msra.mxu0 0
        %1595 = vmatprep.mubr.bf16.mxu0 0
        %1596 = vmatmul.mubr.bf16.gmra.mrb[0].mxu0 %v1482
        %v1597 = vpop.f32.mrb[0].mxu0
        %v1598 = vadd.f32 0.0, %v1597
        %v1599 = vpop.f32.mrb[0].mxu0
        %v1600 = vpop.f32.mrb[0].mxu0
        %v1601 = vadd.f32 0.0, %v1600
        %v1602 = vpop.f32.mrb[0].mxu0
        %1603 = vmatprep.mubr.bf16.mxu0 0
        %1604 = vmatmul.mubr.bf16.gmra.mrb[0].mxu0 %v1483
        %v1605 = vpop.f32.mrb[0].mxu0
        %v1606 = vadd.f32 0.0, %v1605
        %v1607 = vpop.f32.mrb[0].mxu0
        %v1608 = vpop.f32.mrb[0].mxu0
        %v1609 = vadd.f32 0.0, %v1608
        %v1610 = vpop.f32.mrb[0].mxu0
        %1611 = vmatprep.mubr.bf16.mxu0 0
        %1612 = vmatmul.mubr.bf16.gmra.mrb[0].mxu0 %v1484
        %v1613 = vpop.f32.mrb[0].mxu0
        %v1614 = vadd.f32 0.0, %v1613
        %v1615 = vpop.f32.mrb[0].mxu0
        %v1616 = vpop.f32.mrb[0].mxu0
        %v1617 = vadd.f32 0.0, %v1616
        %v1618 = vpop.f32.mrb[0].mxu0
        %1619 = vmatprep.mubr.bf16.mxu0 0
        %1620 = vmatmul.mubr.bf16.gmra.mrb[0].mxu0 %v1485
        %v1621 = vpop.f32.mrb[0].mxu0
        %v1622 = vadd.f32 0.0, %v1621
        %v1623 = vpop.f32.mrb[0].mxu0
        %v1624 = vpop.f32.mrb[0].mxu0
        %v1625 = vadd.f32 0.0, %v1624
        %v1626 = vpop.f32.mrb[0].mxu0
        %1627 = vmatprep.mubr.bf16.mxu0 0
        %1628 = vmatmul.mubr.bf16.gmra.mrb[0].mxu0 %v1486
        %v1629 = vpop.f32.mrb[0].mxu0
        %v1630 = vadd.f32 0.0, %v1629
        %v1631 = vpop.f32.mrb[0].mxu0
        %v1632 = vpop.f32.mrb[0].mxu0
        %v1633 = vadd.f32 0.0, %v1632
        %v1634 = vpop.f32.mrb[0].mxu0
        %1635 = vmatprep.mubr.bf16.mxu0 0
        %1636 = vmatmul.mubr.bf16.gmra.mrb[0].mxu0 %v1487
        %v1637 = vpop.f32.mrb[0].mxu0
        %v1638 = vadd.f32 0.0, %v1637
        %v1639 = vpop.f32.mrb[0].mxu0
        %v1640 = vpop.f32.mrb[0].mxu0
        %v1641 = vadd.f32 0.0, %v1640
        %v1642 = vpop.f32.mrb[0].mxu0
        %1643 = vmatprep.mubr.bf16.mxu0 0
        %1644 = vmatmul.mubr.bf16.gmra.mrb[0].mxu0 %v1488
        %v1645 = vpop.f32.mrb[0].mxu0
        %v1646 = vadd.f32 0.0, %v1645
        %v1647 = vpop.f32.mrb[0].mxu0
        %v1648 = vpop.f32.mrb[0].mxu0
        %v1649 = vadd.f32 0.0, %v1648
        %v1650 = vpop.f32.mrb[0].mxu0
        %1651 = vmatprep.mubr.bf16.mxu0 0
        %1652 = vmatmul.mubr.bf16.gmra.mrb[0].mxu0 %v1489
        %v1653 = vpop.f32.mrb[0].mxu0
        %v1654 = vadd.f32 0.0, %v1653
        %v1655 = vpop.f32.mrb[0].mxu0
        %v1656 = vpop.f32.mrb[0].mxu0
        %v1657 = vadd.f32 0.0, %v1656
        %v1658 = vpop.f32.mrb[0].mxu0
        %1659 = vmatprep.mubr.bf16.mxu0 0
        %1660 = vmatmul.mubr.bf16.gmra.mrb[0].mxu0 %v1490
        %v1661 = vpop.f32.mrb[0].mxu0
        %v1662 = vadd.f32 0.0, %v1661
        %v1663 = vpop.f32.mrb[0].mxu0
        %v1664 = vpop.f32.mrb[0].mxu0
        %v1665 = vadd.f32 0.0, %v1664
        %v1666 = vpop.f32.mrb[0].mxu0
        %1667 = vmatprep.mubr.bf16.mxu0 0
        %1668 = vmatmul.mubr.bf16.gmra.mrb[0].mxu0 %v1491
        %v1669 = vpop.f32.mrb[0].mxu0
        %v1670 = vadd.f32 0.0, %v1669
        %v1671 = vpop.f32.mrb[0].mxu0
        %v1672 = vpop.f32.mrb[0].mxu0
        %v1673 = vadd.f32 0.0, %v1672
        %v1674 = vpop.f32.mrb[0].mxu0
        %1675 = vmatprep.mubr.bf16.mxu0 0
        %1676 = vmatmul.mubr.bf16.gmra.mrb[0].mxu0 %v1492
        %v1677 = vpop.f32.mrb[0].mxu0
        %v1678 = vadd.f32 0.0, %v1677
        %v1679 = vpop.f32.mrb[0].mxu0
        %v1680 = vpop.f32.mrb[0].mxu0
        %v1681 = vadd.f32 0.0, %v1680
        %v1682 = vpop.f32.mrb[0].mxu0
        %1683 = vmatprep.mubr.bf16.mxu0 0
        %1684 = vmatmul.mubr.bf16.gmra.mrb[0].mxu0 %v1493
        %v1685 = vpop.f32.mrb[0].mxu0
        %v1686 = vadd.f32 0.0, %v1685
        %v1687 = vpop.f32.mrb[0].mxu0
        %v1688 = vpop.f32.mrb[0].mxu0
        %v1689 = vadd.f32 0.0, %v1688
        %v1690 = vpop.f32.mrb[0].mxu0
        %1691 = vmatprep.mubr.bf16.mxu0 0
        %1692 = vmatmul.mubr.bf16.gmra.mrb[0].mxu0 %v1494
        %v1693 = vpop.f32.mrb[0].mxu0
        %v1694 = vadd.f32 0.0, %v1693
        %v1695 = vpop.f32.mrb[0].mxu0
        %v1696 = vpop.f32.mrb[0].mxu0
        %v1697 = vadd.f32 0.0, %v1696
        %v1698 = vpop.f32.mrb[0].mxu0
        %1699 = vmatprep.mubr.bf16.mxu0 0
        %1700 = vmatmul.mubr.bf16.gmra.mrb[0].mxu0 %v1495
        %v1701 = vpop.f32.mrb[0].mxu0
        %v1702 = vadd.f32 0.0, %v1701
        %v1703 = vpop.f32.mrb[0].mxu0
        %v1704 = vpop.f32.mrb[0].mxu0
        %v1705 = vadd.f32 0.0, %v1704
        %v1706 = vpop.f32.mrb[0].mxu0
        %1707 = vmatprep.mubr.bf16.mxu0 0
        %1708 = vmatmul.mubr.bf16.gmra.mrb[0].mxu0 %v1496
        %v1709 = vpop.f32.mrb[0].mxu0
        %v1710 = vadd.f32 0.0, %v1709
        %v1711 = vpop.f32.mrb[0].mxu0
        %v1712 = vpop.f32.mrb[0].mxu0
        %v1713 = vadd.f32 0.0, %v1712
        %v1714 = vpop.f32.mrb[0].mxu0
        %1715 = vmatprep.mubr.bf16.mxu0 0
        %1716 = vmatmul.mubr.bf16.gmra.mrb[0].mxu0 %v1497
        %v1717 = vpop.f32.mrb[0].mxu0
        %v1718 = vadd.f32 0.0, %v1717
        %v1719 = vpop.f32.mrb[0].mxu0
        %v1720 = vpop.f32.mrb[0].mxu0
        %v1721 = vadd.f32 0.0, %v1720
        %v1722 = vpop.f32.mrb[0].mxu0
        %1723 = vdwg.mxu0
        %v1724 = vadd.f32 %v1324, %v1598
        %v1725 = vadd.f32 %v1327, %v1601
        %v1726 = vadd.f32 %v1332, %v1606
        %v1727 = vadd.f32 %v1335, %v1609
        %v1728 = vadd.f32 %v1340, %v1614
        %v1729 = vadd.f32 %v1343, %v1617
        %v1730 = vadd.f32 %v1348, %v1622
        %v1731 = vadd.f32 %v1351, %v1625
        %v1732 = vadd.f32 %v1356, %v1630
        %v1733 = vadd.f32 %v1359, %v1633
        %v1734 = vadd.f32 %v1364, %v1638
        %v1735 = vadd.f32 %v1367, %v1641
        %v1736 = vadd.f32 %v1372, %v1646
        %v1737 = vadd.f32 %v1375, %v1649
        %v1738 = vadd.f32 %v1380, %v1654
        %v1739 = vadd.f32 %v1383, %v1657
        %v1740 = vadd.f32 %v1388, %v1662
        %v1741 = vadd.f32 %v1391, %v1665
        %v1742 = vadd.f32 %v1396, %v1670
        %v1743 = vadd.f32 %v1399, %v1673
        %v1744 = vadd.f32 %v1404, %v1678
        %v1745 = vadd.f32 %v1407, %v1681
        %v1746 = vadd.f32 %v1412, %v1686
        %v1747 = vadd.f32 %v1415, %v1689
        %v1748 = vadd.f32 %v1420, %v1694
        %v1749 = vadd.f32 %v1423, %v1697
        %v1750 = vadd.f32 %v1428, %v1702
        %v1751 = vadd.f32 %v1431, %v1705
        %v1752 = vadd.f32 %v1436, %v1710
        %v1753 = vadd.f32 %v1439, %v1713
        %v1754 = vadd.f32 %v1444, %v1718
        %v1755 = vadd.f32 %v1447, %v1721
        %v1756 = vld [vmem:[%s870] sm:$0xff]
        %v1757 = vld [vmem:[%s870 + $0x8] sm:$0xff]
        %v1758 = vld [vmem:[%s870 + $0x18] sm:$0xff]
        %v1759 = vld [vmem:[%s870 + $0x20] sm:$0xff]
        %v1760 = vld [vmem:[%s870 + $0x30] sm:$0xff]
        %v1761 = vld [vmem:[%s870 + $0x38] sm:$0xff]
        %v1762 = vld [vmem:[%s870 + $0x48] sm:$0xff]
        %v1763 = vld [vmem:[%s870 + $0x50] sm:$0xff]
        %v1764 = vld [vmem:[%s870 + $0x60] sm:$0xff]
        %v1765 = vld [vmem:[%s870 + $0x68] sm:$0xff]
        %v1766 = vld [vmem:[%s870 + $0x78] sm:$0xff]
        %v1767 = vld [vmem:[%s870 + $0x80] sm:$0xff]
        %v1768 = vld [vmem:[%s870 + $0x90] sm:$0xff]
        %v1769 = vld [vmem:[%s870 + $0x98] sm:$0xff]
        %v1770 = vld [vmem:[%s870 + $0xa8] sm:$0xff]
        %v1771 = vld [vmem:[%s870 + $0xb0] sm:$0xff]
        %v1772 = vld [vmem:[%s870 + $0xc0] sm:$0xff]
        %v1773 = vld [vmem:[%s870 + $0xc8] sm:$0xff]
        %v1774 = vld [vmem:[%s870 + $0xd8] sm:$0xff]
        %v1775 = vld [vmem:[%s870 + $0xe0] sm:$0xff]
        %v1776 = vld [vmem:[%s870 + $0xf0] sm:$0xff]
        %v1777 = vld [vmem:[%s870 + $0xf8] sm:$0xff]
        %v1778 = vld [vmem:[%s870 + $0x108] sm:$0xff]
        %v1779 = vld [vmem:[%s870 + $0x110] sm:$0xff]
        %v1780 = vld [vmem:[%s870 + $0x120] sm:$0xff]
        %v1781 = vld [vmem:[%s870 + $0x128] sm:$0xff]
        %v1782 = vld [vmem:[%s870 + $0x138] sm:$0xff]
        %v1783 = vld [vmem:[%s870 + $0x140] sm:$0xff]
        %v1784 = vld [vmem:[%s870 + $0x150] sm:$0xff]
        %v1785 = vld [vmem:[%s870 + $0x158] sm:$0xff]
        %v1786 = vld [vmem:[%s870 + $0x168] sm:$0xff]
        %v1787 = vld [vmem:[%s870 + $0x170] sm:$0xff]
        %v1788 = vpack.c.bf16 %v1757, %v1756
        %v1789 = vpack.c.bf16 %v1759, %v1758
        %v1790 = vpack.c.bf16 %v1761, %v1760
        %v1791 = vpack.c.bf16 %v1763, %v1762
        %v1792 = vpack.c.bf16 %v1765, %v1764
        %v1793 = vpack.c.bf16 %v1767, %v1766
        %v1794 = vpack.c.bf16 %v1769, %v1768
        %v1795 = vpack.c.bf16 %v1771, %v1770
        %v1796 = vpack.c.bf16 %v1773, %v1772
        %v1797 = vpack.c.bf16 %v1775, %v1774
        %v1798 = vpack.c.bf16 %v1777, %v1776
        %v1799 = vpack.c.bf16 %v1779, %v1778
        %v1800 = vpack.c.bf16 %v1781, %v1780
        %v1801 = vpack.c.bf16 %v1783, %v1782
        %v1802 = vpack.c.bf16 %v1785, %v1784
        %v1803 = vpack.c.bf16 %v1787, %v1786
        %s1804 = scalar_lea.vmem [#allocation3], 192
        %v1805 = vld [vmem:[%s1804] sm:$0xf]
        %v1806 = vld [vmem:[%s1804 + $0x4] sm:$0xf]
        %v1807 = vld [vmem:[%s1804 + $0x8] sm:$0xf]
        %v1808 = vld [vmem:[%s1804 + $0xc] sm:$0xf]
        %v1809 = vld [vmem:[%s1804 + $0x10] sm:$0xf]
        %v1810 = vld [vmem:[%s1804 + $0x14] sm:$0xf]
        %v1811 = vld [vmem:[%s1804 + $0x18] sm:$0xf]
        %v1812 = vld [vmem:[%s1804 + $0x1c] sm:$0xf]
        %v1813 = vld [vmem:[%s1804 + $0x20] sm:$0xf]
        %v1814 = vld [vmem:[%s1804 + $0x24] sm:$0xf]
        %v1815 = vld [vmem:[%s1804 + $0x28] sm:$0xf]
        %v1816 = vld [vmem:[%s1804 + $0x2c] sm:$0xf]
        %v1817 = vld [vmem:[%s1804 + $0x30] sm:$0xf]
        %v1818 = vld [vmem:[%s1804 + $0x34] sm:$0xf]
        %v1819 = vld [vmem:[%s1804 + $0x38] sm:$0xf]
        %v1820 = vld [vmem:[%s1804 + $0x3c] sm:$0xf]
        %v1837 = vunpack.c.l.b16 %v1805
        %v1838 = vunpack.c.l.b16 %v1806
        %v1839 = vunpack.c.l.b16 %v1807
        %v1840 = vunpack.c.l.b16 %v1808
        %v1841 = vunpack.c.l.b16 %v1809
        %v1842 = vunpack.c.l.b16 %v1810
        %v1843 = vunpack.c.l.b16 %v1811
        %v1844 = vunpack.c.l.b16 %v1812
        %v1845 = vunpack.c.l.b16 %v1813
        %v1846 = vunpack.c.l.b16 %v1814
        %v1847 = vunpack.c.l.b16 %v1815
        %v1848 = vunpack.c.l.b16 %v1816
        %v1849 = vunpack.c.l.b16 %v1817
        %v1850 = vunpack.c.l.b16 %v1818
        %v1851 = vunpack.c.l.b16 %v1819
        %v1852 = vunpack.c.l.b16 %v1820
        %v1853 = vpack.c.b16 %v1838, %v1837
        %v1854 = vpack.c.b16 %v1840, %v1839
        %v1855 = vpack.c.b16 %v1842, %v1841
        %v1856 = vpack.c.b16 %v1844, %v1843
        %v1857 = vpack.c.b16 %v1846, %v1845
        %v1858 = vpack.c.b16 %v1848, %v1847
        %v1859 = vpack.c.b16 %v1850, %v1849
        %v1860 = vpack.c.b16 %v1852, %v1851
        %1869 = vmatprep.subr.bf16.mxu0 0
        %1870 = vmatpush1.bf16.msra.mxu0 %v1853
        %1871 = vmatprep.subr.bf16.mxu0 0
        %1872 = vmatpush1.bf16.msra.mxu0 %v1854
        %1873 = vmatprep.subr.bf16.mxu0 0
        %1874 = vmatpush1.bf16.msra.mxu0 %v1855
        %1875 = vmatprep.subr.bf16.mxu0 0
        %1876 = vmatpush1.bf16.msra.mxu0 %v1856
        %1877 = vmatprep.subr.bf16.mxu0 0
        %1878 = vmatpush1.bf16.msra.mxu0 %v1857
        %1879 = vmatprep.subr.bf16.mxu0 0
        %1880 = vmatpush1.bf16.msra.mxu0 %v1858
        %1881 = vmatprep.subr.bf16.mxu0 0
        %1882 = vmatpush1.bf16.msra.mxu0 %v1859
        %1883 = vmatprep.subr.bf16.mxu0 0
        %1884 = vmatpush1.bf16.msra.mxu0 %v1860
        %1885 = vmatprep.subr.bf16.mxu0 0
        %1886 = vmatpush1.bf16.msra.mxu0 0
        %1887 = vmatprep.subr.bf16.mxu0 0
        %1888 = vmatpush1.bf16.msra.mxu0 0
        %1889 = vmatprep.subr.bf16.mxu0 0
        %1890 = vmatpush1.bf16.msra.mxu0 0
        %1891 = vmatprep.subr.bf16.mxu0 0
        %1892 = vmatpush1.bf16.msra.mxu0 0
        %1893 = vmatprep.subr.bf16.mxu0 0
        %1894 = vmatpush1.bf16.msra.mxu0 0
        %1895 = vmatprep.subr.bf16.mxu0 0
        %1896 = vmatpush1.bf16.msra.mxu0 0
        %1897 = vmatprep.subr.bf16.mxu0 0
        %1898 = vmatpush1.bf16.msra.mxu0 0
        %1899 = vmatprep.subr.bf16.mxu0 0
        %1900 = vmatpush1.bf16.msra.mxu0 0
        %1901 = vmatprep.mubr.bf16.mxu0 0
        %1902 = vmatmul.mubr.bf16.gmra.mrb[0].mxu0 %v1788
        %v1903 = vpop.f32.mrb[0].mxu0
        %v1904 = vadd.f32 0.0, %v1903
        %v1905 = vpop.f32.mrb[0].mxu0
        %v1906 = vpop.f32.mrb[0].mxu0
        %v1907 = vadd.f32 0.0, %v1906
        %v1908 = vpop.f32.mrb[0].mxu0
        %1909 = vmatprep.mubr.bf16.mxu0 0
        %1910 = vmatmul.mubr.bf16.gmra.mrb[0].mxu0 %v1789
        %v1911 = vpop.f32.mrb[0].mxu0
        %v1912 = vadd.f32 0.0, %v1911
        %v1913 = vpop.f32.mrb[0].mxu0
        %v1914 = vpop.f32.mrb[0].mxu0
        %v1915 = vadd.f32 0.0, %v1914
        %v1916 = vpop.f32.mrb[0].mxu0
        %1917 = vmatprep.mubr.bf16.mxu0 0
        %1918 = vmatmul.mubr.bf16.gmra.mrb[0].mxu0 %v1790
        %v1919 = vpop.f32.mrb[0].mxu0
        %v1920 = vadd.f32 0.0, %v1919
        %v1921 = vpop.f32.mrb[0].mxu0
        %v1922 = vpop.f32.mrb[0].mxu0
        %v1923 = vadd.f32 0.0, %v1922
        %v1924 = vpop.f32.mrb[0].mxu0
        %1925 = vmatprep.mubr.bf16.mxu0 0
        %1926 = vmatmul.mubr.bf16.gmra.mrb[0].mxu0 %v1791
        %v1927 = vpop.f32.mrb[0].mxu0
        %v1928 = vadd.f32 0.0, %v1927
        %v1929 = vpop.f32.mrb[0].mxu0
        %v1930 = vpop.f32.mrb[0].mxu0
        %v1931 = vadd.f32 0.0, %v1930
        %v1932 = vpop.f32.mrb[0].mxu0
        %1933 = vmatprep.mubr.bf16.mxu0 0
        %1934 = vmatmul.mubr.bf16.gmra.mrb[0].mxu0 %v1792
        %v1935 = vpop.f32.mrb[0].mxu0
        %v1936 = vadd.f32 0.0, %v1935
        %v1937 = vpop.f32.mrb[0].mxu0
        %v1938 = vpop.f32.mrb[0].mxu0
        %v1939 = vadd.f32 0.0, %v1938
        %v1940 = vpop.f32.mrb[0].mxu0
        %1941 = vmatprep.mubr.bf16.mxu0 0
        %1942 = vmatmul.mubr.bf16.gmra.mrb[0].mxu0 %v1793
        %v1943 = vpop.f32.mrb[0].mxu0
        %v1944 = vadd.f32 0.0, %v1943
        %v1945 = vpop.f32.mrb[0].mxu0
        %v1946 = vpop.f32.mrb[0].mxu0
        %v1947 = vadd.f32 0.0, %v1946
        %v1948 = vpop.f32.mrb[0].mxu0
        %1949 = vmatprep.mubr.bf16.mxu0 0
        %1950 = vmatmul.mubr.bf16.gmra.mrb[0].mxu0 %v1794
        %v1951 = vpop.f32.mrb[0].mxu0
        %v1952 = vadd.f32 0.0, %v1951
        %v1953 = vpop.f32.mrb[0].mxu0
        %v1954 = vpop.f32.mrb[0].mxu0
        %v1955 = vadd.f32 0.0, %v1954
        %v1956 = vpop.f32.mrb[0].mxu0
        %1957 = vmatprep.mubr.bf16.mxu0 0
        %1958 = vmatmul.mubr.bf16.gmra.mrb[0].mxu0 %v1795
        %v1959 = vpop.f32.mrb[0].mxu0
        %v1960 = vadd.f32 0.0, %v1959
        %v1961 = vpop.f32.mrb[0].mxu0
        %v1962 = vpop.f32.mrb[0].mxu0
        %v1963 = vadd.f32 0.0, %v1962
        %v1964 = vpop.f32.mrb[0].mxu0
        %1965 = vmatprep.mubr.bf16.mxu0 0
        %1966 = vmatmul.mubr.bf16.gmra.mrb[0].mxu0 %v1796
        %v1967 = vpop.f32.mrb[0].mxu0
        %v1968 = vadd.f32 0.0, %v1967
        %v1969 = vpop.f32.mrb[0].mxu0
        %v1970 = vpop.f32.mrb[0].mxu0
        %v1971 = vadd.f32 0.0, %v1970
        %v1972 = vpop.f32.mrb[0].mxu0
        %1973 = vmatprep.mubr.bf16.mxu0 0
        %1974 = vmatmul.mubr.bf16.gmra.mrb[0].mxu0 %v1797
        %v1975 = vpop.f32.mrb[0].mxu0
        %v1976 = vadd.f32 0.0, %v1975
        %v1977 = vpop.f32.mrb[0].mxu0
        %v1978 = vpop.f32.mrb[0].mxu0
        %v1979 = vadd.f32 0.0, %v1978
        %v1980 = vpop.f32.mrb[0].mxu0
        %1981 = vmatprep.mubr.bf16.mxu0 0
        %1982 = vmatmul.mubr.bf16.gmra.mrb[0].mxu0 %v1798
        %v1983 = vpop.f32.mrb[0].mxu0
        %v1984 = vadd.f32 0.0, %v1983
        %v1985 = vpop.f32.mrb[0].mxu0
        %v1986 = vpop.f32.mrb[0].mxu0
        %v1987 = vadd.f32 0.0, %v1986
        %v1988 = vpop.f32.mrb[0].mxu0
        %1989 = vmatprep.mubr.bf16.mxu0 0
        %1990 = vmatmul.mubr.bf16.gmra.mrb[0].mxu0 %v1799
        %v1991 = vpop.f32.mrb[0].mxu0
        %v1992 = vadd.f32 0.0, %v1991
        %v1993 = vpop.f32.mrb[0].mxu0
        %v1994 = vpop.f32.mrb[0].mxu0
        %v1995 = vadd.f32 0.0, %v1994
        %v1996 = vpop.f32.mrb[0].mxu0
        %1997 = vmatprep.mubr.bf16.mxu0 0
        %1998 = vmatmul.mubr.bf16.gmra.mrb[0].mxu0 %v1800
        %v1999 = vpop.f32.mrb[0].mxu0
        %v2000 = vadd.f32 0.0, %v1999
        %v2001 = vpop.f32.mrb[0].mxu0
        %v2002 = vpop.f32.mrb[0].mxu0
        %v2003 = vadd.f32 0.0, %v2002
        %v2004 = vpop.f32.mrb[0].mxu0
        %2005 = vmatprep.mubr.bf16.mxu0 0
        %2006 = vmatmul.mubr.bf16.gmra.mrb[0].mxu0 %v1801
        %v2007 = vpop.f32.mrb[0].mxu0
        %v2008 = vadd.f32 0.0, %v2007
        %v2009 = vpop.f32.mrb[0].mxu0
        %v2010 = vpop.f32.mrb[0].mxu0
        %v2011 = vadd.f32 0.0, %v2010
        %v2012 = vpop.f32.mrb[0].mxu0
        %2013 = vmatprep.mubr.bf16.mxu0 0
        %2014 = vmatmul.mubr.bf16.gmra.mrb[0].mxu0 %v1802
        %v2015 = vpop.f32.mrb[0].mxu0
        %v2016 = vadd.f32 0.0, %v2015
        %v2017 = vpop.f32.mrb[0].mxu0
        %v2018 = vpop.f32.mrb[0].mxu0
        %v2019 = vadd.f32 0.0, %v2018
        %v2020 = vpop.f32.mrb[0].mxu0
        %2021 = vmatprep.mubr.bf16.mxu0 0
        %2022 = vmatmul.mubr.bf16.gmra.mrb[0].mxu0 %v1803
        %v2023 = vpop.f32.mrb[0].mxu0
        %v2024 = vadd.f32 0.0, %v2023
        %v2025 = vpop.f32.mrb[0].mxu0
        %v2026 = vpop.f32.mrb[0].mxu0
        %v2027 = vadd.f32 0.0, %v2026
        %v2028 = vpop.f32.mrb[0].mxu0
        %2029 = vdwg.mxu0
        %v2030 = vadd.f32 %v1724, %v1904
        %v2031 = vadd.f32 %v1725, %v1907
        %v2032 = vadd.f32 %v1726, %v1912
        %v2033 = vadd.f32 %v1727, %v1915
        %v2034 = vadd.f32 %v1728, %v1920
        %v2035 = vadd.f32 %v1729, %v1923
        %v2036 = vadd.f32 %v1730, %v1928
        %v2037 = vadd.f32 %v1731, %v1931
        %v2038 = vadd.f32 %v1732, %v1936
        %v2039 = vadd.f32 %v1733, %v1939
        %v2040 = vadd.f32 %v1734, %v1944
        %v2041 = vadd.f32 %v1735, %v1947
        %v2042 = vadd.f32 %v1736, %v1952
        %v2043 = vadd.f32 %v1737, %v1955
        %v2044 = vadd.f32 %v1738, %v1960
        %v2045 = vadd.f32 %v1739, %v1963
        %v2046 = vadd.f32 %v1740, %v1968
        %v2047 = vadd.f32 %v1741, %v1971
        %v2048 = vadd.f32 %v1742, %v1976
        %v2049 = vadd.f32 %v1743, %v1979
        %v2050 = vadd.f32 %v1744, %v1984
        %v2051 = vadd.f32 %v1745, %v1987
        %v2052 = vadd.f32 %v1746, %v1992
        %v2053 = vadd.f32 %v1747, %v1995
        %v2054 = vadd.f32 %v1748, %v2000
        %v2055 = vadd.f32 %v1749, %v2003
        %v2056 = vadd.f32 %v1750, %v2008
        %v2057 = vadd.f32 %v1751, %v2011
        %v2058 = vadd.f32 %v1752, %v2016
        %v2059 = vadd.f32 %v1753, %v2019
        %v2060 = vadd.f32 %v1754, %v2024
        %v2061 = vadd.f32 %v1755, %v2027
        %v2062 = vld [vmem:[%s870 + $0x1] sm:$0xff]
        %v2063 = vld [vmem:[%s870 + $0x9] sm:$0xff]
        %v2064 = vld [vmem:[%s870 + $0x19] sm:$0xff]
        %v2065 = vld [vmem:[%s870 + $0x21] sm:$0xff]
        %v2066 = vld [vmem:[%s870 + $0x31] sm:$0xff]
        %v2067 = vld [vmem:[%s870 + $0x39] sm:$0xff]
        %v2068 = vld [vmem:[%s870 + $0x49] sm:$0xff]
        %v2069 = vld [vmem:[%s870 + $0x51] sm:$0xff]
        %v2070 = vld [vmem:[%s870 + $0x61] sm:$0xff]
        %v2071 = vld [vmem:[%s870 + $0x69] sm:$0xff]
        %v2072 = vld [vmem:[%s870 + $0x79] sm:$0xff]
        %v2073 = vld [vmem:[%s870 + $0x81] sm:$0xff]
        %v2074 = vld [vmem:[%s870 + $0x91] sm:$0xff]
        %v2075 = vld [vmem:[%s870 + $0x99] sm:$0xff]
        %v2076 = vld [vmem:[%s870 + $0xa9] sm:$0xff]
        %v2077 = vld [vmem:[%s870 + $0xb1] sm:$0xff]
        %v2078 = vld [vmem:[%s870 + $0xc1] sm:$0xff]
        %v2079 = vld [vmem:[%s870 + $0xc9] sm:$0xff]
        %v2080 = vld [vmem:[%s870 + $0xd9] sm:$0xff]
        %v2081 = vld [vmem:[%s870 + $0xe1] sm:$0xff]
        %v2082 = vld [vmem:[%s870 + $0xf1] sm:$0xff]
        %v2083 = vld [vmem:[%s870 + $0xf9] sm:$0xff]
        %v2084 = vld [vmem:[%s870 + $0x109] sm:$0xff]
        %v2085 = vld [vmem:[%s870 + $0x111] sm:$0xff]
        %v2086 = vld [vmem:[%s870 + $0x121] sm:$0xff]
        %v2087 = vld [vmem:[%s870 + $0x129] sm:$0xff]
        %v2088 = vld [vmem:[%s870 + $0x139] sm:$0xff]
        %v2089 = vld [vmem:[%s870 + $0x141] sm:$0xff]
        %v2090 = vld [vmem:[%s870 + $0x151] sm:$0xff]
        %v2091 = vld [vmem:[%s870 + $0x159] sm:$0xff]
        %v2092 = vld [vmem:[%s870 + $0x169] sm:$0xff]
        %v2093 = vld [vmem:[%s870 + $0x171] sm:$0xff]
        %v2094 = vpack.c.bf16 %v2063, %v2062
        %v2095 = vpack.c.bf16 %v2065, %v2064
        %v2096 = vpack.c.bf16 %v2067, %v2066
        %v2097 = vpack.c.bf16 %v2069, %v2068
        %v2098 = vpack.c.bf16 %v2071, %v2070
        %v2099 = vpack.c.bf16 %v2073, %v2072
        %v2100 = vpack.c.bf16 %v2075, %v2074
        %v2101 = vpack.c.bf16 %v2077, %v2076
        %v2102 = vpack.c.bf16 %v2079, %v2078
        %v2103 = vpack.c.bf16 %v2081, %v2080
        %v2104 = vpack.c.bf16 %v2083, %v2082
        %v2105 = vpack.c.bf16 %v2085, %v2084
        %v2106 = vpack.c.bf16 %v2087, %v2086
        %v2107 = vpack.c.bf16 %v2089, %v2088
        %v2108 = vpack.c.bf16 %v2091, %v2090
        %v2109 = vpack.c.bf16 %v2093, %v2092
        %s2110 = scalar_lea.vmem [#allocation3], 256
        %v2111 = vld [vmem:[%s2110] sm:$0xf]
        %v2112 = vld [vmem:[%s2110 + $0x4] sm:$0xf]
        %v2113 = vld [vmem:[%s2110 + $0x8] sm:$0xf]
        %v2114 = vld [vmem:[%s2110 + $0xc] sm:$0xf]
        %v2115 = vld [vmem:[%s2110 + $0x10] sm:$0xf]
        %v2116 = vld [vmem:[%s2110 + $0x14] sm:$0xf]
        %v2117 = vld [vmem:[%s2110 + $0x18] sm:$0xf]
        %v2118 = vld [vmem:[%s2110 + $0x1c] sm:$0xf]
        %v2119 = vld [vmem:[%s2110 + $0x20] sm:$0xf]
        %v2120 = vld [vmem:[%s2110 + $0x24] sm:$0xf]
        %v2121 = vld [vmem:[%s2110 + $0x28] sm:$0xf]
        %v2122 = vld [vmem:[%s2110 + $0x2c] sm:$0xf]
        %v2123 = vld [vmem:[%s2110 + $0x30] sm:$0xf]
        %v2124 = vld [vmem:[%s2110 + $0x34] sm:$0xf]
        %v2125 = vld [vmem:[%s2110 + $0x38] sm:$0xf]
        %v2126 = vld [vmem:[%s2110 + $0x3c] sm:$0xf]
        %v2143 = vunpack.c.l.b16 %v2111
        %v2144 = vunpack.c.l.b16 %v2112
        %v2145 = vunpack.c.l.b16 %v2113
        %v2146 = vunpack.c.l.b16 %v2114
        %v2147 = vunpack.c.l.b16 %v2115
        %v2148 = vunpack.c.l.b16 %v2116
        %v2149 = vunpack.c.l.b16 %v2117
        %v2150 = vunpack.c.l.b16 %v2118
        %v2151 = vunpack.c.l.b16 %v2119
        %v2152 = vunpack.c.l.b16 %v2120
        %v2153 = vunpack.c.l.b16 %v2121
        %v2154 = vunpack.c.l.b16 %v2122
        %v2155 = vunpack.c.l.b16 %v2123
        %v2156 = vunpack.c.l.b16 %v2124
        %v2157 = vunpack.c.l.b16 %v2125
        %v2158 = vunpack.c.l.b16 %v2126
        %v2159 = vpack.c.b16 %v2144, %v2143
        %v2160 = vpack.c.b16 %v2146, %v2145
        %v2161 = vpack.c.b16 %v2148, %v2147
        %v2162 = vpack.c.b16 %v2150, %v2149
        %v2163 = vpack.c.b16 %v2152, %v2151
        %v2164 = vpack.c.b16 %v2154, %v2153
        %v2165 = vpack.c.b16 %v2156, %v2155
        %v2166 = vpack.c.b16 %v2158, %v2157
        %2175 = vmatprep.subr.bf16.mxu0 0
        %2176 = vmatpush1.bf16.msra.mxu0 %v2159
        %2177 = vmatprep.subr.bf16.mxu0 0
        %2178 = vmatpush1.bf16.msra.mxu0 %v2160
        %2179 = vmatprep.subr.bf16.mxu0 0
        %2180 = vmatpush1.bf16.msra.mxu0 %v2161
        %2181 = vmatprep.subr.bf16.mxu0 0
        %2182 = vmatpush1.bf16.msra.mxu0 %v2162
        %2183 = vmatprep.subr.bf16.mxu0 0
        %2184 = vmatpush1.bf16.msra.mxu0 %v2163
        %2185 = vmatprep.subr.bf16.mxu0 0
        %2186 = vmatpush1.bf16.msra.mxu0 %v2164
        %2187 = vmatprep.subr.bf16.mxu0 0
        %2188 = vmatpush1.bf16.msra.mxu0 %v2165
        %2189 = vmatprep.subr.bf16.mxu0 0
        %2190 = vmatpush1.bf16.msra.mxu0 %v2166
        %2191 = vmatprep.subr.bf16.mxu0 0
        %2192 = vmatpush1.bf16.msra.mxu0 0
        %2193 = vmatprep.subr.bf16.mxu0 0
        %2194 = vmatpush1.bf16.msra.mxu0 0
        %2195 = vmatprep.subr.bf16.mxu0 0
        %2196 = vmatpush1.bf16.msra.mxu0 0
        %2197 = vmatprep.subr.bf16.mxu0 0
        %2198 = vmatpush1.bf16.msra.mxu0 0
        %2199 = vmatprep.subr.bf16.mxu0 0
        %2200 = vmatpush1.bf16.msra.mxu0 0
        %2201 = vmatprep.subr.bf16.mxu0 0
        %2202 = vmatpush1.bf16.msra.mxu0 0
        %2203 = vmatprep.subr.bf16.mxu0 0
        %2204 = vmatpush1.bf16.msra.mxu0 0
        %2205 = vmatprep.subr.bf16.mxu0 0
        %2206 = vmatpush1.bf16.msra.mxu0 0
        %2207 = vmatprep.mubr.bf16.mxu0 0
        %2208 = vmatmul.mubr.bf16.gmra.mrb[0].mxu0 %v2094
        %v2209 = vpop.f32.mrb[0].mxu0
        %v2210 = vadd.f32 0.0, %v2209
        %v2211 = vpop.f32.mrb[0].mxu0
        %v2212 = vpop.f32.mrb[0].mxu0
        %v2213 = vadd.f32 0.0, %v2212
        %v2214 = vpop.f32.mrb[0].mxu0
        %2215 = vmatprep.mubr.bf16.mxu0 0
        %2216 = vmatmul.mubr.bf16.gmra.mrb[0].mxu0 %v2095
        %v2217 = vpop.f32.mrb[0].mxu0
        %v2218 = vadd.f32 0.0, %v2217
        %v2219 = vpop.f32.mrb[0].mxu0
        %v2220 = vpop.f32.mrb[0].mxu0
        %v2221 = vadd.f32 0.0, %v2220
        %v2222 = vpop.f32.mrb[0].mxu0
        %2223 = vmatprep.mubr.bf16.mxu0 0
        %2224 = vmatmul.mubr.bf16.gmra.mrb[0].mxu0 %v2096
        %v2225 = vpop.f32.mrb[0].mxu0
        %v2226 = vadd.f32 0.0, %v2225
        %v2227 = vpop.f32.mrb[0].mxu0
        %v2228 = vpop.f32.mrb[0].mxu0
        %v2229 = vadd.f32 0.0, %v2228
        %v2230 = vpop.f32.mrb[0].mxu0
        %2231 = vmatprep.mubr.bf16.mxu0 0
        %2232 = vmatmul.mubr.bf16.gmra.mrb[0].mxu0 %v2097
        %v2233 = vpop.f32.mrb[0].mxu0
        %v2234 = vadd.f32 0.0, %v2233
        %v2235 = vpop.f32.mrb[0].mxu0
        %v2236 = vpop.f32.mrb[0].mxu0
        %v2237 = vadd.f32 0.0, %v2236
        %v2238 = vpop.f32.mrb[0].mxu0
        %2239 = vmatprep.mubr.bf16.mxu0 0
        %2240 = vmatmul.mubr.bf16.gmra.mrb[0].mxu0 %v2098
        %v2241 = vpop.f32.mrb[0].mxu0
        %v2242 = vadd.f32 0.0, %v2241
        %v2243 = vpop.f32.mrb[0].mxu0
        %v2244 = vpop.f32.mrb[0].mxu0
        %v2245 = vadd.f32 0.0, %v2244
        %v2246 = vpop.f32.mrb[0].mxu0
        %2247 = vmatprep.mubr.bf16.mxu0 0
        %2248 = vmatmul.mubr.bf16.gmra.mrb[0].mxu0 %v2099
        %v2249 = vpop.f32.mrb[0].mxu0
        %v2250 = vadd.f32 0.0, %v2249
        %v2251 = vpop.f32.mrb[0].mxu0
        %v2252 = vpop.f32.mrb[0].mxu0
        %v2253 = vadd.f32 0.0, %v2252
        %v2254 = vpop.f32.mrb[0].mxu0
        %2255 = vmatprep.mubr.bf16.mxu0 0
        %2256 = vmatmul.mubr.bf16.gmra.mrb[0].mxu0 %v2100
        %v2257 = vpop.f32.mrb[0].mxu0
        %v2258 = vadd.f32 0.0, %v2257
        %v2259 = vpop.f32.mrb[0].mxu0
        %v2260 = vpop.f32.mrb[0].mxu0
        %v2261 = vadd.f32 0.0, %v2260
        %v2262 = vpop.f32.mrb[0].mxu0
        %2263 = vmatprep.mubr.bf16.mxu0 0
        %2264 = vmatmul.mubr.bf16.gmra.mrb[0].mxu0 %v2101
        %v2265 = vpop.f32.mrb[0].mxu0
        %v2266 = vadd.f32 0.0, %v2265
        %v2267 = vpop.f32.mrb[0].mxu0
        %v2268 = vpop.f32.mrb[0].mxu0
        %v2269 = vadd.f32 0.0, %v2268
        %v2270 = vpop.f32.mrb[0].mxu0
        %2271 = vmatprep.mubr.bf16.mxu0 0
        %2272 = vmatmul.mubr.bf16.gmra.mrb[0].mxu0 %v2102
        %v2273 = vpop.f32.mrb[0].mxu0
        %v2274 = vadd.f32 0.0, %v2273
        %v2275 = vpop.f32.mrb[0].mxu0
        %v2276 = vpop.f32.mrb[0].mxu0
        %v2277 = vadd.f32 0.0, %v2276
        %v2278 = vpop.f32.mrb[0].mxu0
        %2279 = vmatprep.mubr.bf16.mxu0 0
        %2280 = vmatmul.mubr.bf16.gmra.mrb[0].mxu0 %v2103
        %v2281 = vpop.f32.mrb[0].mxu0
        %v2282 = vadd.f32 0.0, %v2281
        %v2283 = vpop.f32.mrb[0].mxu0
        %v2284 = vpop.f32.mrb[0].mxu0
        %v2285 = vadd.f32 0.0, %v2284
        %v2286 = vpop.f32.mrb[0].mxu0
        %2287 = vmatprep.mubr.bf16.mxu0 0
        %2288 = vmatmul.mubr.bf16.gmra.mrb[0].mxu0 %v2104
        %v2289 = vpop.f32.mrb[0].mxu0
        %v2290 = vadd.f32 0.0, %v2289
        %v2291 = vpop.f32.mrb[0].mxu0
        %v2292 = vpop.f32.mrb[0].mxu0
        %v2293 = vadd.f32 0.0, %v2292
        %v2294 = vpop.f32.mrb[0].mxu0
        %2295 = vmatprep.mubr.bf16.mxu0 0
        %2296 = vmatmul.mubr.bf16.gmra.mrb[0].mxu0 %v2105
        %v2297 = vpop.f32.mrb[0].mxu0
        %v2298 = vadd.f32 0.0, %v2297
        %v2299 = vpop.f32.mrb[0].mxu0
        %v2300 = vpop.f32.mrb[0].mxu0
        %v2301 = vadd.f32 0.0, %v2300
        %v2302 = vpop.f32.mrb[0].mxu0
        %2303 = vmatprep.mubr.bf16.mxu0 0
        %2304 = vmatmul.mubr.bf16.gmra.mrb[0].mxu0 %v2106
        %v2305 = vpop.f32.mrb[0].mxu0
        %v2306 = vadd.f32 0.0, %v2305
        %v2307 = vpop.f32.mrb[0].mxu0
        %v2308 = vpop.f32.mrb[0].mxu0
        %v2309 = vadd.f32 0.0, %v2308
        %v2310 = vpop.f32.mrb[0].mxu0
        %2311 = vmatprep.mubr.bf16.mxu0 0
        %2312 = vmatmul.mubr.bf16.gmra.mrb[0].mxu0 %v2107
        %v2313 = vpop.f32.mrb[0].mxu0
        %v2314 = vadd.f32 0.0, %v2313
        %v2315 = vpop.f32.mrb[0].mxu0
        %v2316 = vpop.f32.mrb[0].mxu0
        %v2317 = vadd.f32 0.0, %v2316
        %v2318 = vpop.f32.mrb[0].mxu0
        %2319 = vmatprep.mubr.bf16.mxu0 0
        %2320 = vmatmul.mubr.bf16.gmra.mrb[0].mxu0 %v2108
        %v2321 = vpop.f32.mrb[0].mxu0
        %v2322 = vadd.f32 0.0, %v2321
        %v2323 = vpop.f32.mrb[0].mxu0
        %v2324 = vpop.f32.mrb[0].mxu0
        %v2325 = vadd.f32 0.0, %v2324
        %v2326 = vpop.f32.mrb[0].mxu0
        %2327 = vmatprep.mubr.bf16.mxu0 0
        %2328 = vmatmul.mubr.bf16.gmra.mrb[0].mxu0 %v2109
        %v2329 = vpop.f32.mrb[0].mxu0
        %v2330 = vadd.f32 0.0, %v2329
        %v2331 = vpop.f32.mrb[0].mxu0
        %v2332 = vpop.f32.mrb[0].mxu0
        %v2333 = vadd.f32 0.0, %v2332
        %v2334 = vpop.f32.mrb[0].mxu0
        %2335 = vdwg.mxu0
        %v2336 = vadd.f32 %v2030, %v2210
        %v2337 = vadd.f32 %v2031, %v2213
        %v2338 = vadd.f32 %v2032, %v2218
        %v2339 = vadd.f32 %v2033, %v2221
        %v2340 = vadd.f32 %v2034, %v2226
        %v2341 = vadd.f32 %v2035, %v2229
        %v2342 = vadd.f32 %v2036, %v2234
        %v2343 = vadd.f32 %v2037, %v2237
        %v2344 = vadd.f32 %v2038, %v2242
        %v2345 = vadd.f32 %v2039, %v2245
        %v2346 = vadd.f32 %v2040, %v2250
        %v2347 = vadd.f32 %v2041, %v2253
        %v2348 = vadd.f32 %v2042, %v2258
        %v2349 = vadd.f32 %v2043, %v2261
        %v2350 = vadd.f32 %v2044, %v2266
        %v2351 = vadd.f32 %v2045, %v2269
        %v2352 = vadd.f32 %v2046, %v2274
        %v2353 = vadd.f32 %v2047, %v2277
        %v2354 = vadd.f32 %v2048, %v2282
        %v2355 = vadd.f32 %v2049, %v2285
        %v2356 = vadd.f32 %v2050, %v2290
        %v2357 = vadd.f32 %v2051, %v2293
        %v2358 = vadd.f32 %v2052, %v2298
        %v2359 = vadd.f32 %v2053, %v2301
        %v2360 = vadd.f32 %v2054, %v2306
        %v2361 = vadd.f32 %v2055, %v2309
        %v2362 = vadd.f32 %v2056, %v2314
        %v2363 = vadd.f32 %v2057, %v2317
        %v2364 = vadd.f32 %v2058, %v2322
        %v2365 = vadd.f32 %v2059, %v2325
        %v2366 = vadd.f32 %v2060, %v2330
        %v2367 = vadd.f32 %v2061, %v2333
        %v2368 = vld [vmem:[%s870 + $0x2] sm:$0xff]
        %v2369 = vld [vmem:[%s870 + $0xa] sm:$0xff]
        %v2370 = vld [vmem:[%s870 + $0x1a] sm:$0xff]
        %v2371 = vld [vmem:[%s870 + $0x22] sm:$0xff]
        %v2372 = vld [vmem:[%s870 + $0x32] sm:$0xff]
        %v2373 = vld [vmem:[%s870 + $0x3a] sm:$0xff]
        %v2374 = vld [vmem:[%s870 + $0x4a] sm:$0xff]
        %v2375 = vld [vmem:[%s870 + $0x52] sm:$0xff]
        %v2376 = vld [vmem:[%s870 + $0x62] sm:$0xff]
        %v2377 = vld [vmem:[%s870 + $0x6a] sm:$0xff]
        %v2378 = vld [vmem:[%s870 + $0x7a] sm:$0xff]
        %v2379 = vld [vmem:[%s870 + $0x82] sm:$0xff]
        %v2380 = vld [vmem:[%s870 + $0x92] sm:$0xff]
        %v2381 = vld [vmem:[%s870 + $0x9a] sm:$0xff]
        %v2382 = vld [vmem:[%s870 + $0xaa] sm:$0xff]
        %v2383 = vld [vmem:[%s870 + $0xb2] sm:$0xff]
        %v2384 = vld [vmem:[%s870 + $0xc2] sm:$0xff]
        %v2385 = vld [vmem:[%s870 + $0xca] sm:$0xff]
        %v2386 = vld [vmem:[%s870 + $0xda] sm:$0xff]
        %v2387 = vld [vmem:[%s870 + $0xe2] sm:$0xff]
        %v2388 = vld [vmem:[%s870 + $0xf2] sm:$0xff]
        %v2389 = vld [vmem:[%s870 + $0xfa] sm:$0xff]
        %v2390 = vld [vmem:[%s870 + $0x10a] sm:$0xff]
        %v2391 = vld [vmem:[%s870 + $0x112] sm:$0xff]
        %v2392 = vld [vmem:[%s870 + $0x122] sm:$0xff]
        %v2393 = vld [vmem:[%s870 + $0x12a] sm:$0xff]
        %v2394 = vld [vmem:[%s870 + $0x13a] sm:$0xff]
        %v2395 = vld [vmem:[%s870 + $0x142] sm:$0xff]
        %v2396 = vld [vmem:[%s870 + $0x152] sm:$0xff]
        %v2397 = vld [vmem:[%s870 + $0x15a] sm:$0xff]
        %v2398 = vld [vmem:[%s870 + $0x16a] sm:$0xff]
        %v2399 = vld [vmem:[%s870 + $0x172] sm:$0xff]
        %v2400 = vpack.c.bf16 %v2369, %v2368
        %v2401 = vpack.c.bf16 %v2371, %v2370
        %v2402 = vpack.c.bf16 %v2373, %v2372
        %v2403 = vpack.c.bf16 %v2375, %v2374
        %v2404 = vpack.c.bf16 %v2377, %v2376
        %v2405 = vpack.c.bf16 %v2379, %v2378
        %v2406 = vpack.c.bf16 %v2381, %v2380
        %v2407 = vpack.c.bf16 %v2383, %v2382
        %v2408 = vpack.c.bf16 %v2385, %v2384
        %v2409 = vpack.c.bf16 %v2387, %v2386
        %v2410 = vpack.c.bf16 %v2389, %v2388
        %v2411 = vpack.c.bf16 %v2391, %v2390
        %v2412 = vpack.c.bf16 %v2393, %v2392
        %v2413 = vpack.c.bf16 %v2395, %v2394
        %v2414 = vpack.c.bf16 %v2397, %v2396
        %v2415 = vpack.c.bf16 %v2399, %v2398
        %s2416 = scalar_lea.vmem [#allocation3], 320
        %v2417 = vld [vmem:[%s2416] sm:$0xf]
        %v2418 = vld [vmem:[%s2416 + $0x4] sm:$0xf]
        %v2419 = vld [vmem:[%s2416 + $0x8] sm:$0xf]
        %v2420 = vld [vmem:[%s2416 + $0xc] sm:$0xf]
        %v2421 = vld [vmem:[%s2416 + $0x10] sm:$0xf]
        %v2422 = vld [vmem:[%s2416 + $0x14] sm:$0xf]
        %v2423 = vld [vmem:[%s2416 + $0x18] sm:$0xf]
        %v2424 = vld [vmem:[%s2416 + $0x1c] sm:$0xf]
        %v2425 = vld [vmem:[%s2416 + $0x20] sm:$0xf]
        %v2426 = vld [vmem:[%s2416 + $0x24] sm:$0xf]
        %v2427 = vld [vmem:[%s2416 + $0x28] sm:$0xf]
        %v2428 = vld [vmem:[%s2416 + $0x2c] sm:$0xf]
        %v2429 = vld [vmem:[%s2416 + $0x30] sm:$0xf]
        %v2430 = vld [vmem:[%s2416 + $0x34] sm:$0xf]
        %v2431 = vld [vmem:[%s2416 + $0x38] sm:$0xf]
        %v2432 = vld [vmem:[%s2416 + $0x3c] sm:$0xf]
        %v2449 = vunpack.c.l.b16 %v2417
        %v2450 = vunpack.c.l.b16 %v2418
        %v2451 = vunpack.c.l.b16 %v2419
        %v2452 = vunpack.c.l.b16 %v2420
        %v2453 = vunpack.c.l.b16 %v2421
        %v2454 = vunpack.c.l.b16 %v2422
        %v2455 = vunpack.c.l.b16 %v2423
        %v2456 = vunpack.c.l.b16 %v2424
        %v2457 = vunpack.c.l.b16 %v2425
        %v2458 = vunpack.c.l.b16 %v2426
        %v2459 = vunpack.c.l.b16 %v2427
        %v2460 = vunpack.c.l.b16 %v2428
        %v2461 = vunpack.c.l.b16 %v2429
        %v2462 = vunpack.c.l.b16 %v2430
        %v2463 = vunpack.c.l.b16 %v2431
        %v2464 = vunpack.c.l.b16 %v2432
        %v2465 = vpack.c.b16 %v2450, %v2449
        %v2466 = vpack.c.b16 %v2452, %v2451
        %v2467 = vpack.c.b16 %v2454, %v2453
        %v2468 = vpack.c.b16 %v2456, %v2455
        %v2469 = vpack.c.b16 %v2458, %v2457
        %v2470 = vpack.c.b16 %v2460, %v2459
        %v2471 = vpack.c.b16 %v2462, %v2461
        %v2472 = vpack.c.b16 %v2464, %v2463
        %2481 = vmatprep.subr.bf16.mxu0 0
        %2482 = vmatpush1.bf16.msra.mxu0 %v2465
        %2483 = vmatprep.subr.bf16.mxu0 0
        %2484 = vmatpush1.bf16.msra.mxu0 %v2466
        %2485 = vmatprep.subr.bf16.mxu0 0
        %2486 = vmatpush1.bf16.msra.mxu0 %v2467
        %2487 = vmatprep.subr.bf16.mxu0 0
        %2488 = vmatpush1.bf16.msra.mxu0 %v2468
        %2489 = vmatprep.subr.bf16.mxu0 0
        %2490 = vmatpush1.bf16.msra.mxu0 %v2469
        %2491 = vmatprep.subr.bf16.mxu0 0
        %2492 = vmatpush1.bf16.msra.mxu0 %v2470
        %2493 = vmatprep.subr.bf16.mxu0 0
        %2494 = vmatpush1.bf16.msra.mxu0 %v2471
        %2495 = vmatprep.subr.bf16.mxu0 0
        %2496 = vmatpush1.bf16.msra.mxu0 %v2472
        %2497 = vmatprep.subr.bf16.mxu0 0
        %2498 = vmatpush1.bf16.msra.mxu0 0
        %2499 = vmatprep.subr.bf16.mxu0 0
        %2500 = vmatpush1.bf16.msra.mxu0 0
        %2501 = vmatprep.subr.bf16.mxu0 0
        %2502 = vmatpush1.bf16.msra.mxu0 0
        %2503 = vmatprep.subr.bf16.mxu0 0
        %2504 = vmatpush1.bf16.msra.mxu0 0
        %2505 = vmatprep.subr.bf16.mxu0 0
        %2506 = vmatpush1.bf16.msra.mxu0 0
        %2507 = vmatprep.subr.bf16.mxu0 0
        %2508 = vmatpush1.bf16.msra.mxu0 0
        %2509 = vmatprep.subr.bf16.mxu0 0
        %2510 = vmatpush1.bf16.msra.mxu0 0
        %2511 = vmatprep.subr.bf16.mxu0 0
        %2512 = vmatpush1.bf16.msra.mxu0 0
        %2513 = vmatprep.mubr.bf16.mxu0 0
        %2514 = vmatmul.mubr.bf16.gmra.mrb[0].mxu0 %v2400
        %v2515 = vpop.f32.mrb[0].mxu0
        %v2516 = vadd.f32 0.0, %v2515
        %v2517 = vpop.f32.mrb[0].mxu0
        %v2518 = vpop.f32.mrb[0].mxu0
        %v2519 = vadd.f32 0.0, %v2518
        %v2520 = vpop.f32.mrb[0].mxu0
        %2521 = vmatprep.mubr.bf16.mxu0 0
        %2522 = vmatmul.mubr.bf16.gmra.mrb[0].mxu0 %v2401
        %v2523 = vpop.f32.mrb[0].mxu0
        %v2524 = vadd.f32 0.0, %v2523
        %v2525 = vpop.f32.mrb[0].mxu0
        %v2526 = vpop.f32.mrb[0].mxu0
        %v2527 = vadd.f32 0.0, %v2526
        %v2528 = vpop.f32.mrb[0].mxu0
        %2529 = vmatprep.mubr.bf16.mxu0 0
        %2530 = vmatmul.mubr.bf16.gmra.mrb[0].mxu0 %v2402
        %v2531 = vpop.f32.mrb[0].mxu0
        %v2532 = vadd.f32 0.0, %v2531
        %v2533 = vpop.f32.mrb[0].mxu0
        %v2534 = vpop.f32.mrb[0].mxu0
        %v2535 = vadd.f32 0.0, %v2534
        %v2536 = vpop.f32.mrb[0].mxu0
        %2537 = vmatprep.mubr.bf16.mxu0 0
        %2538 = vmatmul.mubr.bf16.gmra.mrb[0].mxu0 %v2403
        %v2539 = vpop.f32.mrb[0].mxu0
        %v2540 = vadd.f32 0.0, %v2539
        %v2541 = vpop.f32.mrb[0].mxu0
        %v2542 = vpop.f32.mrb[0].mxu0
        %v2543 = vadd.f32 0.0, %v2542
        %v2544 = vpop.f32.mrb[0].mxu0
        %2545 = vmatprep.mubr.bf16.mxu0 0
        %2546 = vmatmul.mubr.bf16.gmra.mrb[0].mxu0 %v2404
        %v2547 = vpop.f32.mrb[0].mxu0
        %v2548 = vadd.f32 0.0, %v2547
        %v2549 = vpop.f32.mrb[0].mxu0
        %v2550 = vpop.f32.mrb[0].mxu0
        %v2551 = vadd.f32 0.0, %v2550
        %v2552 = vpop.f32.mrb[0].mxu0
        %2553 = vmatprep.mubr.bf16.mxu0 0
        %2554 = vmatmul.mubr.bf16.gmra.mrb[0].mxu0 %v2405
        %v2555 = vpop.f32.mrb[0].mxu0
        %v2556 = vadd.f32 0.0, %v2555
        %v2557 = vpop.f32.mrb[0].mxu0
        %v2558 = vpop.f32.mrb[0].mxu0
        %v2559 = vadd.f32 0.0, %v2558
        %v2560 = vpop.f32.mrb[0].mxu0
        %2561 = vmatprep.mubr.bf16.mxu0 0
        %2562 = vmatmul.mubr.bf16.gmra.mrb[0].mxu0 %v2406
        %v2563 = vpop.f32.mrb[0].mxu0
        %v2564 = vadd.f32 0.0, %v2563
        %v2565 = vpop.f32.mrb[0].mxu0
        %v2566 = vpop.f32.mrb[0].mxu0
        %v2567 = vadd.f32 0.0, %v2566
        %v2568 = vpop.f32.mrb[0].mxu0
        %2569 = vmatprep.mubr.bf16.mxu0 0
        %2570 = vmatmul.mubr.bf16.gmra.mrb[0].mxu0 %v2407
        %v2571 = vpop.f32.mrb[0].mxu0
        %v2572 = vadd.f32 0.0, %v2571
        %v2573 = vpop.f32.mrb[0].mxu0
        %v2574 = vpop.f32.mrb[0].mxu0
        %v2575 = vadd.f32 0.0, %v2574
        %v2576 = vpop.f32.mrb[0].mxu0
        %2577 = vmatprep.mubr.bf16.mxu0 0
        %2578 = vmatmul.mubr.bf16.gmra.mrb[0].mxu0 %v2408
        %v2579 = vpop.f32.mrb[0].mxu0
        %v2580 = vadd.f32 0.0, %v2579
        %v2581 = vpop.f32.mrb[0].mxu0
        %v2582 = vpop.f32.mrb[0].mxu0
        %v2583 = vadd.f32 0.0, %v2582
        %v2584 = vpop.f32.mrb[0].mxu0
        %2585 = vmatprep.mubr.bf16.mxu0 0
        %2586 = vmatmul.mubr.bf16.gmra.mrb[0].mxu0 %v2409
        %v2587 = vpop.f32.mrb[0].mxu0
        %v2588 = vadd.f32 0.0, %v2587
        %v2589 = vpop.f32.mrb[0].mxu0
        %v2590 = vpop.f32.mrb[0].mxu0
        %v2591 = vadd.f32 0.0, %v2590
        %v2592 = vpop.f32.mrb[0].mxu0
        %2593 = vmatprep.mubr.bf16.mxu0 0
        %2594 = vmatmul.mubr.bf16.gmra.mrb[0].mxu0 %v2410
        %v2595 = vpop.f32.mrb[0].mxu0
        %v2596 = vadd.f32 0.0, %v2595
        %v2597 = vpop.f32.mrb[0].mxu0
        %v2598 = vpop.f32.mrb[0].mxu0
        %v2599 = vadd.f32 0.0, %v2598
        %v2600 = vpop.f32.mrb[0].mxu0
        %2601 = vmatprep.mubr.bf16.mxu0 0
        %2602 = vmatmul.mubr.bf16.gmra.mrb[0].mxu0 %v2411
        %v2603 = vpop.f32.mrb[0].mxu0
        %v2604 = vadd.f32 0.0, %v2603
        %v2605 = vpop.f32.mrb[0].mxu0
        %v2606 = vpop.f32.mrb[0].mxu0
        %v2607 = vadd.f32 0.0, %v2606
        %v2608 = vpop.f32.mrb[0].mxu0
        %2609 = vmatprep.mubr.bf16.mxu0 0
        %2610 = vmatmul.mubr.bf16.gmra.mrb[0].mxu0 %v2412
        %v2611 = vpop.f32.mrb[0].mxu0
        %v2612 = vadd.f32 0.0, %v2611
        %v2613 = vpop.f32.mrb[0].mxu0
        %v2614 = vpop.f32.mrb[0].mxu0
        %v2615 = vadd.f32 0.0, %v2614
        %v2616 = vpop.f32.mrb[0].mxu0
        %2617 = vmatprep.mubr.bf16.mxu0 0
        %2618 = vmatmul.mubr.bf16.gmra.mrb[0].mxu0 %v2413
        %v2619 = vpop.f32.mrb[0].mxu0
        %v2620 = vadd.f32 0.0, %v2619
        %v2621 = vpop.f32.mrb[0].mxu0
        %v2622 = vpop.f32.mrb[0].mxu0
        %v2623 = vadd.f32 0.0, %v2622
        %v2624 = vpop.f32.mrb[0].mxu0
        %2625 = vmatprep.mubr.bf16.mxu0 0
        %2626 = vmatmul.mubr.bf16.gmra.mrb[0].mxu0 %v2414
        %v2627 = vpop.f32.mrb[0].mxu0
        %v2628 = vadd.f32 0.0, %v2627
        %v2629 = vpop.f32.mrb[0].mxu0
        %v2630 = vpop.f32.mrb[0].mxu0
        %v2631 = vadd.f32 0.0, %v2630
        %v2632 = vpop.f32.mrb[0].mxu0
        %2633 = vmatprep.mubr.bf16.mxu0 0
        %2634 = vmatmul.mubr.bf16.gmra.mrb[0].mxu0 %v2415
        %v2635 = vpop.f32.mrb[0].mxu0
        %v2636 = vadd.f32 0.0, %v2635
        %v2637 = vpop.f32.mrb[0].mxu0
        %v2638 = vpop.f32.mrb[0].mxu0
        %v2639 = vadd.f32 0.0, %v2638
        %v2640 = vpop.f32.mrb[0].mxu0
        %2641 = vdwg.mxu0
        %v2642 = vadd.f32 %v2336, %v2516
        %v2643 = vadd.f32 %v2337, %v2519
        %v2644 = vadd.f32 %v2338, %v2524
        %v2645 = vadd.f32 %v2339, %v2527
        %v2646 = vadd.f32 %v2340, %v2532
        %v2647 = vadd.f32 %v2341, %v2535
        %v2648 = vadd.f32 %v2342, %v2540
        %v2649 = vadd.f32 %v2343, %v2543
        %v2650 = vadd.f32 %v2344, %v2548
        %v2651 = vadd.f32 %v2345, %v2551
        %v2652 = vadd.f32 %v2346, %v2556
        %v2653 = vadd.f32 %v2347, %v2559
        %v2654 = vadd.f32 %v2348, %v2564
        %v2655 = vadd.f32 %v2349, %v2567
        %v2656 = vadd.f32 %v2350, %v2572
        %v2657 = vadd.f32 %v2351, %v2575
        %v2658 = vadd.f32 %v2352, %v2580
        %v2659 = vadd.f32 %v2353, %v2583
        %v2660 = vadd.f32 %v2354, %v2588
        %v2661 = vadd.f32 %v2355, %v2591
        %v2662 = vadd.f32 %v2356, %v2596
        %v2663 = vadd.f32 %v2357, %v2599
        %v2664 = vadd.f32 %v2358, %v2604
        %v2665 = vadd.f32 %v2359, %v2607
        %v2666 = vadd.f32 %v2360, %v2612
        %v2667 = vadd.f32 %v2361, %v2615
        %v2668 = vadd.f32 %v2362, %v2620
        %v2669 = vadd.f32 %v2363, %v2623
        %v2670 = vadd.f32 %v2364, %v2628
        %v2671 = vadd.f32 %v2365, %v2631
        %v2672 = vadd.f32 %v2366, %v2636
        %v2673 = vadd.f32 %v2367, %v2639
        %s2674 = scalar_lea.vmem [#allocation2], 48
        %v2675 = vld [vmem:[%s2674] sm:$0xff]
        %v2676 = vld [vmem:[%s2674 + $0x8] sm:$0xff]
        %v2677 = vld [vmem:[%s2674 + $0x18] sm:$0xff]
        %v2678 = vld [vmem:[%s2674 + $0x20] sm:$0xff]
        %v2679 = vld [vmem:[%s2674 + $0x30] sm:$0xff]
        %v2680 = vld [vmem:[%s2674 + $0x38] sm:$0xff]
        %v2681 = vld [vmem:[%s2674 + $0x48] sm:$0xff]
        %v2682 = vld [vmem:[%s2674 + $0x50] sm:$0xff]
        %v2683 = vld [vmem:[%s2674 + $0x60] sm:$0xff]
        %v2684 = vld [vmem:[%s2674 + $0x68] sm:$0xff]
        %v2685 = vld [vmem:[%s2674 + $0x78] sm:$0xff]
        %v2686 = vld [vmem:[%s2674 + $0x80] sm:$0xff]
        %v2687 = vld [vmem:[%s2674 + $0x90] sm:$0xff]
        %v2688 = vld [vmem:[%s2674 + $0x98] sm:$0xff]
        %v2689 = vld [vmem:[%s2674 + $0xa8] sm:$0xff]
        %v2690 = vld [vmem:[%s2674 + $0xb0] sm:$0xff]
        %v2691 = vld [vmem:[%s2674 + $0xc0] sm:$0xff]
        %v2692 = vld [vmem:[%s2674 + $0xc8] sm:$0xff]
        %v2693 = vld [vmem:[%s2674 + $0xd8] sm:$0xff]
        %v2694 = vld [vmem:[%s2674 + $0xe0] sm:$0xff]
        %v2695 = vld [vmem:[%s2674 + $0xf0] sm:$0xff]
        %v2696 = vld [vmem:[%s2674 + $0xf8] sm:$0xff]
        %v2697 = vld [vmem:[%s2674 + $0x108] sm:$0xff]
        %v2698 = vld [vmem:[%s2674 + $0x110] sm:$0xff]
        %v2699 = vld [vmem:[%s2674 + $0x120] sm:$0xff]
        %v2700 = vld [vmem:[%s2674 + $0x128] sm:$0xff]
        %v2701 = vld [vmem:[%s2674 + $0x138] sm:$0xff]
        %v2702 = vld [vmem:[%s2674 + $0x140] sm:$0xff]
        %v2703 = vld [vmem:[%s2674 + $0x150] sm:$0xff]
        %v2704 = vld [vmem:[%s2674 + $0x158] sm:$0xff]
        %v2705 = vld [vmem:[%s2674 + $0x168] sm:$0xff]
        %v2706 = vld [vmem:[%s2674 + $0x170] sm:$0xff]
        %v2707 = vpack.c.bf16 %v2676, %v2675
        %v2708 = vpack.c.bf16 %v2678, %v2677
        %v2709 = vpack.c.bf16 %v2680, %v2679
        %v2710 = vpack.c.bf16 %v2682, %v2681
        %v2711 = vpack.c.bf16 %v2684, %v2683
        %v2712 = vpack.c.bf16 %v2686, %v2685
        %v2713 = vpack.c.bf16 %v2688, %v2687
        %v2714 = vpack.c.bf16 %v2690, %v2689
        %v2715 = vpack.c.bf16 %v2692, %v2691
        %v2716 = vpack.c.bf16 %v2694, %v2693
        %v2717 = vpack.c.bf16 %v2696, %v2695
        %v2718 = vpack.c.bf16 %v2698, %v2697
        %v2719 = vpack.c.bf16 %v2700, %v2699
        %v2720 = vpack.c.bf16 %v2702, %v2701
        %v2721 = vpack.c.bf16 %v2704, %v2703
        %v2722 = vpack.c.bf16 %v2706, %v2705
        %s2723 = scalar_lea.vmem [#allocation3], 384
        %v2724 = vld [vmem:[%s2723] sm:$0xf]
        %v2725 = vld [vmem:[%s2723 + $0x4] sm:$0xf]
        %v2726 = vld [vmem:[%s2723 + $0x8] sm:$0xf]
        %v2727 = vld [vmem:[%s2723 + $0xc] sm:$0xf]
        %v2728 = vld [vmem:[%s2723 + $0x10] sm:$0xf]
        %v2729 = vld [vmem:[%s2723 + $0x14] sm:$0xf]
        %v2730 = vld [vmem:[%s2723 + $0x18] sm:$0xf]
        %v2731 = vld [vmem:[%s2723 + $0x1c] sm:$0xf]
        %v2732 = vld [vmem:[%s2723 + $0x20] sm:$0xf]
        %v2733 = vld [vmem:[%s2723 + $0x24] sm:$0xf]
        %v2734 = vld [vmem:[%s2723 + $0x28] sm:$0xf]
        %v2735 = vld [vmem:[%s2723 + $0x2c] sm:$0xf]
        %v2736 = vld [vmem:[%s2723 + $0x30] sm:$0xf]
        %v2737 = vld [vmem:[%s2723 + $0x34] sm:$0xf]
        %v2738 = vld [vmem:[%s2723 + $0x38] sm:$0xf]
        %v2739 = vld [vmem:[%s2723 + $0x3c] sm:$0xf]
        %v2756 = vunpack.c.l.b16 %v2724
        %v2757 = vunpack.c.l.b16 %v2725
        %v2758 = vunpack.c.l.b16 %v2726
        %v2759 = vunpack.c.l.b16 %v2727
        %v2760 = vunpack.c.l.b16 %v2728
        %v2761 = vunpack.c.l.b16 %v2729
        %v2762 = vunpack.c.l.b16 %v2730
        %v2763 = vunpack.c.l.b16 %v2731
        %v2764 = vunpack.c.l.b16 %v2732
        %v2765 = vunpack.c.l.b16 %v2733
        %v2766 = vunpack.c.l.b16 %v2734
        %v2767 = vunpack.c.l.b16 %v2735
        %v2768 = vunpack.c.l.b16 %v2736
        %v2769 = vunpack.c.l.b16 %v2737
        %v2770 = vunpack.c.l.b16 %v2738
        %v2771 = vunpack.c.l.b16 %v2739
        %v2772 = vpack.c.b16 %v2757, %v2756
        %v2773 = vpack.c.b16 %v2759, %v2758
        %v2774 = vpack.c.b16 %v2761, %v2760
        %v2775 = vpack.c.b16 %v2763, %v2762
        %v2776 = vpack.c.b16 %v2765, %v2764
        %v2777 = vpack.c.b16 %v2767, %v2766
        %v2778 = vpack.c.b16 %v2769, %v2768
        %v2779 = vpack.c.b16 %v2771, %v2770
        %2788 = vmatprep.subr.bf16.mxu0 0
        %2789 = vmatpush1.bf16.msra.mxu0 %v2772
        %2790 = vmatprep.subr.bf16.mxu0 0
        %2791 = vmatpush1.bf16.msra.mxu0 %v2773
        %2792 = vmatprep.subr.bf16.mxu0 0
        %2793 = vmatpush1.bf16.msra.mxu0 %v2774
        %2794 = vmatprep.subr.bf16.mxu0 0
        %2795 = vmatpush1.bf16.msra.mxu0 %v2775
        %2796 = vmatprep.subr.bf16.mxu0 0
        %2797 = vmatpush1.bf16.msra.mxu0 %v2776
        %2798 = vmatprep.subr.bf16.mxu0 0
        %2799 = vmatpush1.bf16.msra.mxu0 %v2777
        %2800 = vmatprep.subr.bf16.mxu0 0
        %2801 = vmatpush1.bf16.msra.mxu0 %v2778
        %2802 = vmatprep.subr.bf16.mxu0 0
        %2803 = vmatpush1.bf16.msra.mxu0 %v2779
        %2804 = vmatprep.subr.bf16.mxu0 0
        %2805 = vmatpush1.bf16.msra.mxu0 0
        %2806 = vmatprep.subr.bf16.mxu0 0
        %2807 = vmatpush1.bf16.msra.mxu0 0
        %2808 = vmatprep.subr.bf16.mxu0 0
        %2809 = vmatpush1.bf16.msra.mxu0 0
        %2810 = vmatprep.subr.bf16.mxu0 0
        %2811 = vmatpush1.bf16.msra.mxu0 0
        %2812 = vmatprep.subr.bf16.mxu0 0
        %2813 = vmatpush1.bf16.msra.mxu0 0
        %2814 = vmatprep.subr.bf16.mxu0 0
        %2815 = vmatpush1.bf16.msra.mxu0 0
        %2816 = vmatprep.subr.bf16.mxu0 0
        %2817 = vmatpush1.bf16.msra.mxu0 0
        %2818 = vmatprep.subr.bf16.mxu0 0
        %2819 = vmatpush1.bf16.msra.mxu0 0
        %2820 = vmatprep.mubr.bf16.mxu0 0
        %2821 = vmatmul.mubr.bf16.gmra.mrb[0].mxu0 %v2707
        %v2822 = vpop.f32.mrb[0].mxu0
        %v2823 = vadd.f32 0.0, %v2822
        %v2824 = vpop.f32.mrb[0].mxu0
        %v2825 = vpop.f32.mrb[0].mxu0
        %v2826 = vadd.f32 0.0, %v2825
        %v2827 = vpop.f32.mrb[0].mxu0
        %2828 = vmatprep.mubr.bf16.mxu0 0
        %2829 = vmatmul.mubr.bf16.gmra.mrb[0].mxu0 %v2708
        %v2830 = vpop.f32.mrb[0].mxu0
        %v2831 = vadd.f32 0.0, %v2830
        %v2832 = vpop.f32.mrb[0].mxu0
        %v2833 = vpop.f32.mrb[0].mxu0
        %v2834 = vadd.f32 0.0, %v2833
        %v2835 = vpop.f32.mrb[0].mxu0
        %2836 = vmatprep.mubr.bf16.mxu0 0
        %2837 = vmatmul.mubr.bf16.gmra.mrb[0].mxu0 %v2709
        %v2838 = vpop.f32.mrb[0].mxu0
        %v2839 = vadd.f32 0.0, %v2838
        %v2840 = vpop.f32.mrb[0].mxu0
        %v2841 = vpop.f32.mrb[0].mxu0
        %v2842 = vadd.f32 0.0, %v2841
        %v2843 = vpop.f32.mrb[0].mxu0
        %2844 = vmatprep.mubr.bf16.mxu0 0
        %2845 = vmatmul.mubr.bf16.gmra.mrb[0].mxu0 %v2710
        %v2846 = vpop.f32.mrb[0].mxu0
        %v2847 = vadd.f32 0.0, %v2846
        %v2848 = vpop.f32.mrb[0].mxu0
        %v2849 = vpop.f32.mrb[0].mxu0
        %v2850 = vadd.f32 0.0, %v2849
        %v2851 = vpop.f32.mrb[0].mxu0
        %2852 = vmatprep.mubr.bf16.mxu0 0
        %2853 = vmatmul.mubr.bf16.gmra.mrb[0].mxu0 %v2711
        %v2854 = vpop.f32.mrb[0].mxu0
        %v2855 = vadd.f32 0.0, %v2854
        %v2856 = vpop.f32.mrb[0].mxu0
        %v2857 = vpop.f32.mrb[0].mxu0
        %v2858 = vadd.f32 0.0, %v2857
        %v2859 = vpop.f32.mrb[0].mxu0
        %2860 = vmatprep.mubr.bf16.mxu0 0
        %2861 = vmatmul.mubr.bf16.gmra.mrb[0].mxu0 %v2712
        %v2862 = vpop.f32.mrb[0].mxu0
        %v2863 = vadd.f32 0.0, %v2862
        %v2864 = vpop.f32.mrb[0].mxu0
        %v2865 = vpop.f32.mrb[0].mxu0
        %v2866 = vadd.f32 0.0, %v2865
        %v2867 = vpop.f32.mrb[0].mxu0
        %2868 = vmatprep.mubr.bf16.mxu0 0
        %2869 = vmatmul.mubr.bf16.gmra.mrb[0].mxu0 %v2713
        %v2870 = vpop.f32.mrb[0].mxu0
        %v2871 = vadd.f32 0.0, %v2870
        %v2872 = vpop.f32.mrb[0].mxu0
        %v2873 = vpop.f32.mrb[0].mxu0
        %v2874 = vadd.f32 0.0, %v2873
        %v2875 = vpop.f32.mrb[0].mxu0
        %2876 = vmatprep.mubr.bf16.mxu0 0
        %2877 = vmatmul.mubr.bf16.gmra.mrb[0].mxu0 %v2714
        %v2878 = vpop.f32.mrb[0].mxu0
        %v2879 = vadd.f32 0.0, %v2878
        %v2880 = vpop.f32.mrb[0].mxu0
        %v2881 = vpop.f32.mrb[0].mxu0
        %v2882 = vadd.f32 0.0, %v2881
        %v2883 = vpop.f32.mrb[0].mxu0
        %2884 = vmatprep.mubr.bf16.mxu0 0
        %2885 = vmatmul.mubr.bf16.gmra.mrb[0].mxu0 %v2715
        %v2886 = vpop.f32.mrb[0].mxu0
        %v2887 = vadd.f32 0.0, %v2886
        %v2888 = vpop.f32.mrb[0].mxu0
        %v2889 = vpop.f32.mrb[0].mxu0
        %v2890 = vadd.f32 0.0, %v2889
        %v2891 = vpop.f32.mrb[0].mxu0
        %2892 = vmatprep.mubr.bf16.mxu0 0
        %2893 = vmatmul.mubr.bf16.gmra.mrb[0].mxu0 %v2716
        %v2894 = vpop.f32.mrb[0].mxu0
        %v2895 = vadd.f32 0.0, %v2894
        %v2896 = vpop.f32.mrb[0].mxu0
        %v2897 = vpop.f32.mrb[0].mxu0
        %v2898 = vadd.f32 0.0, %v2897
        %v2899 = vpop.f32.mrb[0].mxu0
        %2900 = vmatprep.mubr.bf16.mxu0 0
        %2901 = vmatmul.mubr.bf16.gmra.mrb[0].mxu0 %v2717
        %v2902 = vpop.f32.mrb[0].mxu0
        %v2903 = vadd.f32 0.0, %v2902
        %v2904 = vpop.f32.mrb[0].mxu0
        %v2905 = vpop.f32.mrb[0].mxu0
        %v2906 = vadd.f32 0.0, %v2905
        %v2907 = vpop.f32.mrb[0].mxu0
        %2908 = vmatprep.mubr.bf16.mxu0 0
        %2909 = vmatmul.mubr.bf16.gmra.mrb[0].mxu0 %v2718
        %v2910 = vpop.f32.mrb[0].mxu0
        %v2911 = vadd.f32 0.0, %v2910
        %v2912 = vpop.f32.mrb[0].mxu0
        %v2913 = vpop.f32.mrb[0].mxu0
        %v2914 = vadd.f32 0.0, %v2913
        %v2915 = vpop.f32.mrb[0].mxu0
        %2916 = vmatprep.mubr.bf16.mxu0 0
        %2917 = vmatmul.mubr.bf16.gmra.mrb[0].mxu0 %v2719
        %v2918 = vpop.f32.mrb[0].mxu0
        %v2919 = vadd.f32 0.0, %v2918
        %v2920 = vpop.f32.mrb[0].mxu0
        %v2921 = vpop.f32.mrb[0].mxu0
        %v2922 = vadd.f32 0.0, %v2921
        %v2923 = vpop.f32.mrb[0].mxu0
        %2924 = vmatprep.mubr.bf16.mxu0 0
        %2925 = vmatmul.mubr.bf16.gmra.mrb[0].mxu0 %v2720
        %v2926 = vpop.f32.mrb[0].mxu0
        %v2927 = vadd.f32 0.0, %v2926
        %v2928 = vpop.f32.mrb[0].mxu0
        %v2929 = vpop.f32.mrb[0].mxu0
        %v2930 = vadd.f32 0.0, %v2929
        %v2931 = vpop.f32.mrb[0].mxu0
        %2932 = vmatprep.mubr.bf16.mxu0 0
        %2933 = vmatmul.mubr.bf16.gmra.mrb[0].mxu0 %v2721
        %v2934 = vpop.f32.mrb[0].mxu0
        %v2935 = vadd.f32 0.0, %v2934
        %v2936 = vpop.f32.mrb[0].mxu0
        %v2937 = vpop.f32.mrb[0].mxu0
        %v2938 = vadd.f32 0.0, %v2937
        %v2939 = vpop.f32.mrb[0].mxu0
        %2940 = vmatprep.mubr.bf16.mxu0 0
        %2941 = vmatmul.mubr.bf16.gmra.mrb[0].mxu0 %v2722
        %v2942 = vpop.f32.mrb[0].mxu0
        %v2943 = vadd.f32 0.0, %v2942
        %v2944 = vpop.f32.mrb[0].mxu0
        %v2945 = vpop.f32.mrb[0].mxu0
        %v2946 = vadd.f32 0.0, %v2945
        %v2947 = vpop.f32.mrb[0].mxu0
        %2948 = vdwg.mxu0
        %v2949 = vadd.f32 %v2642, %v2823
        %v2950 = vadd.f32 %v2643, %v2826
        %v2951 = vadd.f32 %v2644, %v2831
        %v2952 = vadd.f32 %v2645, %v2834
        %v2953 = vadd.f32 %v2646, %v2839
        %v2954 = vadd.f32 %v2647, %v2842
        %v2955 = vadd.f32 %v2648, %v2847
        %v2956 = vadd.f32 %v2649, %v2850
        %v2957 = vadd.f32 %v2650, %v2855
        %v2958 = vadd.f32 %v2651, %v2858
        %v2959 = vadd.f32 %v2652, %v2863
        %v2960 = vadd.f32 %v2653, %v2866
        %v2961 = vadd.f32 %v2654, %v2871
        %v2962 = vadd.f32 %v2655, %v2874
        %v2963 = vadd.f32 %v2656, %v2879
        %v2964 = vadd.f32 %v2657, %v2882
        %v2965 = vadd.f32 %v2658, %v2887
        %v2966 = vadd.f32 %v2659, %v2890
        %v2967 = vadd.f32 %v2660, %v2895
        %v2968 = vadd.f32 %v2661, %v2898
        %v2969 = vadd.f32 %v2662, %v2903
        %v2970 = vadd.f32 %v2663, %v2906
        %v2971 = vadd.f32 %v2664, %v2911
        %v2972 = vadd.f32 %v2665, %v2914
        %v2973 = vadd.f32 %v2666, %v2919
        %v2974 = vadd.f32 %v2667, %v2922
        %v2975 = vadd.f32 %v2668, %v2927
        %v2976 = vadd.f32 %v2669, %v2930
        %v2977 = vadd.f32 %v2670, %v2935
        %v2978 = vadd.f32 %v2671, %v2938
        %v2979 = vadd.f32 %v2672, %v2943
        %v2980 = vadd.f32 %v2673, %v2946
        %v2981 = vld [vmem:[%s2674 + $0x1] sm:$0xff]
        %v2982 = vld [vmem:[%s2674 + $0x9] sm:$0xff]
        %v2983 = vld [vmem:[%s2674 + $0x19] sm:$0xff]
        %v2984 = vld [vmem:[%s2674 + $0x21] sm:$0xff]
        %v2985 = vld [vmem:[%s2674 + $0x31] sm:$0xff]
        %v2986 = vld [vmem:[%s2674 + $0x39] sm:$0xff]
        %v2987 = vld [vmem:[%s2674 + $0x49] sm:$0xff]
        %v2988 = vld [vmem:[%s2674 + $0x51] sm:$0xff]
        %v2989 = vld [vmem:[%s2674 + $0x61] sm:$0xff]
        %v2990 = vld [vmem:[%s2674 + $0x69] sm:$0xff]
        %v2991 = vld [vmem:[%s2674 + $0x79] sm:$0xff]
        %v2992 = vld [vmem:[%s2674 + $0x81] sm:$0xff]
        %v2993 = vld [vmem:[%s2674 + $0x91] sm:$0xff]
        %v2994 = vld [vmem:[%s2674 + $0x99] sm:$0xff]
        %v2995 = vld [vmem:[%s2674 + $0xa9] sm:$0xff]
        %v2996 = vld [vmem:[%s2674 + $0xb1] sm:$0xff]
        %v2997 = vld [vmem:[%s2674 + $0xc1] sm:$0xff]
        %v2998 = vld [vmem:[%s2674 + $0xc9] sm:$0xff]
        %v2999 = vld [vmem:[%s2674 + $0xd9] sm:$0xff]
        %v3000 = vld [vmem:[%s2674 + $0xe1] sm:$0xff]
        %v3001 = vld [vmem:[%s2674 + $0xf1] sm:$0xff]
        %v3002 = vld [vmem:[%s2674 + $0xf9] sm:$0xff]
        %v3003 = vld [vmem:[%s2674 + $0x109] sm:$0xff]
        %v3004 = vld [vmem:[%s2674 + $0x111] sm:$0xff]
        %v3005 = vld [vmem:[%s2674 + $0x121] sm:$0xff]
        %v3006 = vld [vmem:[%s2674 + $0x129] sm:$0xff]
        %v3007 = vld [vmem:[%s2674 + $0x139] sm:$0xff]
        %v3008 = vld [vmem:[%s2674 + $0x141] sm:$0xff]
        %v3009 = vld [vmem:[%s2674 + $0x151] sm:$0xff]
        %v3010 = vld [vmem:[%s2674 + $0x159] sm:$0xff]
        %v3011 = vld [vmem:[%s2674 + $0x169] sm:$0xff]
        %v3012 = vld [vmem:[%s2674 + $0x171] sm:$0xff]
        %v3013 = vpack.c.bf16 %v2982, %v2981
        %v3014 = vpack.c.bf16 %v2984, %v2983
        %v3015 = vpack.c.bf16 %v2986, %v2985
        %v3016 = vpack.c.bf16 %v2988, %v2987
        %v3017 = vpack.c.bf16 %v2990, %v2989
        %v3018 = vpack.c.bf16 %v2992, %v2991
        %v3019 = vpack.c.bf16 %v2994, %v2993
        %v3020 = vpack.c.bf16 %v2996, %v2995
        %v3021 = vpack.c.bf16 %v2998, %v2997
        %v3022 = vpack.c.bf16 %v3000, %v2999
        %v3023 = vpack.c.bf16 %v3002, %v3001
        %v3024 = vpack.c.bf16 %v3004, %v3003
        %v3025 = vpack.c.bf16 %v3006, %v3005
        %v3026 = vpack.c.bf16 %v3008, %v3007
        %v3027 = vpack.c.bf16 %v3010, %v3009
        %v3028 = vpack.c.bf16 %v3012, %v3011
        %s3029 = scalar_lea.vmem [#allocation3], 448
        %v3030 = vld [vmem:[%s3029] sm:$0xf]
        %v3031 = vld [vmem:[%s3029 + $0x4] sm:$0xf]
        %v3032 = vld [vmem:[%s3029 + $0x8] sm:$0xf]
        %v3033 = vld [vmem:[%s3029 + $0xc] sm:$0xf]
        %v3034 = vld [vmem:[%s3029 + $0x10] sm:$0xf]
        %v3035 = vld [vmem:[%s3029 + $0x14] sm:$0xf]
        %v3036 = vld [vmem:[%s3029 + $0x18] sm:$0xf]
        %v3037 = vld [vmem:[%s3029 + $0x1c] sm:$0xf]
        %v3038 = vld [vmem:[%s3029 + $0x20] sm:$0xf]
        %v3039 = vld [vmem:[%s3029 + $0x24] sm:$0xf]
        %v3040 = vld [vmem:[%s3029 + $0x28] sm:$0xf]
        %v3041 = vld [vmem:[%s3029 + $0x2c] sm:$0xf]
        %v3042 = vld [vmem:[%s3029 + $0x30] sm:$0xf]
        %v3043 = vld [vmem:[%s3029 + $0x34] sm:$0xf]
        %v3044 = vld [vmem:[%s3029 + $0x38] sm:$0xf]
        %v3045 = vld [vmem:[%s3029 + $0x3c] sm:$0xf]
        %v3062 = vunpack.c.l.b16 %v3030
        %v3063 = vunpack.c.l.b16 %v3031
        %v3064 = vunpack.c.l.b16 %v3032
        %v3065 = vunpack.c.l.b16 %v3033
        %v3066 = vunpack.c.l.b16 %v3034
        %v3067 = vunpack.c.l.b16 %v3035
        %v3068 = vunpack.c.l.b16 %v3036
        %v3069 = vunpack.c.l.b16 %v3037
        %v3070 = vunpack.c.l.b16 %v3038
        %v3071 = vunpack.c.l.b16 %v3039
        %v3072 = vunpack.c.l.b16 %v3040
        %v3073 = vunpack.c.l.b16 %v3041
        %v3074 = vunpack.c.l.b16 %v3042
        %v3075 = vunpack.c.l.b16 %v3043
        %v3076 = vunpack.c.l.b16 %v3044
        %v3077 = vunpack.c.l.b16 %v3045
        %v3078 = vpack.c.b16 %v3063, %v3062
        %v3079 = vpack.c.b16 %v3065, %v3064
        %v3080 = vpack.c.b16 %v3067, %v3066
        %v3081 = vpack.c.b16 %v3069, %v3068
        %v3082 = vpack.c.b16 %v3071, %v3070
        %v3083 = vpack.c.b16 %v3073, %v3072
        %v3084 = vpack.c.b16 %v3075, %v3074
        %v3085 = vpack.c.b16 %v3077, %v3076
        %3094 = vmatprep.subr.bf16.mxu0 0
        %3095 = vmatpush1.bf16.msra.mxu0 %v3078
        %3096 = vmatprep.subr.bf16.mxu0 0
        %3097 = vmatpush1.bf16.msra.mxu0 %v3079
        %3098 = vmatprep.subr.bf16.mxu0 0
        %3099 = vmatpush1.bf16.msra.mxu0 %v3080
        %3100 = vmatprep.subr.bf16.mxu0 0
        %3101 = vmatpush1.bf16.msra.mxu0 %v3081
        %3102 = vmatprep.subr.bf16.mxu0 0
        %3103 = vmatpush1.bf16.msra.mxu0 %v3082
        %3104 = vmatprep.subr.bf16.mxu0 0
        %3105 = vmatpush1.bf16.msra.mxu0 %v3083
        %3106 = vmatprep.subr.bf16.mxu0 0
        %3107 = vmatpush1.bf16.msra.mxu0 %v3084
        %3108 = vmatprep.subr.bf16.mxu0 0
        %3109 = vmatpush1.bf16.msra.mxu0 %v3085
        %3110 = vmatprep.subr.bf16.mxu0 0
        %3111 = vmatpush1.bf16.msra.mxu0 0
        %3112 = vmatprep.subr.bf16.mxu0 0
        %3113 = vmatpush1.bf16.msra.mxu0 0
        %3114 = vmatprep.subr.bf16.mxu0 0
        %3115 = vmatpush1.bf16.msra.mxu0 0
        %3116 = vmatprep.subr.bf16.mxu0 0
        %3117 = vmatpush1.bf16.msra.mxu0 0
        %3118 = vmatprep.subr.bf16.mxu0 0
        %3119 = vmatpush1.bf16.msra.mxu0 0
        %3120 = vmatprep.subr.bf16.mxu0 0
        %3121 = vmatpush1.bf16.msra.mxu0 0
        %3122 = vmatprep.subr.bf16.mxu0 0
        %3123 = vmatpush1.bf16.msra.mxu0 0
        %3124 = vmatprep.subr.bf16.mxu0 0
        %3125 = vmatpush1.bf16.msra.mxu0 0
        %3126 = vmatprep.mubr.bf16.mxu0 0
        %3127 = vmatmul.mubr.bf16.gmra.mrb[0].mxu0 %v3013
        %v3128 = vpop.f32.mrb[0].mxu0
        %v3129 = vadd.f32 0.0, %v3128
        %v3130 = vpop.f32.mrb[0].mxu0
        %v3131 = vpop.f32.mrb[0].mxu0
        %v3132 = vadd.f32 0.0, %v3131
        %v3133 = vpop.f32.mrb[0].mxu0
        %3134 = vmatprep.mubr.bf16.mxu0 0
        %3135 = vmatmul.mubr.bf16.gmra.mrb[0].mxu0 %v3014
        %v3136 = vpop.f32.mrb[0].mxu0
        %v3137 = vadd.f32 0.0, %v3136
        %v3138 = vpop.f32.mrb[0].mxu0
        %v3139 = vpop.f32.mrb[0].mxu0
        %v3140 = vadd.f32 0.0, %v3139
        %v3141 = vpop.f32.mrb[0].mxu0
        %3142 = vmatprep.mubr.bf16.mxu0 0
        %3143 = vmatmul.mubr.bf16.gmra.mrb[0].mxu0 %v3015
        %v3144 = vpop.f32.mrb[0].mxu0
        %v3145 = vadd.f32 0.0, %v3144
        %v3146 = vpop.f32.mrb[0].mxu0
        %v3147 = vpop.f32.mrb[0].mxu0
        %v3148 = vadd.f32 0.0, %v3147
        %v3149 = vpop.f32.mrb[0].mxu0
        %3150 = vmatprep.mubr.bf16.mxu0 0
        %3151 = vmatmul.mubr.bf16.gmra.mrb[0].mxu0 %v3016
        %v3152 = vpop.f32.mrb[0].mxu0
        %v3153 = vadd.f32 0.0, %v3152
        %v3154 = vpop.f32.mrb[0].mxu0
        %v3155 = vpop.f32.mrb[0].mxu0
        %v3156 = vadd.f32 0.0, %v3155
        %v3157 = vpop.f32.mrb[0].mxu0
        %3158 = vmatprep.mubr.bf16.mxu0 0
        %3159 = vmatmul.mubr.bf16.gmra.mrb[0].mxu0 %v3017
        %v3160 = vpop.f32.mrb[0].mxu0
        %v3161 = vadd.f32 0.0, %v3160
        %v3162 = vpop.f32.mrb[0].mxu0
        %v3163 = vpop.f32.mrb[0].mxu0
        %v3164 = vadd.f32 0.0, %v3163
        %v3165 = vpop.f32.mrb[0].mxu0
        %3166 = vmatprep.mubr.bf16.mxu0 0
        %3167 = vmatmul.mubr.bf16.gmra.mrb[0].mxu0 %v3018
        %v3168 = vpop.f32.mrb[0].mxu0
        %v3169 = vadd.f32 0.0, %v3168
        %v3170 = vpop.f32.mrb[0].mxu0
        %v3171 = vpop.f32.mrb[0].mxu0
        %v3172 = vadd.f32 0.0, %v3171
        %v3173 = vpop.f32.mrb[0].mxu0
        %3174 = vmatprep.mubr.bf16.mxu0 0
        %3175 = vmatmul.mubr.bf16.gmra.mrb[0].mxu0 %v3019
        %v3176 = vpop.f32.mrb[0].mxu0
        %v3177 = vadd.f32 0.0, %v3176
        %v3178 = vpop.f32.mrb[0].mxu0
        %v3179 = vpop.f32.mrb[0].mxu0
        %v3180 = vadd.f32 0.0, %v3179
        %v3181 = vpop.f32.mrb[0].mxu0
        %3182 = vmatprep.mubr.bf16.mxu0 0
        %3183 = vmatmul.mubr.bf16.gmra.mrb[0].mxu0 %v3020
        %v3184 = vpop.f32.mrb[0].mxu0
        %v3185 = vadd.f32 0.0, %v3184
        %v3186 = vpop.f32.mrb[0].mxu0
        %v3187 = vpop.f32.mrb[0].mxu0
        %v3188 = vadd.f32 0.0, %v3187
        %v3189 = vpop.f32.mrb[0].mxu0
        %3190 = vmatprep.mubr.bf16.mxu0 0
        %3191 = vmatmul.mubr.bf16.gmra.mrb[0].mxu0 %v3021
        %v3192 = vpop.f32.mrb[0].mxu0
        %v3193 = vadd.f32 0.0, %v3192
        %v3194 = vpop.f32.mrb[0].mxu0
        %v3195 = vpop.f32.mrb[0].mxu0
        %v3196 = vadd.f32 0.0, %v3195
        %v3197 = vpop.f32.mrb[0].mxu0
        %3198 = vmatprep.mubr.bf16.mxu0 0
        %3199 = vmatmul.mubr.bf16.gmra.mrb[0].mxu0 %v3022
        %v3200 = vpop.f32.mrb[0].mxu0
        %v3201 = vadd.f32 0.0, %v3200
        %v3202 = vpop.f32.mrb[0].mxu0
        %v3203 = vpop.f32.mrb[0].mxu0
        %v3204 = vadd.f32 0.0, %v3203
        %v3205 = vpop.f32.mrb[0].mxu0
        %3206 = vmatprep.mubr.bf16.mxu0 0
        %3207 = vmatmul.mubr.bf16.gmra.mrb[0].mxu0 %v3023
        %v3208 = vpop.f32.mrb[0].mxu0
        %v3209 = vadd.f32 0.0, %v3208
        %v3210 = vpop.f32.mrb[0].mxu0
        %v3211 = vpop.f32.mrb[0].mxu0
        %v3212 = vadd.f32 0.0, %v3211
        %v3213 = vpop.f32.mrb[0].mxu0
        %3214 = vmatprep.mubr.bf16.mxu0 0
        %3215 = vmatmul.mubr.bf16.gmra.mrb[0].mxu0 %v3024
        %v3216 = vpop.f32.mrb[0].mxu0
        %v3217 = vadd.f32 0.0, %v3216
        %v3218 = vpop.f32.mrb[0].mxu0
        %v3219 = vpop.f32.mrb[0].mxu0
        %v3220 = vadd.f32 0.0, %v3219
        %v3221 = vpop.f32.mrb[0].mxu0
        %3222 = vmatprep.mubr.bf16.mxu0 0
        %3223 = vmatmul.mubr.bf16.gmra.mrb[0].mxu0 %v3025
        %v3224 = vpop.f32.mrb[0].mxu0
        %v3225 = vadd.f32 0.0, %v3224
        %v3226 = vpop.f32.mrb[0].mxu0
        %v3227 = vpop.f32.mrb[0].mxu0
        %v3228 = vadd.f32 0.0, %v3227
        %v3229 = vpop.f32.mrb[0].mxu0
        %3230 = vmatprep.mubr.bf16.mxu0 0
        %3231 = vmatmul.mubr.bf16.gmra.mrb[0].mxu0 %v3026
        %v3232 = vpop.f32.mrb[0].mxu0
        %v3233 = vadd.f32 0.0, %v3232
        %v3234 = vpop.f32.mrb[0].mxu0
        %v3235 = vpop.f32.mrb[0].mxu0
        %v3236 = vadd.f32 0.0, %v3235
        %v3237 = vpop.f32.mrb[0].mxu0
        %3238 = vmatprep.mubr.bf16.mxu0 0
        %3239 = vmatmul.mubr.bf16.gmra.mrb[0].mxu0 %v3027
        %v3240 = vpop.f32.mrb[0].mxu0
        %v3241 = vadd.f32 0.0, %v3240
        %v3242 = vpop.f32.mrb[0].mxu0
        %v3243 = vpop.f32.mrb[0].mxu0
        %v3244 = vadd.f32 0.0, %v3243
        %v3245 = vpop.f32.mrb[0].mxu0
        %3246 = vmatprep.mubr.bf16.mxu0 0
        %3247 = vmatmul.mubr.bf16.gmra.mrb[0].mxu0 %v3028
        %v3248 = vpop.f32.mrb[0].mxu0
        %v3249 = vadd.f32 0.0, %v3248
        %v3250 = vpop.f32.mrb[0].mxu0
        %v3251 = vpop.f32.mrb[0].mxu0
        %v3252 = vadd.f32 0.0, %v3251
        %v3253 = vpop.f32.mrb[0].mxu0
        %3254 = vdwg.mxu0
        %v3255 = vadd.f32 %v2949, %v3129
        %v3256 = vadd.f32 %v2950, %v3132
        %v3257 = vadd.f32 %v2951, %v3137
        %v3258 = vadd.f32 %v2952, %v3140
        %v3259 = vadd.f32 %v2953, %v3145
        %v3260 = vadd.f32 %v2954, %v3148
        %v3261 = vadd.f32 %v2955, %v3153
        %v3262 = vadd.f32 %v2956, %v3156
        %v3263 = vadd.f32 %v2957, %v3161
        %v3264 = vadd.f32 %v2958, %v3164
        %v3265 = vadd.f32 %v2959, %v3169
        %v3266 = vadd.f32 %v2960, %v3172
        %v3267 = vadd.f32 %v2961, %v3177
        %v3268 = vadd.f32 %v2962, %v3180
        %v3269 = vadd.f32 %v2963, %v3185
        %v3270 = vadd.f32 %v2964, %v3188
        %v3271 = vadd.f32 %v2965, %v3193
        %v3272 = vadd.f32 %v2966, %v3196
        %v3273 = vadd.f32 %v2967, %v3201
        %v3274 = vadd.f32 %v2968, %v3204
        %v3275 = vadd.f32 %v2969, %v3209
        %v3276 = vadd.f32 %v2970, %v3212
        %v3277 = vadd.f32 %v2971, %v3217
        %v3278 = vadd.f32 %v2972, %v3220
        %v3279 = vadd.f32 %v2973, %v3225
        %v3280 = vadd.f32 %v2974, %v3228
        %v3281 = vadd.f32 %v2975, %v3233
        %v3282 = vadd.f32 %v2976, %v3236
        %v3283 = vadd.f32 %v2977, %v3241
        %v3284 = vadd.f32 %v2978, %v3244
        %v3285 = vadd.f32 %v2979, %v3249
        %v3286 = vadd.f32 %v2980, %v3252
        %v3287 = vld [vmem:[%s2674 + $0x2] sm:$0xff]
        %v3288 = vld [vmem:[%s2674 + $0xa] sm:$0xff]
        %v3289 = vld [vmem:[%s2674 + $0x1a] sm:$0xff]
        %v3290 = vld [vmem:[%s2674 + $0x22] sm:$0xff]
        %v3291 = vld [vmem:[%s2674 + $0x32] sm:$0xff]
        %v3292 = vld [vmem:[%s2674 + $0x3a] sm:$0xff]
        %v3293 = vld [vmem:[%s2674 + $0x4a] sm:$0xff]
        %v3294 = vld [vmem:[%s2674 + $0x52] sm:$0xff]
        %v3295 = vld [vmem:[%s2674 + $0x62] sm:$0xff]
        %v3296 = vld [vmem:[%s2674 + $0x6a] sm:$0xff]
        %v3297 = vld [vmem:[%s2674 + $0x7a] sm:$0xff]
        %v3298 = vld [vmem:[%s2674 + $0x82] sm:$0xff]
        %v3299 = vld [vmem:[%s2674 + $0x92] sm:$0xff]
        %v3300 = vld [vmem:[%s2674 + $0x9a] sm:$0xff]
        %v3301 = vld [vmem:[%s2674 + $0xaa] sm:$0xff]
        %v3302 = vld [vmem:[%s2674 + $0xb2] sm:$0xff]
        %v3303 = vld [vmem:[%s2674 + $0xc2] sm:$0xff]
        %v3304 = vld [vmem:[%s2674 + $0xca] sm:$0xff]
        %v3305 = vld [vmem:[%s2674 + $0xda] sm:$0xff]
        %v3306 = vld [vmem:[%s2674 + $0xe2] sm:$0xff]
        %v3307 = vld [vmem:[%s2674 + $0xf2] sm:$0xff]
        %v3308 = vld [vmem:[%s2674 + $0xfa] sm:$0xff]
        %v3309 = vld [vmem:[%s2674 + $0x10a] sm:$0xff]
        %v3310 = vld [vmem:[%s2674 + $0x112] sm:$0xff]
        %v3311 = vld [vmem:[%s2674 + $0x122] sm:$0xff]
        %v3312 = vld [vmem:[%s2674 + $0x12a] sm:$0xff]
        %v3313 = vld [vmem:[%s2674 + $0x13a] sm:$0xff]
        %v3314 = vld [vmem:[%s2674 + $0x142] sm:$0xff]
        %v3315 = vld [vmem:[%s2674 + $0x152] sm:$0xff]
        %v3316 = vld [vmem:[%s2674 + $0x15a] sm:$0xff]
        %v3317 = vld [vmem:[%s2674 + $0x16a] sm:$0xff]
        %v3318 = vld [vmem:[%s2674 + $0x172] sm:$0xff]
        %v3319 = vpack.c.bf16 %v3288, %v3287
        %v3320 = vpack.c.bf16 %v3290, %v3289
        %v3321 = vpack.c.bf16 %v3292, %v3291
        %v3322 = vpack.c.bf16 %v3294, %v3293
        %v3323 = vpack.c.bf16 %v3296, %v3295
        %v3324 = vpack.c.bf16 %v3298, %v3297
        %v3325 = vpack.c.bf16 %v3300, %v3299
        %v3326 = vpack.c.bf16 %v3302, %v3301
        %v3327 = vpack.c.bf16 %v3304, %v3303
        %v3328 = vpack.c.bf16 %v3306, %v3305
        %v3329 = vpack.c.bf16 %v3308, %v3307
        %v3330 = vpack.c.bf16 %v3310, %v3309
        %v3331 = vpack.c.bf16 %v3312, %v3311
        %v3332 = vpack.c.bf16 %v3314, %v3313
        %v3333 = vpack.c.bf16 %v3316, %v3315
        %v3334 = vpack.c.bf16 %v3318, %v3317
        %s3335 = scalar_lea.vmem [#allocation3], 512
        %v3336 = vld [vmem:[%s3335] sm:$0xf]
        %v3337 = vld [vmem:[%s3335 + $0x4] sm:$0xf]
        %v3338 = vld [vmem:[%s3335 + $0x8] sm:$0xf]
        %v3339 = vld [vmem:[%s3335 + $0xc] sm:$0xf]
        %v3340 = vld [vmem:[%s3335 + $0x10] sm:$0xf]
        %v3341 = vld [vmem:[%s3335 + $0x14] sm:$0xf]
        %v3342 = vld [vmem:[%s3335 + $0x18] sm:$0xf]
        %v3343 = vld [vmem:[%s3335 + $0x1c] sm:$0xf]
        %v3344 = vld [vmem:[%s3335 + $0x20] sm:$0xf]
        %v3345 = vld [vmem:[%s3335 + $0x24] sm:$0xf]
        %v3346 = vld [vmem:[%s3335 + $0x28] sm:$0xf]
        %v3347 = vld [vmem:[%s3335 + $0x2c] sm:$0xf]
        %v3348 = vld [vmem:[%s3335 + $0x30] sm:$0xf]
        %v3349 = vld [vmem:[%s3335 + $0x34] sm:$0xf]
        %v3350 = vld [vmem:[%s3335 + $0x38] sm:$0xf]
        %v3351 = vld [vmem:[%s3335 + $0x3c] sm:$0xf]
        %v3368 = vunpack.c.l.b16 %v3336
        %v3369 = vunpack.c.l.b16 %v3337
        %v3370 = vunpack.c.l.b16 %v3338
        %v3371 = vunpack.c.l.b16 %v3339
        %v3372 = vunpack.c.l.b16 %v3340
        %v3373 = vunpack.c.l.b16 %v3341
        %v3374 = vunpack.c.l.b16 %v3342
        %v3375 = vunpack.c.l.b16 %v3343
        %v3376 = vunpack.c.l.b16 %v3344
        %v3377 = vunpack.c.l.b16 %v3345
        %v3378 = vunpack.c.l.b16 %v3346
        %v3379 = vunpack.c.l.b16 %v3347
        %v3380 = vunpack.c.l.b16 %v3348
        %v3381 = vunpack.c.l.b16 %v3349
        %v3382 = vunpack.c.l.b16 %v3350
        %v3383 = vunpack.c.l.b16 %v3351
        %v3384 = vpack.c.b16 %v3369, %v3368
        %v3385 = vpack.c.b16 %v3371, %v3370
        %v3386 = vpack.c.b16 %v3373, %v3372
        %v3387 = vpack.c.b16 %v3375, %v3374
        %v3388 = vpack.c.b16 %v3377, %v3376
        %v3389 = vpack.c.b16 %v3379, %v3378
        %v3390 = vpack.c.b16 %v3381, %v3380
        %v3391 = vpack.c.b16 %v3383, %v3382
        %3400 = vmatprep.subr.bf16.mxu0 0
        %3401 = vmatpush1.bf16.msra.mxu0 %v3384
        %3402 = vmatprep.subr.bf16.mxu0 0
        %3403 = vmatpush1.bf16.msra.mxu0 %v3385
        %3404 = vmatprep.subr.bf16.mxu0 0
        %3405 = vmatpush1.bf16.msra.mxu0 %v3386
        %3406 = vmatprep.subr.bf16.mxu0 0
        %3407 = vmatpush1.bf16.msra.mxu0 %v3387
        %3408 = vmatprep.subr.bf16.mxu0 0
        %3409 = vmatpush1.bf16.msra.mxu0 %v3388
        %3410 = vmatprep.subr.bf16.mxu0 0
        %3411 = vmatpush1.bf16.msra.mxu0 %v3389
        %3412 = vmatprep.subr.bf16.mxu0 0
        %3413 = vmatpush1.bf16.msra.mxu0 %v3390
        %3414 = vmatprep.subr.bf16.mxu0 0
        %3415 = vmatpush1.bf16.msra.mxu0 %v3391
        %3416 = vmatprep.subr.bf16.mxu0 0
        %3417 = vmatpush1.bf16.msra.mxu0 0
        %3418 = vmatprep.subr.bf16.mxu0 0
        %3419 = vmatpush1.bf16.msra.mxu0 0
        %3420 = vmatprep.subr.bf16.mxu0 0
        %3421 = vmatpush1.bf16.msra.mxu0 0
        %3422 = vmatprep.subr.bf16.mxu0 0
        %3423 = vmatpush1.bf16.msra.mxu0 0
        %3424 = vmatprep.subr.bf16.mxu0 0
        %3425 = vmatpush1.bf16.msra.mxu0 0
        %3426 = vmatprep.subr.bf16.mxu0 0
        %3427 = vmatpush1.bf16.msra.mxu0 0
        %3428 = vmatprep.subr.bf16.mxu0 0
        %3429 = vmatpush1.bf16.msra.mxu0 0
        %3430 = vmatprep.subr.bf16.mxu0 0
        %3431 = vmatpush1.bf16.msra.mxu0 0
        %3432 = vmatprep.mubr.bf16.mxu0 0
        %3433 = vmatmul.mubr.bf16.gmra.mrb[0].mxu0 %v3319
        %v3434 = vpop.f32.mrb[0].mxu0
        %v3435 = vadd.f32 0.0, %v3434
        %v3436 = vpop.f32.mrb[0].mxu0
        %v3437 = vpop.f32.mrb[0].mxu0
        %v3438 = vadd.f32 0.0, %v3437
        %v3439 = vpop.f32.mrb[0].mxu0
        %3440 = vmatprep.mubr.bf16.mxu0 0
        %3441 = vmatmul.mubr.bf16.gmra.mrb[0].mxu0 %v3320
        %v3442 = vpop.f32.mrb[0].mxu0
        %v3443 = vadd.f32 0.0, %v3442
        %v3444 = vpop.f32.mrb[0].mxu0
        %v3445 = vpop.f32.mrb[0].mxu0
        %v3446 = vadd.f32 0.0, %v3445
        %v3447 = vpop.f32.mrb[0].mxu0
        %3448 = vmatprep.mubr.bf16.mxu0 0
        %3449 = vmatmul.mubr.bf16.gmra.mrb[0].mxu0 %v3321
        %v3450 = vpop.f32.mrb[0].mxu0
        %v3451 = vadd.f32 0.0, %v3450
        %v3452 = vpop.f32.mrb[0].mxu0
        %v3453 = vpop.f32.mrb[0].mxu0
        %v3454 = vadd.f32 0.0, %v3453
        %v3455 = vpop.f32.mrb[0].mxu0
        %3456 = vmatprep.mubr.bf16.mxu0 0
        %3457 = vmatmul.mubr.bf16.gmra.mrb[0].mxu0 %v3322
        %v3458 = vpop.f32.mrb[0].mxu0
        %v3459 = vadd.f32 0.0, %v3458
        %v3460 = vpop.f32.mrb[0].mxu0
        %v3461 = vpop.f32.mrb[0].mxu0
        %v3462 = vadd.f32 0.0, %v3461
        %v3463 = vpop.f32.mrb[0].mxu0
        %3464 = vmatprep.mubr.bf16.mxu0 0
        %3465 = vmatmul.mubr.bf16.gmra.mrb[0].mxu0 %v3323
        %v3466 = vpop.f32.mrb[0].mxu0
        %v3467 = vadd.f32 0.0, %v3466
        %v3468 = vpop.f32.mrb[0].mxu0
        %v3469 = vpop.f32.mrb[0].mxu0
        %v3470 = vadd.f32 0.0, %v3469
        %v3471 = vpop.f32.mrb[0].mxu0
        %3472 = vmatprep.mubr.bf16.mxu0 0
        %3473 = vmatmul.mubr.bf16.gmra.mrb[0].mxu0 %v3324
        %v3474 = vpop.f32.mrb[0].mxu0
        %v3475 = vadd.f32 0.0, %v3474
        %v3476 = vpop.f32.mrb[0].mxu0
        %v3477 = vpop.f32.mrb[0].mxu0
        %v3478 = vadd.f32 0.0, %v3477
        %v3479 = vpop.f32.mrb[0].mxu0
        %3480 = vmatprep.mubr.bf16.mxu0 0
        %3481 = vmatmul.mubr.bf16.gmra.mrb[0].mxu0 %v3325
        %v3482 = vpop.f32.mrb[0].mxu0
        %v3483 = vadd.f32 0.0, %v3482
        %v3484 = vpop.f32.mrb[0].mxu0
        %v3485 = vpop.f32.mrb[0].mxu0
        %v3486 = vadd.f32 0.0, %v3485
        %v3487 = vpop.f32.mrb[0].mxu0
        %3488 = vmatprep.mubr.bf16.mxu0 0
        %3489 = vmatmul.mubr.bf16.gmra.mrb[0].mxu0 %v3326
        %v3490 = vpop.f32.mrb[0].mxu0
        %v3491 = vadd.f32 0.0, %v3490
        %v3492 = vpop.f32.mrb[0].mxu0
        %v3493 = vpop.f32.mrb[0].mxu0
        %v3494 = vadd.f32 0.0, %v3493
        %v3495 = vpop.f32.mrb[0].mxu0
        %3496 = vmatprep.mubr.bf16.mxu0 0
        %3497 = vmatmul.mubr.bf16.gmra.mrb[0].mxu0 %v3327
        %v3498 = vpop.f32.mrb[0].mxu0
        %v3499 = vadd.f32 0.0, %v3498
        %v3500 = vpop.f32.mrb[0].mxu0
        %v3501 = vpop.f32.mrb[0].mxu0
        %v3502 = vadd.f32 0.0, %v3501
        %v3503 = vpop.f32.mrb[0].mxu0
        %3504 = vmatprep.mubr.bf16.mxu0 0
        %3505 = vmatmul.mubr.bf16.gmra.mrb[0].mxu0 %v3328
        %v3506 = vpop.f32.mrb[0].mxu0
        %v3507 = vadd.f32 0.0, %v3506
        %v3508 = vpop.f32.mrb[0].mxu0
        %v3509 = vpop.f32.mrb[0].mxu0
        %v3510 = vadd.f32 0.0, %v3509
        %v3511 = vpop.f32.mrb[0].mxu0
        %3512 = vmatprep.mubr.bf16.mxu0 0
        %3513 = vmatmul.mubr.bf16.gmra.mrb[0].mxu0 %v3329
        %v3514 = vpop.f32.mrb[0].mxu0
        %v3515 = vadd.f32 0.0, %v3514
        %v3516 = vpop.f32.mrb[0].mxu0
        %v3517 = vpop.f32.mrb[0].mxu0
        %v3518 = vadd.f32 0.0, %v3517
        %v3519 = vpop.f32.mrb[0].mxu0
        %3520 = vmatprep.mubr.bf16.mxu0 0
        %3521 = vmatmul.mubr.bf16.gmra.mrb[0].mxu0 %v3330
        %v3522 = vpop.f32.mrb[0].mxu0
        %v3523 = vadd.f32 0.0, %v3522
        %v3524 = vpop.f32.mrb[0].mxu0
        %v3525 = vpop.f32.mrb[0].mxu0
        %v3526 = vadd.f32 0.0, %v3525
        %v3527 = vpop.f32.mrb[0].mxu0
        %3528 = vmatprep.mubr.bf16.mxu0 0
        %3529 = vmatmul.mubr.bf16.gmra.mrb[0].mxu0 %v3331
        %v3530 = vpop.f32.mrb[0].mxu0
        %v3531 = vadd.f32 0.0, %v3530
        %v3532 = vpop.f32.mrb[0].mxu0
        %v3533 = vpop.f32.mrb[0].mxu0
        %v3534 = vadd.f32 0.0, %v3533
        %v3535 = vpop.f32.mrb[0].mxu0
        %3536 = vmatprep.mubr.bf16.mxu0 0
        %3537 = vmatmul.mubr.bf16.gmra.mrb[0].mxu0 %v3332
        %v3538 = vpop.f32.mrb[0].mxu0
        %v3539 = vadd.f32 0.0, %v3538
        %v3540 = vpop.f32.mrb[0].mxu0
        %v3541 = vpop.f32.mrb[0].mxu0
        %v3542 = vadd.f32 0.0, %v3541
        %v3543 = vpop.f32.mrb[0].mxu0
        %3544 = vmatprep.mubr.bf16.mxu0 0
        %3545 = vmatmul.mubr.bf16.gmra.mrb[0].mxu0 %v3333
        %v3546 = vpop.f32.mrb[0].mxu0
        %v3547 = vadd.f32 0.0, %v3546
        %v3548 = vpop.f32.mrb[0].mxu0
        %v3549 = vpop.f32.mrb[0].mxu0
        %v3550 = vadd.f32 0.0, %v3549
        %v3551 = vpop.f32.mrb[0].mxu0
        %3552 = vmatprep.mubr.bf16.mxu0 0
        %3553 = vmatmul.mubr.bf16.gmra.mrb[0].mxu0 %v3334
        %v3554 = vpop.f32.mrb[0].mxu0
        %v3555 = vadd.f32 0.0, %v3554
        %v3556 = vpop.f32.mrb[0].mxu0
        %v3557 = vpop.f32.mrb[0].mxu0
        %v3558 = vadd.f32 0.0, %v3557
        %v3559 = vpop.f32.mrb[0].mxu0
        %3560 = vdwg.mxu0
        %v3561 = vadd.f32 %v3255, %v3435
        %v3562 = vadd.f32 %v3256, %v3438
        %v3563 = vadd.f32 %v3257, %v3443
        %v3564 = vadd.f32 %v3258, %v3446
        %v3565 = vadd.f32 %v3259, %v3451
        %v3566 = vadd.f32 %v3260, %v3454
        %v3567 = vadd.f32 %v3261, %v3459
        %v3568 = vadd.f32 %v3262, %v3462
        %v3569 = vadd.f32 %v3263, %v3467
        %v3570 = vadd.f32 %v3264, %v3470
        %v3571 = vadd.f32 %v3265, %v3475
        %v3572 = vadd.f32 %v3266, %v3478
        %v3573 = vadd.f32 %v3267, %v3483
        %v3574 = vadd.f32 %v3268, %v3486
        %v3575 = vadd.f32 %v3269, %v3491
        %v3576 = vadd.f32 %v3270, %v3494
        %v3577 = vadd.f32 %v3271, %v3499
        %v3578 = vadd.f32 %v3272, %v3502
        %v3579 = vadd.f32 %v3273, %v3507
        %v3580 = vadd.f32 %v3274, %v3510
        %v3581 = vadd.f32 %v3275, %v3515
        %v3582 = vadd.f32 %v3276, %v3518
        %v3583 = vadd.f32 %v3277, %v3523
        %v3584 = vadd.f32 %v3278, %v3526
        %v3585 = vadd.f32 %v3279, %v3531
        %v3586 = vadd.f32 %v3280, %v3534
        %v3587 = vadd.f32 %v3281, %v3539
        %v3588 = vadd.f32 %v3282, %v3542
        %v3589 = vadd.f32 %v3283, %v3547
        %v3590 = vadd.f32 %v3284, %v3550
        %v3591 = vadd.f32 %v3285, %v3555
        %v3592 = vadd.f32 %v3286, %v3558
        %v3593 = vld [vmem:[%s5] sm:$0x1]
        %v3595 = vlaneseq
        %v3596 = vshrl.u32 %v3595, 7
        %v3597 = vsub.s32 0, %v3596
        %v3598 = vrot.slane %v3593, %v3597
        %v3600 = vmul.f32 %v3561, %v3598
        %v3601 = vmul.f32 %v3562, %v3598
        %v3602 = vmul.f32 %v3563, %v3598
        %v3603 = vmul.f32 %v3564, %v3598
        %v3604 = vmul.f32 %v3565, %v3598
        %v3605 = vmul.f32 %v3566, %v3598
        %v3606 = vmul.f32 %v3567, %v3598
        %v3607 = vmul.f32 %v3568, %v3598
        %v3608 = vmul.f32 %v3569, %v3598
        %v3609 = vmul.f32 %v3570, %v3598
        %v3610 = vmul.f32 %v3571, %v3598
        %v3611 = vmul.f32 %v3572, %v3598
        %v3612 = vmul.f32 %v3573, %v3598
        %v3613 = vmul.f32 %v3574, %v3598
        %v3614 = vmul.f32 %v3575, %v3598
        %v3615 = vmul.f32 %v3576, %v3598
        %v3616 = vmul.f32 %v3577, %v3598
        %v3617 = vmul.f32 %v3578, %v3598
        %v3618 = vmul.f32 %v3579, %v3598
        %v3619 = vmul.f32 %v3580, %v3598
        %v3620 = vmul.f32 %v3581, %v3598
        %v3621 = vmul.f32 %v3582, %v3598
        %v3622 = vmul.f32 %v3583, %v3598
        %v3623 = vmul.f32 %v3584, %v3598
        %v3624 = vmul.f32 %v3585, %v3598
        %v3625 = vmul.f32 %v3586, %v3598
        %v3626 = vmul.f32 %v3587, %v3598
        %v3627 = vmul.f32 %v3588, %v3598
        %v3628 = vmul.f32 %v3589, %v3598
        %v3629 = vmul.f32 %v3590, %v3598
        %v3630 = vmul.f32 %v3591, %v3598
        %v3631 = vmul.f32 %v3592, %v3598
        %v3632 = vld [vmem:[%s6] sm:$0x1]
        %v3634 = vlaneseq
        %v3635 = vshrl.u32 %v3634, 7
        %v3636 = vsub.s32 0, %v3635
        %v3637 = vrot.slane %v3632, %v3636
        %v3639 = vadd.f32 %v3600, %v3637
        %v3640 = vadd.f32 %v3601, %v3637
        %v3641 = vadd.f32 %v3602, %v3637
        %v3642 = vadd.f32 %v3603, %v3637
        %v3643 = vadd.f32 %v3604, %v3637
        %v3644 = vadd.f32 %v3605, %v3637
        %v3645 = vadd.f32 %v3606, %v3637
        %v3646 = vadd.f32 %v3607, %v3637
        %v3647 = vadd.f32 %v3608, %v3637
        %v3648 = vadd.f32 %v3609, %v3637
        %v3649 = vadd.f32 %v3610, %v3637
        %v3650 = vadd.f32 %v3611, %v3637
        %v3651 = vadd.f32 %v3612, %v3637
        %v3652 = vadd.f32 %v3613, %v3637
        %v3653 = vadd.f32 %v3614, %v3637
        %v3654 = vadd.f32 %v3615, %v3637
        %v3655 = vadd.f32 %v3616, %v3637
        %v3656 = vadd.f32 %v3617, %v3637
        %v3657 = vadd.f32 %v3618, %v3637
        %v3658 = vadd.f32 %v3619, %v3637
        %v3659 = vadd.f32 %v3620, %v3637
        %v3660 = vadd.f32 %v3621, %v3637
        %v3661 = vadd.f32 %v3622, %v3637
        %v3662 = vadd.f32 %v3623, %v3637
        %v3663 = vadd.f32 %v3624, %v3637
        %v3664 = vadd.f32 %v3625, %v3637
        %v3665 = vadd.f32 %v3626, %v3637
        %v3666 = vadd.f32 %v3627, %v3637
        %v3667 = vadd.f32 %v3628, %v3637
        %v3668 = vadd.f32 %v3629, %v3637
        %v3669 = vadd.f32 %v3630, %v3637
        %v3670 = vadd.f32 %v3631, %v3637
        %v3671 = vmax.f32 %v3639, 0.0
        %v3672 = vmax.f32 %v3640, 0.0
        %v3673 = vmax.f32 %v3641, 0.0
        %v3674 = vmax.f32 %v3642, 0.0
        %v3675 = vmax.f32 %v3643, 0.0
        %v3676 = vmax.f32 %v3644, 0.0
        %v3677 = vmax.f32 %v3645, 0.0
        %v3678 = vmax.f32 %v3646, 0.0
        %v3679 = vmax.f32 %v3647, 0.0
        %v3680 = vmax.f32 %v3648, 0.0
        %v3681 = vmax.f32 %v3649, 0.0
        %v3682 = vmax.f32 %v3650, 0.0
        %v3683 = vmax.f32 %v3651, 0.0
        %v3684 = vmax.f32 %v3652, 0.0
        %v3685 = vmax.f32 %v3653, 0.0
        %v3686 = vmax.f32 %v3654, 0.0
        %v3687 = vmax.f32 %v3655, 0.0
        %v3688 = vmax.f32 %v3656, 0.0
        %v3689 = vmax.f32 %v3657, 0.0
        %v3690 = vmax.f32 %v3658, 0.0
        %v3691 = vmax.f32 %v3659, 0.0
        %v3692 = vmax.f32 %v3660, 0.0
        %v3693 = vmax.f32 %v3661, 0.0
        %v3694 = vmax.f32 %v3662, 0.0
        %v3695 = vmax.f32 %v3663, 0.0
        %v3696 = vmax.f32 %v3664, 0.0
        %v3697 = vmax.f32 %v3665, 0.0
        %v3698 = vmax.f32 %v3666, 0.0
        %v3699 = vmax.f32 %v3667, 0.0
        %v3700 = vmax.f32 %v3668, 0.0
        %v3701 = vmax.f32 %v3669, 0.0
        %v3702 = vmax.f32 %v3670, 0.0
        %v3703 = vpack.c.bf16 %v3672, %v3671
        %v3704 = vpack.c.bf16 %v3674, %v3673
        %v3705 = vpack.c.bf16 %v3676, %v3675
        %v3706 = vpack.c.bf16 %v3678, %v3677
        %v3707 = vpack.c.bf16 %v3680, %v3679
        %v3708 = vpack.c.bf16 %v3682, %v3681
        %v3709 = vpack.c.bf16 %v3684, %v3683
        %v3710 = vpack.c.bf16 %v3686, %v3685
        %v3711 = vpack.c.bf16 %v3688, %v3687
        %v3712 = vpack.c.bf16 %v3690, %v3689
        %v3713 = vpack.c.bf16 %v3692, %v3691
        %v3714 = vpack.c.bf16 %v3694, %v3693
        %v3715 = vpack.c.bf16 %v3696, %v3695
        %v3716 = vpack.c.bf16 %v3698, %v3697
        %v3717 = vpack.c.bf16 %v3700, %v3699
        %v3718 = vpack.c.bf16 %v3702, %v3701
        %v3719 = vld [vmem:[%s7] sm:$0xf]
        %v3720 = vld [vmem:[%s7 + $0x4] sm:$0xf]
        %v3721 = vld [vmem:[%s7 + $0x8] sm:$0xf]
        %v3722 = vld [vmem:[%s7 + $0xc] sm:$0xf]
        %v3723 = vld [vmem:[%s7 + $0x10] sm:$0xf]
        %v3724 = vld [vmem:[%s7 + $0x14] sm:$0xf]
        %v3725 = vld [vmem:[%s7 + $0x18] sm:$0xf]
        %v3726 = vld [vmem:[%s7 + $0x1c] sm:$0xf]
        %v3727 = vld [vmem:[%s7 + $0x20] sm:$0xf]
        %v3728 = vld [vmem:[%s7 + $0x24] sm:$0xf]
        %v3729 = vld [vmem:[%s7 + $0x28] sm:$0xf]
        %v3730 = vld [vmem:[%s7 + $0x2c] sm:$0xf]
        %v3731 = vld [vmem:[%s7 + $0x30] sm:$0xf]
        %v3732 = vld [vmem:[%s7 + $0x34] sm:$0xf]
        %v3733 = vld [vmem:[%s7 + $0x38] sm:$0xf]
        %v3734 = vld [vmem:[%s7 + $0x3c] sm:$0xf]
        %v3751 = vunpack.c.l.b16 %v3719
        %v3752 = vunpack.c.l.b16 %v3720
        %v3753 = vunpack.c.l.b16 %v3721
        %v3754 = vunpack.c.l.b16 %v3722
        %v3755 = vunpack.c.l.b16 %v3723
        %v3756 = vunpack.c.l.b16 %v3724
        %v3757 = vunpack.c.l.b16 %v3725
        %v3758 = vunpack.c.l.b16 %v3726
        %v3759 = vunpack.c.l.b16 %v3727
        %v3760 = vunpack.c.l.b16 %v3728
        %v3761 = vunpack.c.l.b16 %v3729
        %v3762 = vunpack.c.l.b16 %v3730
        %v3763 = vunpack.c.l.b16 %v3731
        %v3764 = vunpack.c.l.b16 %v3732
        %v3765 = vunpack.c.l.b16 %v3733
        %v3766 = vunpack.c.l.b16 %v3734
        %v3767 = vpack.c.b16 %v3752, %v3751
        %v3768 = vpack.c.b16 %v3754, %v3753
        %v3769 = vpack.c.b16 %v3756, %v3755
        %v3770 = vpack.c.b16 %v3758, %v3757
        %v3771 = vpack.c.b16 %v3760, %v3759
        %v3772 = vpack.c.b16 %v3762, %v3761
        %v3773 = vpack.c.b16 %v3764, %v3763
        %v3774 = vpack.c.b16 %v3766, %v3765
        %3783 = vmatprep.subr.bf16.mxu0 0
        %3784 = vmatpush1.bf16.msra.mxu0 %v3767
        %3785 = vmatprep.subr.bf16.mxu0 0
        %3786 = vmatpush1.bf16.msra.mxu0 %v3768
        %3787 = vmatprep.subr.bf16.mxu0 0
        %3788 = vmatpush1.bf16.msra.mxu0 %v3769
        %3789 = vmatprep.subr.bf16.mxu0 0
        %3790 = vmatpush1.bf16.msra.mxu0 %v3770
        %3791 = vmatprep.subr.bf16.mxu0 0
        %3792 = vmatpush1.bf16.msra.mxu0 %v3771
        %3793 = vmatprep.subr.bf16.mxu0 0
        %3794 = vmatpush1.bf16.msra.mxu0 %v3772
        %3795 = vmatprep.subr.bf16.mxu0 0
        %3796 = vmatpush1.bf16.msra.mxu0 %v3773
        %3797 = vmatprep.subr.bf16.mxu0 0
        %3798 = vmatpush1.bf16.msra.mxu0 %v3774
        %3799 = vmatprep.subr.bf16.mxu0 0
        %3800 = vmatpush1.bf16.msra.mxu0 0
        %3801 = vmatprep.subr.bf16.mxu0 0
        %3802 = vmatpush1.bf16.msra.mxu0 0
        %3803 = vmatprep.subr.bf16.mxu0 0
        %3804 = vmatpush1.bf16.msra.mxu0 0
        %3805 = vmatprep.subr.bf16.mxu0 0
        %3806 = vmatpush1.bf16.msra.mxu0 0
        %3807 = vmatprep.subr.bf16.mxu0 0
        %3808 = vmatpush1.bf16.msra.mxu0 0
        %3809 = vmatprep.subr.bf16.mxu0 0
        %3810 = vmatpush1.bf16.msra.mxu0 0
        %3811 = vmatprep.subr.bf16.mxu0 0
        %3812 = vmatpush1.bf16.msra.mxu0 0
        %3813 = vmatprep.subr.bf16.mxu0 0
        %3814 = vmatpush1.bf16.msra.mxu0 0
        %3815 = vmatprep.mubr.bf16.mxu0 0
        %3816 = vmatmul.mubr.bf16.gmra.mrb[0].mxu0 %v3703
        %v3817 = vpop.f32.mrb[0].mxu0
        %v3818 = vadd.f32 0.0, %v3817
        %v3819 = vpop.f32.mrb[0].mxu0
        %v3820 = vpop.f32.mrb[0].mxu0
        %v3821 = vadd.f32 0.0, %v3820
        %v3822 = vpop.f32.mrb[0].mxu0
        %3823 = vmatprep.mubr.bf16.mxu0 0
        %3824 = vmatmul.mubr.bf16.gmra.mrb[0].mxu0 %v3704
        %v3825 = vpop.f32.mrb[0].mxu0
        %v3826 = vadd.f32 0.0, %v3825
        %v3827 = vpop.f32.mrb[0].mxu0
        %v3828 = vpop.f32.mrb[0].mxu0
        %v3829 = vadd.f32 0.0, %v3828
        %v3830 = vpop.f32.mrb[0].mxu0
        %3831 = vmatprep.mubr.bf16.mxu0 0
        %3832 = vmatmul.mubr.bf16.gmra.mrb[0].mxu0 %v3705
        %v3833 = vpop.f32.mrb[0].mxu0
        %v3834 = vadd.f32 0.0, %v3833
        %v3835 = vpop.f32.mrb[0].mxu0
        %v3836 = vpop.f32.mrb[0].mxu0
        %v3837 = vadd.f32 0.0, %v3836
        %v3838 = vpop.f32.mrb[0].mxu0
        %3839 = vmatprep.mubr.bf16.mxu0 0
        %3840 = vmatmul.mubr.bf16.gmra.mrb[0].mxu0 %v3706
        %v3841 = vpop.f32.mrb[0].mxu0
        %v3842 = vadd.f32 0.0, %v3841
        %v3843 = vpop.f32.mrb[0].mxu0
        %v3844 = vpop.f32.mrb[0].mxu0
        %v3845 = vadd.f32 0.0, %v3844
        %v3846 = vpop.f32.mrb[0].mxu0
        %3847 = vmatprep.mubr.bf16.mxu0 0
        %3848 = vmatmul.mubr.bf16.gmra.mrb[0].mxu0 %v3707
        %v3849 = vpop.f32.mrb[0].mxu0
        %v3850 = vadd.f32 0.0, %v3849
        %v3851 = vpop.f32.mrb[0].mxu0
        %v3852 = vpop.f32.mrb[0].mxu0
        %v3853 = vadd.f32 0.0, %v3852
        %v3854 = vpop.f32.mrb[0].mxu0
        %3855 = vmatprep.mubr.bf16.mxu0 0
        %3856 = vmatmul.mubr.bf16.gmra.mrb[0].mxu0 %v3708
        %v3857 = vpop.f32.mrb[0].mxu0
        %v3858 = vadd.f32 0.0, %v3857
        %v3859 = vpop.f32.mrb[0].mxu0
        %v3860 = vpop.f32.mrb[0].mxu0
        %v3861 = vadd.f32 0.0, %v3860
        %v3862 = vpop.f32.mrb[0].mxu0
        %3863 = vmatprep.mubr.bf16.mxu0 0
        %3864 = vmatmul.mubr.bf16.gmra.mrb[0].mxu0 %v3709
        %v3865 = vpop.f32.mrb[0].mxu0
        %v3866 = vadd.f32 0.0, %v3865
        %v3867 = vpop.f32.mrb[0].mxu0
        %v3868 = vpop.f32.mrb[0].mxu0
        %v3869 = vadd.f32 0.0, %v3868
        %v3870 = vpop.f32.mrb[0].mxu0
        %3871 = vmatprep.mubr.bf16.mxu0 0
        %3872 = vmatmul.mubr.bf16.gmra.mrb[0].mxu0 %v3710
        %v3873 = vpop.f32.mrb[0].mxu0
        %v3874 = vadd.f32 0.0, %v3873
        %v3875 = vpop.f32.mrb[0].mxu0
        %v3876 = vpop.f32.mrb[0].mxu0
        %v3877 = vadd.f32 0.0, %v3876
        %v3878 = vpop.f32.mrb[0].mxu0
        %3879 = vmatprep.mubr.bf16.mxu0 0
        %3880 = vmatmul.mubr.bf16.gmra.mrb[0].mxu0 %v3711
        %v3881 = vpop.f32.mrb[0].mxu0
        %v3882 = vadd.f32 0.0, %v3881
        %v3883 = vpop.f32.mrb[0].mxu0
        %v3884 = vpop.f32.mrb[0].mxu0
        %v3885 = vadd.f32 0.0, %v3884
        %v3886 = vpop.f32.mrb[0].mxu0
        %3887 = vmatprep.mubr.bf16.mxu0 0
        %3888 = vmatmul.mubr.bf16.gmra.mrb[0].mxu0 %v3712
        %v3889 = vpop.f32.mrb[0].mxu0
        %v3890 = vadd.f32 0.0, %v3889
        %v3891 = vpop.f32.mrb[0].mxu0
        %v3892 = vpop.f32.mrb[0].mxu0
        %v3893 = vadd.f32 0.0, %v3892
        %v3894 = vpop.f32.mrb[0].mxu0
        %3895 = vmatprep.mubr.bf16.mxu0 0
        %3896 = vmatmul.mubr.bf16.gmra.mrb[0].mxu0 %v3713
        %v3897 = vpop.f32.mrb[0].mxu0
        %v3898 = vadd.f32 0.0, %v3897
        %v3899 = vpop.f32.mrb[0].mxu0
        %v3900 = vpop.f32.mrb[0].mxu0
        %v3901 = vadd.f32 0.0, %v3900
        %v3902 = vpop.f32.mrb[0].mxu0
        %3903 = vmatprep.mubr.bf16.mxu0 0
        %3904 = vmatmul.mubr.bf16.gmra.mrb[0].mxu0 %v3714
        %v3905 = vpop.f32.mrb[0].mxu0
        %v3906 = vadd.f32 0.0, %v3905
        %v3907 = vpop.f32.mrb[0].mxu0
        %v3908 = vpop.f32.mrb[0].mxu0
        %v3909 = vadd.f32 0.0, %v3908
        %v3910 = vpop.f32.mrb[0].mxu0
        %3911 = vmatprep.mubr.bf16.mxu0 0
        %3912 = vmatmul.mubr.bf16.gmra.mrb[0].mxu0 %v3715
        %v3913 = vpop.f32.mrb[0].mxu0
        %v3914 = vadd.f32 0.0, %v3913
        %v3915 = vpop.f32.mrb[0].mxu0
        %v3916 = vpop.f32.mrb[0].mxu0
        %v3917 = vadd.f32 0.0, %v3916
        %v3918 = vpop.f32.mrb[0].mxu0
        %3919 = vmatprep.mubr.bf16.mxu0 0
        %3920 = vmatmul.mubr.bf16.gmra.mrb[0].mxu0 %v3716
        %v3921 = vpop.f32.mrb[0].mxu0
        %v3922 = vadd.f32 0.0, %v3921
        %v3923 = vpop.f32.mrb[0].mxu0
        %v3924 = vpop.f32.mrb[0].mxu0
        %v3925 = vadd.f32 0.0, %v3924
        %v3926 = vpop.f32.mrb[0].mxu0
        %3927 = vmatprep.mubr.bf16.mxu0 0
        %3928 = vmatmul.mubr.bf16.gmra.mrb[0].mxu0 %v3717
        %v3929 = vpop.f32.mrb[0].mxu0
        %v3930 = vadd.f32 0.0, %v3929
        %v3931 = vpop.f32.mrb[0].mxu0
        %v3932 = vpop.f32.mrb[0].mxu0
        %v3933 = vadd.f32 0.0, %v3932
        %v3934 = vpop.f32.mrb[0].mxu0
        %3935 = vmatprep.mubr.bf16.mxu0 0
        %3936 = vmatmul.mubr.bf16.gmra.mrb[0].mxu0 %v3718
        %v3937 = vpop.f32.mrb[0].mxu0
        %v3938 = vadd.f32 0.0, %v3937
        %v3939 = vpop.f32.mrb[0].mxu0
        %v3940 = vpop.f32.mrb[0].mxu0
        %v3941 = vadd.f32 0.0, %v3940
        %v3942 = vpop.f32.mrb[0].mxu0
        %3943 = vdwg.mxu0
        %v3944 = vld [vmem:[%s8] sm:$0x1]
        %v3946 = vlaneseq
        %v3947 = vshrl.u32 %v3946, 7
        %v3948 = vsub.s32 0, %v3947
        %v3949 = vrot.slane %v3944, %v3948
        %v3951 = vmul.f32 %v3818, %v3949
        %v3952 = vmul.f32 %v3821, %v3949
        %v3953 = vmul.f32 %v3826, %v3949
        %v3954 = vmul.f32 %v3829, %v3949
        %v3955 = vmul.f32 %v3834, %v3949
        %v3956 = vmul.f32 %v3837, %v3949
        %v3957 = vmul.f32 %v3842, %v3949
        %v3958 = vmul.f32 %v3845, %v3949
        %v3959 = vmul.f32 %v3850, %v3949
        %v3960 = vmul.f32 %v3853, %v3949
        %v3961 = vmul.f32 %v3858, %v3949
        %v3962 = vmul.f32 %v3861, %v3949
        %v3963 = vmul.f32 %v3866, %v3949
        %v3964 = vmul.f32 %v3869, %v3949
        %v3965 = vmul.f32 %v3874, %v3949
        %v3966 = vmul.f32 %v3877, %v3949
        %v3967 = vmul.f32 %v3882, %v3949
        %v3968 = vmul.f32 %v3885, %v3949
        %v3969 = vmul.f32 %v3890, %v3949
        %v3970 = vmul.f32 %v3893, %v3949
        %v3971 = vmul.f32 %v3898, %v3949
        %v3972 = vmul.f32 %v3901, %v3949
        %v3973 = vmul.f32 %v3906, %v3949
        %v3974 = vmul.f32 %v3909, %v3949
        %v3975 = vmul.f32 %v3914, %v3949
        %v3976 = vmul.f32 %v3917, %v3949
        %v3977 = vmul.f32 %v3922, %v3949
        %v3978 = vmul.f32 %v3925, %v3949
        %v3979 = vmul.f32 %v3930, %v3949
        %v3980 = vmul.f32 %v3933, %v3949
        %v3981 = vmul.f32 %v3938, %v3949
        %v3982 = vmul.f32 %v3941, %v3949
        %v3983 = vld [vmem:[%s9] sm:$0x1]
        %v3985 = vlaneseq
        %v3986 = vshrl.u32 %v3985, 7
        %v3987 = vsub.s32 0, %v3986
        %v3988 = vrot.slane %v3983, %v3987
        %v3990 = vadd.f32 %v3951, %v3988
        %v3991 = vadd.f32 %v3952, %v3988
        %v3992 = vadd.f32 %v3953, %v3988
        %v3993 = vadd.f32 %v3954, %v3988
        %v3994 = vadd.f32 %v3955, %v3988
        %v3995 = vadd.f32 %v3956, %v3988
        %v3996 = vadd.f32 %v3957, %v3988
        %v3997 = vadd.f32 %v3958, %v3988
        %v3998 = vadd.f32 %v3959, %v3988
        %v3999 = vadd.f32 %v3960, %v3988
        %v4000 = vadd.f32 %v3961, %v3988
        %v4001 = vadd.f32 %v3962, %v3988
        %v4002 = vadd.f32 %v3963, %v3988
        %v4003 = vadd.f32 %v3964, %v3988
        %v4004 = vadd.f32 %v3965, %v3988
        %v4005 = vadd.f32 %v3966, %v3988
        %v4006 = vadd.f32 %v3967, %v3988
        %v4007 = vadd.f32 %v3968, %v3988
        %v4008 = vadd.f32 %v3969, %v3988
        %v4009 = vadd.f32 %v3970, %v3988
        %v4010 = vadd.f32 %v3971, %v3988
        %v4011 = vadd.f32 %v3972, %v3988
        %v4012 = vadd.f32 %v3973, %v3988
        %v4013 = vadd.f32 %v3974, %v3988
        %v4014 = vadd.f32 %v3975, %v3988
        %v4015 = vadd.f32 %v3976, %v3988
        %v4016 = vadd.f32 %v3977, %v3988
        %v4017 = vadd.f32 %v3978, %v3988
        %v4018 = vadd.f32 %v3979, %v3988
        %v4019 = vadd.f32 %v3980, %v3988
        %v4020 = vadd.f32 %v3981, %v3988
        %v4021 = vadd.f32 %v3982, %v3988
        %v4022 = vunpack.c.l.bf16 %v376
        %v4023 = vunpack.c.l.bf16 %v377
        %v4024 = vunpack.c.l.bf16 %v378
        %v4025 = vunpack.c.l.bf16 %v379
        %v4026 = vunpack.c.l.bf16 %v380
        %v4027 = vunpack.c.l.bf16 %v381
        %v4028 = vunpack.c.l.bf16 %v382
        %v4029 = vunpack.c.l.bf16 %v383
        %v4030 = vunpack.c.l.bf16 %v384
        %v4031 = vunpack.c.l.bf16 %v385
        %v4032 = vunpack.c.l.bf16 %v386
        %v4033 = vunpack.c.l.bf16 %v387
        %v4034 = vunpack.c.l.bf16 %v388
        %v4035 = vunpack.c.l.bf16 %v389
        %v4036 = vunpack.c.l.bf16 %v390
        %v4037 = vunpack.c.l.bf16 %v391
        %v4038 = vunpack.c.l.bf16 %v392
        %v4039 = vunpack.c.l.bf16 %v393
        %v4040 = vunpack.c.l.bf16 %v394
        %v4041 = vunpack.c.l.bf16 %v395
        %v4042 = vunpack.c.l.bf16 %v396
        %v4043 = vunpack.c.l.bf16 %v397
        %v4044 = vunpack.c.l.bf16 %v398
        %v4045 = vunpack.c.l.bf16 %v399
        %v4046 = vunpack.c.l.bf16 %v400
        %v4047 = vunpack.c.l.bf16 %v401
        %v4048 = vunpack.c.l.bf16 %v402
        %v4049 = vunpack.c.l.bf16 %v403
        %v4050 = vunpack.c.l.bf16 %v404
        %v4051 = vunpack.c.l.bf16 %v405
        %v4052 = vunpack.c.l.bf16 %v406
        %v4053 = vunpack.c.l.bf16 %v407
        %v4054 = vadd.f32 %v3990, %v4022
        %v4055 = vadd.f32 %v3991, %v4023
        %v4056 = vadd.f32 %v3992, %v4024
        %v4057 = vadd.f32 %v3993, %v4025
        %v4058 = vadd.f32 %v3994, %v4026
        %v4059 = vadd.f32 %v3995, %v4027
        %v4060 = vadd.f32 %v3996, %v4028
        %v4061 = vadd.f32 %v3997, %v4029
        %v4062 = vadd.f32 %v3998, %v4030
        %v4063 = vadd.f32 %v3999, %v4031
        %v4064 = vadd.f32 %v4000, %v4032
        %v4065 = vadd.f32 %v4001, %v4033
        %v4066 = vadd.f32 %v4002, %v4034
        %v4067 = vadd.f32 %v4003, %v4035
        %v4068 = vadd.f32 %v4004, %v4036
        %v4069 = vadd.f32 %v4005, %v4037
        %v4070 = vadd.f32 %v4006, %v4038
        %v4071 = vadd.f32 %v4007, %v4039
        %v4072 = vadd.f32 %v4008, %v4040
        %v4073 = vadd.f32 %v4009, %v4041
        %v4074 = vadd.f32 %v4010, %v4042
        %v4075 = vadd.f32 %v4011, %v4043
        %v4076 = vadd.f32 %v4012, %v4044
        %v4077 = vadd.f32 %v4013, %v4045
        %v4078 = vadd.f32 %v4014, %v4046
        %v4079 = vadd.f32 %v4015, %v4047
        %v4080 = vadd.f32 %v4016, %v4048
        %v4081 = vadd.f32 %v4017, %v4049
        %v4082 = vadd.f32 %v4018, %v4050
        %v4083 = vadd.f32 %v4019, %v4051
        %v4084 = vadd.f32 %v4020, %v4052
        %v4085 = vadd.f32 %v4021, %v4053
        %v4086 = vmax.f32 %v4054, 0.0
        %v4087 = vmax.f32 %v4055, 0.0
        %v4088 = vmax.f32 %v4056, 0.0
        %v4089 = vmax.f32 %v4057, 0.0
        %v4090 = vmax.f32 %v4058, 0.0
        %v4091 = vmax.f32 %v4059, 0.0
        %v4092 = vmax.f32 %v4060, 0.0
        %v4093 = vmax.f32 %v4061, 0.0
        %v4094 = vmax.f32 %v4062, 0.0
        %v4095 = vmax.f32 %v4063, 0.0
        %v4096 = vmax.f32 %v4064, 0.0
        %v4097 = vmax.f32 %v4065, 0.0
        %v4098 = vmax.f32 %v4066, 0.0
        %v4099 = vmax.f32 %v4067, 0.0
        %v4100 = vmax.f32 %v4068, 0.0
        %v4101 = vmax.f32 %v4069, 0.0
        %v4102 = vmax.f32 %v4070, 0.0
        %v4103 = vmax.f32 %v4071, 0.0
        %v4104 = vmax.f32 %v4072, 0.0
        %v4105 = vmax.f32 %v4073, 0.0
        %v4106 = vmax.f32 %v4074, 0.0
        %v4107 = vmax.f32 %v4075, 0.0
        %v4108 = vmax.f32 %v4076, 0.0
        %v4109 = vmax.f32 %v4077, 0.0
        %v4110 = vmax.f32 %v4078, 0.0
        %v4111 = vmax.f32 %v4079, 0.0
        %v4112 = vmax.f32 %v4080, 0.0
        %v4113 = vmax.f32 %v4081, 0.0
        %v4114 = vmax.f32 %v4082, 0.0
        %v4115 = vmax.f32 %v4083, 0.0
        %v4116 = vmax.f32 %v4084, 0.0
        %v4117 = vmax.f32 %v4085, 0.0
        %4118 = vst.msk [vmem:[%s374] sm:$0xff] %vm496, %v4086
        %4119 = vst.msk [vmem:[%s374 + $0x8] sm:$0xff] %vm496, %v4087
        %4120 = vst.msk [vmem:[%s374 + $0x10] sm:$0xff] %vm496, %v4088
        %4121 = vst.msk [vmem:[%s374 + $0x18] sm:$0xff] %vm496, %v4089
        %4122 = vst.msk [vmem:[%s374 + $0x20] sm:$0xff] %vm496, %v4090
        %4123 = vst.msk [vmem:[%s374 + $0x28] sm:$0xff] %vm496, %v4091
        %4124 = vst.msk [vmem:[%s374 + $0x30] sm:$0xff] %vm496, %v4092
        %4125 = vst.msk [vmem:[%s374 + $0x38] sm:$0xff] %vm496, %v4093
        %4126 = vst.msk [vmem:[%s374 + $0x40] sm:$0xff] %vm496, %v4094
        %4127 = vst.msk [vmem:[%s374 + $0x48] sm:$0xff] %vm496, %v4095
        %4128 = vst.msk [vmem:[%s374 + $0x50] sm:$0xff] %vm496, %v4096
        %4129 = vst.msk [vmem:[%s374 + $0x58] sm:$0xff] %vm496, %v4097
        %4130 = vst.msk [vmem:[%s374 + $0x60] sm:$0xff] %vm496, %v4098
        %4131 = vst.msk [vmem:[%s374 + $0x68] sm:$0xff] %vm496, %v4099
        %4132 = vst.msk [vmem:[%s374 + $0x70] sm:$0xff] %vm496, %v4100
        %4133 = vst.msk [vmem:[%s374 + $0x78] sm:$0xff] %vm496, %v4101
        %4134 = vst.msk [vmem:[%s374 + $0x80] sm:$0xff] %vm496, %v4102
        %4135 = vst.msk [vmem:[%s374 + $0x88] sm:$0xff] %vm496, %v4103
        %4136 = vst.msk [vmem:[%s374 + $0x90] sm:$0xff] %vm496, %v4104
        %4137 = vst.msk [vmem:[%s374 + $0x98] sm:$0xff] %vm496, %v4105
        %4138 = vst.msk [vmem:[%s374 + $0xa0] sm:$0xff] %vm496, %v4106
        %4139 = vst.msk [vmem:[%s374 + $0xa8] sm:$0xff] %vm496, %v4107
        %4140 = vst.msk [vmem:[%s374 + $0xb0] sm:$0xff] %vm496, %v4108
        %4141 = vst.msk [vmem:[%s374 + $0xb8] sm:$0xff] %vm496, %v4109
        %4142 = vst.msk [vmem:[%s374 + $0xc0] sm:$0xff] %vm496, %v4110
        %4143 = vst.msk [vmem:[%s374 + $0xc8] sm:$0xff] %vm496, %v4111
        %4144 = vst.msk [vmem:[%s374 + $0xd0] sm:$0xff] %vm496, %v4112
        %4145 = vst.msk [vmem:[%s374 + $0xd8] sm:$0xff] %vm496, %v4113
        %4146 = vst.msk [vmem:[%s374 + $0xe0] sm:$0xff] %vm496, %v4114
        %4147 = vst.msk [vmem:[%s374 + $0xe8] sm:$0xff] %vm496, %v4115
        %4148 = vst.msk [vmem:[%s374 + $0xf0] sm:$0xff] %vm496, %v4116
        %4149 = vst.msk [vmem:[%s374 + $0xf8] sm:$0xff] %vm496, %v4117
        %p4150 = scmp.lt.s32.totalorder %s22, 1
        %s4151 = scalar_select %p4150, %s22, 1
        %s4152 = smul.addr %s4151, 32
        %s4153 = smul.addr %s4152, 8
        %s4154 = scalar_lea.vmem %s10, %s4153
        // Predicated region
        $region65: #{tpu_custom_call.1} parent=59 // pred_check
          %p4155 = pneg %p255
        $region66: #{tpu_custom_call.1} parent=59 // pred_check_branch
          %4157 = sbr.rel (%p4155) target = $region68
        $region67: #{tpu_custom_call.1} parent=59 // pred_region
          _
        $region68: #{tpu_custom_call.1} parent=59 // pred_fallthru
          _
      $region60: #{tpu_custom_call.1} parent=5 // pred_fallthru
        _
      %p4158 = scmp.le.s32.totalorder 2, %s17
      // Predicated region
      $region69: #{tpu_custom_call.1} parent=5 // pred_check
        %p4159 = pneg %p4158
      $region70: #{tpu_custom_call.1} parent=5 // pred_check_branch
        %4161 = sbr.rel (%p4159) target = $region72
      $region71: #{tpu_custom_call.1} parent=5 // pred_region
        %s4162 = ssub.s32 %s17, 2
        // Predicated region
        $region73: #{tpu_custom_call.1} parent=71 // pred_check
          %p4163 = pneg %p261
        $region74: #{tpu_custom_call.1} parent=71 // pred_check_branch
          %4165 = sbr.rel (%p4163) target = $region76
        $region75: #{tpu_custom_call.1} parent=71 // pred_region
          %p4166 = scmp.lt.s32.totalorder %s23, 1
          %s4167 = scalar_select %p4166, %s23, 1
          %s4168 = smul.addr %s4167, 32
          %s4169 = smul.addr %s4168, 8
          %s4170 = scalar_lea.vmem %s10, %s4169
        $region76: #{tpu_custom_call.1} parent=71 // pred_fallthru
          _
      $region72: #{tpu_custom_call.1} parent=5 // pred_fallthru
        _
    $region6: #{tpu_custom_call.1} parent=1 // loop_footer
      %s21 = sadd.s32 1, %s17
    $region7: #{tpu_custom_call.1} parent=1 // loop_footer_branch
      %16 = sbr.rel target = $region3
    $region8: #{tpu_custom_call.1} parent=1 // loop_exit
      _
    %4171 = vsyncpa [#allocation4], 1
    %s4172 = scalar_lea.sflag [#allocation4], 1
    %4173 = vsyncpa %s4172, 1

</llo_original>
